<compile_context>
chip_gen: v6e
topology: v6e:2x2x1
jax: 0.10.0
libtpu: 0.0.40
codegen_flags: <defaults>
</compile_context>

<pallas_src>
import functools

import numpy as np
import jax
import jax.numpy as jnp
from jax.experimental import pallas as pl
from jax.experimental.pallas import tpu as pltpu

C = 64                         # constraints_size
INPUT_SIZE = 4 * (C - 1) + 1   # 253
LANE = 128
SUBLANE = 8


def _round_up(v, m):
    return ((v + m - 1) // m) * m


# ---------------------------------------------------------------------------
# Fused Pallas kernel: gather-matmul flatten + chained Linear+ReLU layers.
# ---------------------------------------------------------------------------
def _encoder_kernel(x_ref, g_ref, *rest, n_layers):
    # rest = (w0, b0, w1, b1, ..., w_{L-1}, b_{L-1}, out_ref)
    o_ref = rest[2 * n_layers]
    # flatten_constraint_image as a (BM, 4096) @ (4096, 256) gather matmul.
    h = jnp.dot(x_ref[...], g_ref[...], preferred_element_type=jnp.float32)
    for i in range(n_layers):
        w = rest[2 * i][...]
        b = rest[2 * i + 1][...]
        h = jnp.dot(h, w, preferred_element_type=jnp.float32) + b
        h = jnp.maximum(h, 0.0)          # ReLU on every layer (incl. last)
    o_ref[...] = h.astype(o_ref.dtype)


def encoder_forward(x, gather_mat, padded_params, latent_dim):
    """x: (N, 1, 64, 64) f32 -> (N, latent_dim) f32."""
    n = x.shape[0]
    n_layers = len(padded_params)
    img_flat_dim = C * C                      # 4096 (lane-dense slab)
    flat_pad = gather_mat.shape[1]            # 256
    out_pad = padded_params[-1][0].shape[1]   # 128

    x_slab = x.reshape(n, img_flat_dim)
    block_m = LANE if n >= LANE else SUBLANE
    n_pad = _round_up(n, block_m)
    if n_pad != n:
        x_slab = jnp.pad(x_slab, ((0, n_pad - n), (0, 0)))

    in_specs = [
        pl.BlockSpec((block_m, img_flat_dim), lambda i: (i, 0)),    # image slab
        pl.BlockSpec((img_flat_dim, flat_pad), lambda i: (0, 0)),   # gather mat
    ]
    args = [x_slab, gather_mat]
    for (w, b) in padded_params:
        in_specs.append(pl.BlockSpec(w.shape, lambda i: (0, 0)))    # replicated
        in_specs.append(pl.BlockSpec(b.shape, lambda i: (0, 0)))    # replicated
        args += [w, b]

    out = pl.pallas_call(
        functools.partial(_encoder_kernel, n_layers=n_layers),
        out_shape=jax.ShapeDtypeStruct((n_pad, out_pad), jnp.float32),
        grid=(n_pad // block_m,),
        in_specs=in_specs,
        out_specs=pl.BlockSpec((block_m, out_pad), lambda i: (i, 0)),
        compiler_params=pltpu.CompilerParams(
            dimension_semantics=("parallel",)),
    )(*args)
    return out[:n, :latent_dim]


# ---------------------------------------------------------------------------
# Constant gather matrix implementing flatten_constraint_image.
# ---------------------------------------------------------------------------
def build_gather_matrix():
    end = C - 1
    idx = []
    idx += [0 * C + c for c in range(C)]          # edge_t: row 0
    idx += [r * C + end for r in range(1, end)]   # edge_r: col 63, rows 1..62
    idx += [end * C + c for c in range(C)]        # edge_b: row 63
    idx += [r * C + 0 for r in range(1, end)]     # edge_l: col 0, rows 1..62
    idx += [(C // 2) * C + (C // 2)]              # center color
    flat_dim = len(idx)                           # 253
    flat_pad = _round_up(flat_dim, LANE)          # 256
    g = np.zeros((C * C, flat_pad), np.float32)
    g[np.asarray(idx), np.arange(flat_dim)] = 1.0
    return jnp.asarray(g), flat_dim


# ---------------------------------------------------------------------------
# Parameter setup (mirrors the PyTorch layer-size schedule + Linear init).
# ---------------------------------------------------------------------------
def mlp_dims(input_size, num_layers, latent_dim):
    scale = np.power(latent_dim * 1.0 / input_size, 1.0 / (num_layers + 1))
    dims = [input_size]
    last = input_size
    for _ in range(num_layers):
        d = int(scale * last)                      # same truncation as PyTorch
        dims.append(d)
        last = d
    dims.append(latent_dim)
    return dims


def init_params(key, dims):
    params = []
    for i in range(len(dims) - 1):
        key, kw, kb = jax.random.split(key, 3)
        bound = 1.0 / np.sqrt(dims[i])
        w = jax.random.uniform(kw, (dims[i], dims[i + 1]), jnp.float32,
                               -bound, bound)
        b = jax.random.uniform(kb, (dims[i + 1],), jnp.float32, -bound, bound)
        params.append((w, b))
    return params, key


def pad_params(params):
    """Zero-pad weights/biases so every in/out feature dim is a 128 multiple."""
    padded = []
    for (w, b) in params:
        din, dout = w.shape
        din_p = _round_up(din, LANE)
        dout_p = _round_up(dout, LANE)
        wp = jnp.zeros((din_p, dout_p), jnp.float32).at[:din, :dout].set(w)
        bp = jnp.zeros((1, dout_p), jnp.float32).at[0, :dout].set(b)
        padded.append((wp, bp))
    return padded


# ---------------------------------------------------------------------------
# Pure-JAX reference (mirrors the PyTorch forward) for a correctness check.
# ---------------------------------------------------------------------------
def flatten_constraint_image_ref(x):
    end = C - 1
    edge_t = x[:, 0, 0, :]
    edge_r = x[:, 0, 1:end, end]
    edge_b = x[:, 0, end, :]
    edge_l = x[:, 0, 1:end, 0]
    color = x[:, 0, C // 2, C // 2][:, None]
    return jnp.concatenate([edge_t, edge_r, edge_b, edge_l, color], axis=1)


def encoder_ref(x, params):
    h = flatten_constraint_image_ref(x)
    for (w, b) in params:
        h = jnp.maximum(h @ w + b, 0.0)
    return h


if __name__ == "__main__":
    num_layers = 2
    latent_dim = 32
    batch = 4

    key = jax.random.PRNGKey(0)
    key, kx = jax.random.split(key)
    x = jax.random.uniform(kx, (batch, 1, C, C), jnp.float32)

    dims = mlp_dims(INPUT_SIZE, num_layers, latent_dim)     # 253 -> ... -> 32
    params, key = init_params(key, dims)
    padded_params = pad_params(params)
    gather_mat, flat_dim = build_gather_matrix()
    assert flat_dim == INPUT_SIZE

    fwd = jax.jit(lambda xi: encoder_forward(xi, gather_mat, padded_params,
                                             latent_dim))
    out = fwd(x)
    jax.block_until_ready(out)

    assert out.shape == (batch, latent_dim), out.shape
    assert out.dtype == jnp.float32

    ref = encoder_ref(x, params)
    np.testing.assert_allclose(np.asarray(out), np.asarray(ref),
                               rtol=2e-2, atol=2e-2)
    print("KERNEL_OK")
</pallas_src>

<mosaic_0001>
module attributes {stable_mosaic.version = 11 : i64} {
  func.func @_encoder_kernel(%arg0: i32, %arg1: memref<8x4096xf32, #tpu.memory_space<vmem>>, %arg2: memref<4096x256xf32, #tpu.memory_space<vmem>>, %arg3: memref<256x128xf32, #tpu.memory_space<vmem>>, %arg4: memref<1x128xf32, #tpu.memory_space<vmem>>, %arg5: memref<128x128xf32, #tpu.memory_space<vmem>>, %arg6: memref<1x128xf32, #tpu.memory_space<vmem>>, %arg7: memref<128x128xf32, #tpu.memory_space<vmem>>, %arg8: memref<1x128xf32, #tpu.memory_space<vmem>>, %arg9: memref<8x128xf32, #tpu.memory_space<vmem>>) attributes {dimension_semantics = [#tpu.dimension_semantics<parallel>], iteration_bounds = array<i64: 1>, scalar_prefetch = 0 : i64, scratch_operands = 0 : i64, tpu.core_type = #tpu.core_type<tc>, window_params = [{transform_indices = @transform_0, window_bounds = array<i64: 8, 4096>}, {pipeline_mode = #tpu.pipeline_mode<synchronous>, transform_indices = @transform_1, window_bounds = array<i64: 4096, 256>}, {pipeline_mode = #tpu.pipeline_mode<synchronous>, transform_indices = @transform_2, window_bounds = array<i64: 256, 128>}, {pipeline_mode = #tpu.pipeline_mode<synchronous>, transform_indices = @transform_3, window_bounds = array<i64: 1, 128>}, {pipeline_mode = #tpu.pipeline_mode<synchronous>, transform_indices = @transform_4, window_bounds = array<i64: 128, 128>}, {pipeline_mode = #tpu.pipeline_mode<synchronous>, transform_indices = @transform_5, window_bounds = array<i64: 1, 128>}, {pipeline_mode = #tpu.pipeline_mode<synchronous>, transform_indices = @transform_6, window_bounds = array<i64: 128, 128>}, {pipeline_mode = #tpu.pipeline_mode<synchronous>, transform_indices = @transform_7, window_bounds = array<i64: 1, 128>}, {transform_indices = @transform_8, window_bounds = array<i64: 8, 128>}]} {
    %c0 = arith.constant 0 : index
    %c0_0 = arith.constant 0 : index
    %0 = vector.load %arg1[%c0, %c0_0] : memref<8x4096xf32, #tpu.memory_space<vmem>>, vector<8x4096xf32>
    %c0_1 = arith.constant 0 : index
    %c0_2 = arith.constant 0 : index
    %1 = vector.load %arg2[%c0_1, %c0_2] : memref<4096x256xf32, #tpu.memory_space<vmem>>, vector<4096x256xf32>
    %cst = arith.constant dense<0.000000e+00> : vector<8x256xf32>
    %2 = tpu.matmul %0, %1, %cst {dimension_numbers = #tpu.dot_dimension_numbers<[1], [0], [0], [1], [0, 0, 1, 1], [], []>} : vector<8x4096xf32>, vector<4096x256xf32>, vector<8x256xf32> -> vector<8x256xf32>
    %c0_3 = arith.constant 0 : index
    %c0_4 = arith.constant 0 : index
    %3 = vector.load %arg3[%c0_3, %c0_4] : memref<256x128xf32, #tpu.memory_space<vmem>>, vector<256x128xf32>
    %c0_5 = arith.constant 0 : index
    %c0_6 = arith.constant 0 : index
    %4 = vector.load %arg4[%c0_5, %c0_6] : memref<1x128xf32, #tpu.memory_space<vmem>>, vector<1x128xf32>
    %cst_7 = arith.constant dense<0.000000e+00> : vector<8x128xf32>
    %5 = tpu.matmul %2, %3, %cst_7 {dimension_numbers = #tpu.dot_dimension_numbers<[1], [0], [0], [1], [0, 0, 1, 1], [], []>} : vector<8x256xf32>, vector<256x128xf32>, vector<8x128xf32> -> vector<8x128xf32>
    %6 = vector.broadcast %4 : vector<1x128xf32> to vector<8x128xf32>
    %7 = arith.addf %5, %6 : vector<8x128xf32>
    %cst_8 = arith.constant 0.000000e+00 : f32
    %8 = vector.broadcast %cst_8 : f32 to vector<8x128xf32>
    %9 = arith.maximumf %7, %8 : vector<8x128xf32>
    %c0_9 = arith.constant 0 : index
    %c0_10 = arith.constant 0 : index
    %10 = vector.load %arg5[%c0_9, %c0_10] : memref<128x128xf32, #tpu.memory_space<vmem>>, vector<128x128xf32>
    %c0_11 = arith.constant 0 : index
    %c0_12 = arith.constant 0 : index
    %11 = vector.load %arg6[%c0_11, %c0_12] : memref<1x128xf32, #tpu.memory_space<vmem>>, vector<1x128xf32>
    %cst_13 = arith.constant dense<0.000000e+00> : vector<8x128xf32>
    %12 = tpu.matmul %9, %10, %cst_13 {dimension_numbers = #tpu.dot_dimension_numbers<[1], [0], [0], [1], [0, 0, 1, 1], [], []>} : vector<8x128xf32>, vector<128x128xf32>, vector<8x128xf32> -> vector<8x128xf32>
    %13 = vector.broadcast %11 : vector<1x128xf32> to vector<8x128xf32>
    %14 = arith.addf %12, %13 : vector<8x128xf32>
    %cst_14 = arith.constant 0.000000e+00 : f32
    %15 = vector.broadcast %cst_14 : f32 to vector<8x128xf32>
    %16 = arith.maximumf %14, %15 : vector<8x128xf32>
    %c0_15 = arith.constant 0 : index
    %c0_16 = arith.constant 0 : index
    %17 = vector.load %arg7[%c0_15, %c0_16] : memref<128x128xf32, #tpu.memory_space<vmem>>, vector<128x128xf32>
    %c0_17 = arith.constant 0 : index
    %c0_18 = arith.constant 0 : index
    %18 = vector.load %arg8[%c0_17, %c0_18] : memref<1x128xf32, #tpu.memory_space<vmem>>, vector<1x128xf32>
    %cst_19 = arith.constant dense<0.000000e+00> : vector<8x128xf32>
    %19 = tpu.matmul %16, %17, %cst_19 {dimension_numbers = #tpu.dot_dimension_numbers<[1], [0], [0], [1], [0, 0, 1, 1], [], []>} : vector<8x128xf32>, vector<128x128xf32>, vector<8x128xf32> -> vector<8x128xf32>
    %20 = vector.broadcast %18 : vector<1x128xf32> to vector<8x128xf32>
    %21 = arith.addf %19, %20 : vector<8x128xf32>
    %cst_20 = arith.constant 0.000000e+00 : f32
    %22 = vector.broadcast %cst_20 : f32 to vector<8x128xf32>
    %23 = arith.maximumf %21, %22 : vector<8x128xf32>
    %c0_21 = arith.constant 0 : index
    %c0_22 = arith.constant 0 : index
    %24 = vector.load %arg9[%c0_21, %c0_22] : memref<8x128xf32, #tpu.memory_space<vmem>>, vector<8x128xf32>
    tpu.vector_store %arg9[%c0_21, %c0_22], %23 {strides = array<i32>} : memref<8x128xf32, #tpu.memory_space<vmem>>, vector<8x128xf32>,
    return
  }
  func.func @transform_0(%arg0: i32) -> (i32, i32) {
    %c0_i32 = arith.constant 0 : i32
    %c0_i32_0 = arith.constant 0 : i32
    return %arg0, %c0_i32 : i32, i32
  }
  func.func @transform_1(%arg0: i32) -> (i32, i32) {
    %c0_i32 = arith.constant 0 : i32
    %c0_i32_0 = arith.constant 0 : i32
    %c0_i32_1 = arith.constant 0 : i32
    return %c0_i32, %c0_i32_0 : i32, i32
  }
  func.func @transform_2(%arg0: i32) -> (i32, i32) {
    %c0_i32 = arith.constant 0 : i32
    %c0_i32_0 = arith.constant 0 : i32
    %c0_i32_1 = arith.constant 0 : i32
    return %c0_i32, %c0_i32_0 : i32, i32
  }
  func.func @transform_3(%arg0: i32) -> (i32, i32) {
    %c0_i32 = arith.constant 0 : i32
    %c0_i32_0 = arith.constant 0 : i32
    %c0_i32_1 = arith.constant 0 : i32
    return %c0_i32, %c0_i32_0 : i32, i32
  }
  func.func @transform_4(%arg0: i32) -> (i32, i32) {
    %c0_i32 = arith.constant 0 : i32
    %c0_i32_0 = arith.constant 0 : i32
    %c0_i32_1 = arith.constant 0 : i32
    return %c0_i32, %c0_i32_0 : i32, i32
  }
  func.func @transform_5(%arg0: i32) -> (i32, i32) {
    %c0_i32 = arith.constant 0 : i32
    %c0_i32_0 = arith.constant 0 : i32
    %c0_i32_1 = arith.constant 0 : i32
    return %c0_i32, %c0_i32_0 : i32, i32
  }
  func.func @transform_6(%arg0: i32) -> (i32, i32) {
    %c0_i32 = arith.constant 0 : i32
    %c0_i32_0 = arith.constant 0 : i32
    %c0_i32_1 = arith.constant 0 : i32
    return %c0_i32, %c0_i32_0 : i32, i32
  }
  func.func @transform_7(%arg0: i32) -> (i32, i32) {
    %c0_i32 = arith.constant 0 : i32
    %c0_i32_0 = arith.constant 0 : i32
    %c0_i32_1 = arith.constant 0 : i32
    return %c0_i32, %c0_i32_0 : i32, i32
  }
  func.func @transform_8(%arg0: i32) -> (i32, i32) {
    %c0_i32 = arith.constant 0 : i32
    %c0_i32_0 = arith.constant 0 : i32
    return %arg0, %c0_i32 : i32, i32
  }
}

</mosaic_0001>

<llo_original>
// kernel: _lambda_.1
$region0: #{_lambda_.1}
  #allocation0 [shape = 'u32[]', space=smem, size = 0x4, offset = 0x4, fixed_abs, tag = 'smem constant byte address 0x4 - core index']
  #allocation1 [shape = 'u32[144,128]{1,0:T(1,128)}', space=vmem, size = 0x12000, scoped, tag = 'internal scratch']
  %s0 = inlined_call_operand.vmem [shape: f32[8,4096], index: 0, kind: input, shape index: {}]
  %s1 = inlined_call_operand.hbm [shape: f32[4096,256], index: 1, kind: input, shape index: {}]
  %s2 = inlined_call_operand.hbm [shape: f32[256,128], index: 2, kind: input, shape index: {}]
  %s3 = inlined_call_operand.hbm [shape: f32[1,128], index: 3, kind: input, shape index: {}]
  %s4 = inlined_call_operand.hbm [shape: f32[128,128], index: 4, kind: input, shape index: {}]
  %s5 = inlined_call_operand.hbm [shape: f32[1,128], index: 5, kind: input, shape index: {}]
  %s6 = inlined_call_operand.hbm [shape: f32[128,128], index: 6, kind: input, shape index: {}]
  %s7 = inlined_call_operand.hbm [shape: f32[1,128], index: 7, kind: input, shape index: {}]
  %s8 = inlined_call_operand.vmem [shape: f32[8,128], index: 8, kind: output, shape index: {}]
  %s9 = sld [smem:[#allocation0]]
  $region70: #{_lambda_.1} parent=0
    _
  %s11 = ssub.s32 1, %s9
  %s12 = scalar_select 0, %s11, %s9
  $region1: #{_lambda_.1} parent=0
    #allocation2 [shape = 'u8[4194304]{0}', space=vmem, size = 0x400000, scoped, tag = 'input window, operand 1, single buffered']
    #allocation3 [shape = 's32[1]{0}', space=sflag, size = 0x4, scoped, tag = 'scoped memory for _lambda_.1']
    #allocation4 [shape = 'u8[131072]{0}', space=vmem, size = 0x20000, scoped, tag = 'input window, operand 2, single buffered']
    #allocation5 [shape = 's32[1]{0}', space=sflag, size = 0x4, scoped, tag = 'scoped memory for _lambda_.1']
    #allocation6 [shape = 'u8[512]{0}', space=vmem, size = 0x400, scoped, tag = 'input window, operand 3, single buffered']
    #allocation7 [shape = 'u8[65536]{0}', space=vmem, size = 0x10000, scoped, tag = 'input window, operand 4, single buffered']
    #allocation8 [shape = 's32[1]{0}', space=sflag, size = 0x4, scoped, tag = 'scoped memory for _lambda_.1']
    #allocation9 [shape = 'u8[512]{0}', space=vmem, size = 0x400, scoped, tag = 'input window, operand 5, single buffered']
    #allocation10 [shape = 'u8[65536]{0}', space=vmem, size = 0x10000, scoped, tag = 'input window, operand 6, single buffered']
    #allocation11 [shape = 's32[1]{0}', space=sflag, size = 0x4, scoped, tag = 'scoped memory for _lambda_.1']
    #allocation12 [shape = 'u8[512]{0}', space=vmem, size = 0x400, scoped, tag = 'input window, operand 7, single buffered']
    %13 = vsyncpa [#allocation3], 0
    %14 = vsyncpa [#allocation5], 0
    %15 = vsyncpa [#allocation8], 0
    %16 = vsyncpa [#allocation11], 0
    // Predicated region
    $region2: #{_lambda_.1} parent=1 // pred_check
      _
    $region3: #{_lambda_.1} parent=1 // pred_check_branch
      %18 = sbr.rel (0) target = $region5
    $region4: #{_lambda_.1} parent=1 // pred_region
      _
    $region5: #{_lambda_.1} parent=1 // pred_fallthru
      _
    // Predicated region
    $region6: #{_lambda_.1} parent=1 // pred_check
      _
    $region7: #{_lambda_.1} parent=1 // pred_check_branch
      %20 = sbr.rel (0) target = $region9
    $region8: #{_lambda_.1} parent=1 // pred_region
      %s22 = ssub.s32 131072, 131072
      %23 = vsyncadd [#allocation3], %s22
      %s24 = sshll.u32 [#allocation2], 4
      %s25 = int_to_ptr.vmem [resolvable:$true] %s24
      %30 = dma.hbm_to_vmem [thread:$0]  %s1, 131072, %s25, [#allocation3], 256, 256, 16
    $region9: #{_lambda_.1} parent=1 // pred_fallthru
      _
    // Predicated region
    $region10: #{_lambda_.1} parent=1 // pred_check
      _
    $region11: #{_lambda_.1} parent=1 // pred_check_branch
      %32 = sbr.rel (0) target = $region13
    $region12: #{_lambda_.1} parent=1 // pred_region
      %s34 = ssub.s32 4096, 4096
      %35 = vsyncadd [#allocation5], %s34
      %s36 = sshll.u32 [#allocation4], 4
      %s37 = int_to_ptr.vmem [resolvable:$true] %s36
      %42 = dma.hbm_to_vmem [thread:$0]  %s2, 4096, %s37, [#allocation5], 128, 128, 8
    $region13: #{_lambda_.1} parent=1 // pred_fallthru
      _
    // Predicated region
    $region14: #{_lambda_.1} parent=1 // pred_check
      _
    $region15: #{_lambda_.1} parent=1 // pred_check_branch
      %44 = sbr.rel (0) target = $region17
    $region16: #{_lambda_.1} parent=1 // pred_region
      %s46 = ssub.s32 16, 16
      %47 = vsyncadd [#allocation5], %s46
      %s49 = sshll.u32 [#allocation6], 4
      %s50 = int_to_ptr.vmem [resolvable:$true] %s49
      %52 = dma.hbm_to_vmem [thread:$0]  %s3, 16, %s50, [#allocation5]
    $region17: #{_lambda_.1} parent=1 // pred_fallthru
      _
    // Predicated region
    $region18: #{_lambda_.1} parent=1 // pred_check
      _
    $region19: #{_lambda_.1} parent=1 // pred_check_branch
      %54 = sbr.rel (0) target = $region21
    $region20: #{_lambda_.1} parent=1 // pred_region
      %s56 = ssub.s32 2048, 2048
      %57 = vsyncadd [#allocation8], %s56
      %s58 = sshll.u32 [#allocation7], 4
      %s59 = int_to_ptr.vmem [resolvable:$true] %s58
      %64 = dma.hbm_to_vmem [thread:$0]  %s4, 2048, %s59, [#allocation8], 128, 128, 8
    $region21: #{_lambda_.1} parent=1 // pred_fallthru
      _
    // Predicated region
    $region22: #{_lambda_.1} parent=1 // pred_check
      _
    $region23: #{_lambda_.1} parent=1 // pred_check_branch
      %66 = sbr.rel (0) target = $region25
    $region24: #{_lambda_.1} parent=1 // pred_region
      %s68 = ssub.s32 16, 16
      %69 = vsyncadd [#allocation8], %s68
      %s71 = sshll.u32 [#allocation9], 4
      %s72 = int_to_ptr.vmem [resolvable:$true] %s71
      %74 = dma.hbm_to_vmem [thread:$0]  %s5, 16, %s72, [#allocation8]
    $region25: #{_lambda_.1} parent=1 // pred_fallthru
      _
    // Predicated region
    $region26: #{_lambda_.1} parent=1 // pred_check
      _
    $region27: #{_lambda_.1} parent=1 // pred_check_branch
      %76 = sbr.rel (0) target = $region29
    $region28: #{_lambda_.1} parent=1 // pred_region
      %s78 = ssub.s32 2048, 2048
      %79 = vsyncadd [#allocation11], %s78
      %s80 = sshll.u32 [#allocation10], 4
      %s81 = int_to_ptr.vmem [resolvable:$true] %s80
      %86 = dma.hbm_to_vmem [thread:$0]  %s6, 2048, %s81, [#allocation11], 128, 128, 8
    $region29: #{_lambda_.1} parent=1 // pred_fallthru
      _
    // Predicated region
    $region30: #{_lambda_.1} parent=1 // pred_check
      _
    $region31: #{_lambda_.1} parent=1 // pred_check_branch
      %88 = sbr.rel (0) target = $region33
    $region32: #{_lambda_.1} parent=1 // pred_region
      %s90 = ssub.s32 16, 16
      %91 = vsyncadd [#allocation11], %s90
      %s93 = sshll.u32 [#allocation12], 4
      %s94 = int_to_ptr.vmem [resolvable:$true] %s93
      %96 = dma.hbm_to_vmem [thread:$0]  %s7, 16, %s94, [#allocation11]
    $region33: #{_lambda_.1} parent=1 // pred_fallthru
      _
    // Predicated region
    $region34: #{_lambda_.1} parent=1 // pred_check
      _
    $region35: #{_lambda_.1} parent=1 // pred_check_branch
      %98 = sbr.rel (0) target = $region37
    $region36: #{_lambda_.1} parent=1 // pred_region
      %99 = dma.done [#allocation3], 131072
    $region37: #{_lambda_.1} parent=1 // pred_fallthru
      _
    // Predicated region
    $region38: #{_lambda_.1} parent=1 // pred_check
      _
    $region39: #{_lambda_.1} parent=1 // pred_check_branch
      %101 = sbr.rel (0) target = $region41
    $region40: #{_lambda_.1} parent=1 // pred_region
      %102 = dma.done [#allocation5], 4096
    $region41: #{_lambda_.1} parent=1 // pred_fallthru
      _
    // Predicated region
    $region42: #{_lambda_.1} parent=1 // pred_check
      _
    $region43: #{_lambda_.1} parent=1 // pred_check_branch
      %104 = sbr.rel (0) target = $region45
    $region44: #{_lambda_.1} parent=1 // pred_region
      %105 = dma.done [#allocation5], 16
    $region45: #{_lambda_.1} parent=1 // pred_fallthru
      _
    // Predicated region
    $region46: #{_lambda_.1} parent=1 // pred_check
      _
    $region47: #{_lambda_.1} parent=1 // pred_check_branch
      %107 = sbr.rel (0) target = $region49
    $region48: #{_lambda_.1} parent=1 // pred_region
      %108 = dma.done [#allocation8], 2048
    $region49: #{_lambda_.1} parent=1 // pred_fallthru
      _
    // Predicated region
    $region50: #{_lambda_.1} parent=1 // pred_check
      _
    $region51: #{_lambda_.1} parent=1 // pred_check_branch
      %110 = sbr.rel (0) target = $region53
    $region52: #{_lambda_.1} parent=1 // pred_region
      %111 = dma.done [#allocation8], 16
    $region53: #{_lambda_.1} parent=1 // pred_fallthru
      _
    // Predicated region
    $region54: #{_lambda_.1} parent=1 // pred_check
      _
    $region55: #{_lambda_.1} parent=1 // pred_check_branch
      %113 = sbr.rel (0) target = $region57
    $region56: #{_lambda_.1} parent=1 // pred_region
      %114 = dma.done [#allocation11], 2048
    $region57: #{_lambda_.1} parent=1 // pred_fallthru
      _
    // Predicated region
    $region58: #{_lambda_.1} parent=1 // pred_check
      _
    $region59: #{_lambda_.1} parent=1 // pred_check_branch
      %116 = sbr.rel (0) target = $region61
    $region60: #{_lambda_.1} parent=1 // pred_region
      %117 = dma.done [#allocation11], 16
    $region61: #{_lambda_.1} parent=1 // pred_fallthru
      _
    %v118 = vld [vmem:[%s0] sm:$0xff]
    %v119 = vld [vmem:[%s0 + $0x8] sm:$0xff]
    %v120 = vld [vmem:[%s0 + $0x10] sm:$0xff]
    %v121 = vld [vmem:[%s0 + $0x18] sm:$0xff]
    %v122 = vld [vmem:[%s0 + $0x20] sm:$0xff]
    %v123 = vld [vmem:[%s0 + $0x28] sm:$0xff]
    %v124 = vld [vmem:[%s0 + $0x30] sm:$0xff]
    %v125 = vld [vmem:[%s0 + $0x38] sm:$0xff]
    %v126 = vld [vmem:[%s0 + $0x40] sm:$0xff]
    %v127 = vld [vmem:[%s0 + $0x48] sm:$0xff]
    %v128 = vld [vmem:[%s0 + $0x50] sm:$0xff]
    %v129 = vld [vmem:[%s0 + $0x58] sm:$0xff]
    %v130 = vld [vmem:[%s0 + $0x60] sm:$0xff]
    %v131 = vld [vmem:[%s0 + $0x68] sm:$0xff]
    %v132 = vld [vmem:[%s0 + $0x70] sm:$0xff]
    %v133 = vld [vmem:[%s0 + $0x78] sm:$0xff]
    %v134 = vld [vmem:[%s0 + $0x80] sm:$0xff]
    %v135 = vld [vmem:[%s0 + $0x88] sm:$0xff]
    %v136 = vld [vmem:[%s0 + $0x90] sm:$0xff]
    %v137 = vld [vmem:[%s0 + $0x98] sm:$0xff]
    %v138 = vld [vmem:[%s0 + $0xa0] sm:$0xff]
    %v139 = vld [vmem:[%s0 + $0xa8] sm:$0xff]
    %v140 = vld [vmem:[%s0 + $0xb0] sm:$0xff]
    %v141 = vld [vmem:[%s0 + $0xb8] sm:$0xff]
    %v142 = vld [vmem:[%s0 + $0xc0] sm:$0xff]
    %v143 = vld [vmem:[%s0 + $0xc8] sm:$0xff]
    %v144 = vld [vmem:[%s0 + $0xd0] sm:$0xff]
    %v145 = vld [vmem:[%s0 + $0xd8] sm:$0xff]
    %v146 = vld [vmem:[%s0 + $0xe0] sm:$0xff]
    %v147 = vld [vmem:[%s0 + $0xe8] sm:$0xff]
    %v148 = vld [vmem:[%s0 + $0xf0] sm:$0xff]
    %v149 = vld [vmem:[%s0 + $0xf8] sm:$0xff]
    %v150 = vld [vmem:[#allocation2] sm:$0xff]
    %v151 = vld [vmem:[#allocation2 + $0x8] sm:$0xff]
    %v152 = vld [vmem:[#allocation2 + $0x10] sm:$0xff]
    %v153 = vld [vmem:[#allocation2 + $0x18] sm:$0xff]
    %v154 = vld [vmem:[#allocation2 + $0x20] sm:$0xff]
    %v155 = vld [vmem:[#allocation2 + $0x28] sm:$0xff]
    %v156 = vld [vmem:[#allocation2 + $0x30] sm:$0xff]
    %v157 = vld [vmem:[#allocation2 + $0x38] sm:$0xff]
    %v158 = vld [vmem:[#allocation2 + $0x40] sm:$0xff]
    %v159 = vld [vmem:[#allocation2 + $0x48] sm:$0xff]
    %v160 = vld [vmem:[#allocation2 + $0x50] sm:$0xff]
    %v161 = vld [vmem:[#allocation2 + $0x58] sm:$0xff]
    %v162 = vld [vmem:[#allocation2 + $0x60] sm:$0xff]
    %v163 = vld [vmem:[#allocation2 + $0x68] sm:$0xff]
    %v164 = vld [vmem:[#allocation2 + $0x70] sm:$0xff]
    %v165 = vld [vmem:[#allocation2 + $0x78] sm:$0xff]
    %v166 = vld [vmem:[#allocation2 + $0x80] sm:$0xff]
    %v167 = vld [vmem:[#allocation2 + $0x88] sm:$0xff]
    %v168 = vld [vmem:[#allocation2 + $0x90] sm:$0xff]
    %v169 = vld [vmem:[#allocation2 + $0x98] sm:$0xff]
    %v170 = vld [vmem:[#allocation2 + $0xa0] sm:$0xff]
    %v171 = vld [vmem:[#allocation2 + $0xa8] sm:$0xff]
    %v172 = vld [vmem:[#allocation2 + $0xb0] sm:$0xff]
    %v173 = vld [vmem:[#allocation2 + $0xb8] sm:$0xff]
    %v174 = vld [vmem:[#allocation2 + $0xc0] sm:$0xff]
    %v175 = vld [vmem:[#allocation2 + $0xc8] sm:$0xff]
    %v176 = vld [vmem:[#allocation2 + $0xd0] sm:$0xff]
    %v177 = vld [vmem:[#allocation2 + $0xd8] sm:$0xff]
    %v178 = vld [vmem:[#allocation2 + $0xe0] sm:$0xff]
    %v179 = vld [vmem:[#allocation2 + $0xe8] sm:$0xff]
    %v180 = vld [vmem:[#allocation2 + $0xf0] sm:$0xff]
    %v181 = vld [vmem:[#allocation2 + $0xf8] sm:$0xff]
    %v182 = vld [vmem:[#allocation2 + $0x100] sm:$0xff]
    %v183 = vld [vmem:[#allocation2 + $0x108] sm:$0xff]
    %v184 = vld [vmem:[#allocation2 + $0x110] sm:$0xff]
    %v185 = vld [vmem:[#allocation2 + $0x118] sm:$0xff]
    %v186 = vld [vmem:[#allocation2 + $0x120] sm:$0xff]
    %v187 = vld [vmem:[#allocation2 + $0x128] sm:$0xff]
    %v188 = vld [vmem:[#allocation2 + $0x130] sm:$0xff]
    %v189 = vld [vmem:[#allocation2 + $0x138] sm:$0xff]
    %v190 = vld [vmem:[#allocation2 + $0x140] sm:$0xff]
    %v191 = vld [vmem:[#allocation2 + $0x148] sm:$0xff]
    %v192 = vld [vmem:[#allocation2 + $0x150] sm:$0xff]
    %v193 = vld [vmem:[#allocation2 + $0x158] sm:$0xff]
    %v194 = vld [vmem:[#allocation2 + $0x160] sm:$0xff]
    %v195 = vld [vmem:[#allocation2 + $0x168] sm:$0xff]
    %v196 = vld [vmem:[#allocation2 + $0x170] sm:$0xff]
    %v197 = vld [vmem:[#allocation2 + $0x178] sm:$0xff]
    %v198 = vld [vmem:[#allocation2 + $0x180] sm:$0xff]
    %v199 = vld [vmem:[#allocation2 + $0x188] sm:$0xff]
    %v200 = vld [vmem:[#allocation2 + $0x190] sm:$0xff]
    %v201 = vld [vmem:[#allocation2 + $0x198] sm:$0xff]
    %v202 = vld [vmem:[#allocation2 + $0x1a0] sm:$0xff]
    %v203 = vld [vmem:[#allocation2 + $0x1a8] sm:$0xff]
    %v204 = vld [vmem:[#allocation2 + $0x1b0] sm:$0xff]
    %v205 = vld [vmem:[#allocation2 + $0x1b8] sm:$0xff]
    %v206 = vld [vmem:[#allocation2 + $0x1c0] sm:$0xff]
    %v207 = vld [vmem:[#allocation2 + $0x1c8] sm:$0xff]
    %v208 = vld [vmem:[#allocation2 + $0x1d0] sm:$0xff]
    %v209 = vld [vmem:[#allocation2 + $0x1d8] sm:$0xff]
    %v210 = vld [vmem:[#allocation2 + $0x1e0] sm:$0xff]
    %v211 = vld [vmem:[#allocation2 + $0x1e8] sm:$0xff]
    %v212 = vld [vmem:[#allocation2 + $0x1f0] sm:$0xff]
    %v213 = vld [vmem:[#allocation2 + $0x1f8] sm:$0xff]
    %v214 = vld [vmem:[#allocation2 + $0x200] sm:$0xff]
    %v215 = vld [vmem:[#allocation2 + $0x208] sm:$0xff]
    %v216 = vld [vmem:[#allocation2 + $0x210] sm:$0xff]
    %v217 = vld [vmem:[#allocation2 + $0x218] sm:$0xff]
    %v218 = vld [vmem:[#allocation2 + $0x220] sm:$0xff]
    %v219 = vld [vmem:[#allocation2 + $0x228] sm:$0xff]
    %v220 = vld [vmem:[#allocation2 + $0x230] sm:$0xff]
    %v221 = vld [vmem:[#allocation2 + $0x238] sm:$0xff]
    %v222 = vld [vmem:[#allocation2 + $0x240] sm:$0xff]
    %v223 = vld [vmem:[#allocation2 + $0x248] sm:$0xff]
    %v224 = vld [vmem:[#allocation2 + $0x250] sm:$0xff]
    %v225 = vld [vmem:[#allocation2 + $0x258] sm:$0xff]
    %v226 = vld [vmem:[#allocation2 + $0x260] sm:$0xff]
    %v227 = vld [vmem:[#allocation2 + $0x268] sm:$0xff]
    %v228 = vld [vmem:[#allocation2 + $0x270] sm:$0xff]
    %v229 = vld [vmem:[#allocation2 + $0x278] sm:$0xff]
    %v230 = vld [vmem:[#allocation2 + $0x280] sm:$0xff]
    %v231 = vld [vmem:[#allocation2 + $0x288] sm:$0xff]
    %v232 = vld [vmem:[#allocation2 + $0x290] sm:$0xff]
    %v233 = vld [vmem:[#allocation2 + $0x298] sm:$0xff]
    %v234 = vld [vmem:[#allocation2 + $0x2a0] sm:$0xff]
    %v235 = vld [vmem:[#allocation2 + $0x2a8] sm:$0xff]
    %v236 = vld [vmem:[#allocation2 + $0x2b0] sm:$0xff]
    %v237 = vld [vmem:[#allocation2 + $0x2b8] sm:$0xff]
    %v238 = vld [vmem:[#allocation2 + $0x2c0] sm:$0xff]
    %v239 = vld [vmem:[#allocation2 + $0x2c8] sm:$0xff]
    %v240 = vld [vmem:[#allocation2 + $0x2d0] sm:$0xff]
    %v241 = vld [vmem:[#allocation2 + $0x2d8] sm:$0xff]
    %v242 = vld [vmem:[#allocation2 + $0x2e0] sm:$0xff]
    %v243 = vld [vmem:[#allocation2 + $0x2e8] sm:$0xff]
    %v244 = vld [vmem:[#allocation2 + $0x2f0] sm:$0xff]
    %v245 = vld [vmem:[#allocation2 + $0x2f8] sm:$0xff]
    %v246 = vld [vmem:[#allocation2 + $0x300] sm:$0xff]
    %v247 = vld [vmem:[#allocation2 + $0x308] sm:$0xff]
    %v248 = vld [vmem:[#allocation2 + $0x310] sm:$0xff]
    %v249 = vld [vmem:[#allocation2 + $0x318] sm:$0xff]
    %v250 = vld [vmem:[#allocation2 + $0x320] sm:$0xff]
    %v251 = vld [vmem:[#allocation2 + $0x328] sm:$0xff]
    %v252 = vld [vmem:[#allocation2 + $0x330] sm:$0xff]
    %v253 = vld [vmem:[#allocation2 + $0x338] sm:$0xff]
    %v254 = vld [vmem:[#allocation2 + $0x340] sm:$0xff]
    %v255 = vld [vmem:[#allocation2 + $0x348] sm:$0xff]
    %v256 = vld [vmem:[#allocation2 + $0x350] sm:$0xff]
    %v257 = vld [vmem:[#allocation2 + $0x358] sm:$0xff]
    %v258 = vld [vmem:[#allocation2 + $0x360] sm:$0xff]
    %v259 = vld [vmem:[#allocation2 + $0x368] sm:$0xff]
    %v260 = vld [vmem:[#allocation2 + $0x370] sm:$0xff]
    %v261 = vld [vmem:[#allocation2 + $0x378] sm:$0xff]
    %v262 = vld [vmem:[#allocation2 + $0x380] sm:$0xff]
    %v263 = vld [vmem:[#allocation2 + $0x388] sm:$0xff]
    %v264 = vld [vmem:[#allocation2 + $0x390] sm:$0xff]
    %v265 = vld [vmem:[#allocation2 + $0x398] sm:$0xff]
    %v266 = vld [vmem:[#allocation2 + $0x3a0] sm:$0xff]
    %v267 = vld [vmem:[#allocation2 + $0x3a8] sm:$0xff]
    %v268 = vld [vmem:[#allocation2 + $0x3b0] sm:$0xff]
    %v269 = vld [vmem:[#allocation2 + $0x3b8] sm:$0xff]
    %v270 = vld [vmem:[#allocation2 + $0x3c0] sm:$0xff]
    %v271 = vld [vmem:[#allocation2 + $0x3c8] sm:$0xff]
    %v272 = vld [vmem:[#allocation2 + $0x3d0] sm:$0xff]
    %v273 = vld [vmem:[#allocation2 + $0x3d8] sm:$0xff]
    %v274 = vld [vmem:[#allocation2 + $0x3e0] sm:$0xff]
    %v275 = vld [vmem:[#allocation2 + $0x3e8] sm:$0xff]
    %v276 = vld [vmem:[#allocation2 + $0x3f0] sm:$0xff]
    %v277 = vld [vmem:[#allocation2 + $0x3f8] sm:$0xff]
    %v278 = vld [vmem:[#allocation2 + $0x400] sm:$0xff]
    %v279 = vld [vmem:[#allocation2 + $0x408] sm:$0xff]
    %v280 = vld [vmem:[#allocation2 + $0x410] sm:$0xff]
    %v281 = vld [vmem:[#allocation2 + $0x418] sm:$0xff]
    %v282 = vld [vmem:[#allocation2 + $0x420] sm:$0xff]
    %v283 = vld [vmem:[#allocation2 + $0x428] sm:$0xff]
    %v284 = vld [vmem:[#allocation2 + $0x430] sm:$0xff]
    %v285 = vld [vmem:[#allocation2 + $0x438] sm:$0xff]
    %v286 = vld [vmem:[#allocation2 + $0x440] sm:$0xff]
    %v287 = vld [vmem:[#allocation2 + $0x448] sm:$0xff]
    %v288 = vld [vmem:[#allocation2 + $0x450] sm:$0xff]
    %v289 = vld [vmem:[#allocation2 + $0x458] sm:$0xff]
    %v290 = vld [vmem:[#allocation2 + $0x460] sm:$0xff]
    %v291 = vld [vmem:[#allocation2 + $0x468] sm:$0xff]
    %v292 = vld [vmem:[#allocation2 + $0x470] sm:$0xff]
    %v293 = vld [vmem:[#allocation2 + $0x478] sm:$0xff]
    %v294 = vld [vmem:[#allocation2 + $0x480] sm:$0xff]
    %v295 = vld [vmem:[#allocation2 + $0x488] sm:$0xff]
    %v296 = vld [vmem:[#allocation2 + $0x490] sm:$0xff]
    %v297 = vld [vmem:[#allocation2 + $0x498] sm:$0xff]
    %v298 = vld [vmem:[#allocation2 + $0x4a0] sm:$0xff]
    %v299 = vld [vmem:[#allocation2 + $0x4a8] sm:$0xff]
    %v300 = vld [vmem:[#allocation2 + $0x4b0] sm:$0xff]
    %v301 = vld [vmem:[#allocation2 + $0x4b8] sm:$0xff]
    %v302 = vld [vmem:[#allocation2 + $0x4c0] sm:$0xff]
    %v303 = vld [vmem:[#allocation2 + $0x4c8] sm:$0xff]
    %v304 = vld [vmem:[#allocation2 + $0x4d0] sm:$0xff]
    %v305 = vld [vmem:[#allocation2 + $0x4d8] sm:$0xff]
    %v306 = vld [vmem:[#allocation2 + $0x4e0] sm:$0xff]
    %v307 = vld [vmem:[#allocation2 + $0x4e8] sm:$0xff]
    %v308 = vld [vmem:[#allocation2 + $0x4f0] sm:$0xff]
    %v309 = vld [vmem:[#allocation2 + $0x4f8] sm:$0xff]
    %v310 = vld [vmem:[#allocation2 + $0x500] sm:$0xff]
    %v311 = vld [vmem:[#allocation2 + $0x508] sm:$0xff]
    %v312 = vld [vmem:[#allocation2 + $0x510] sm:$0xff]
    %v313 = vld [vmem:[#allocation2 + $0x518] sm:$0xff]
    %v314 = vld [vmem:[#allocation2 + $0x520] sm:$0xff]
    %v315 = vld [vmem:[#allocation2 + $0x528] sm:$0xff]
    %v316 = vld [vmem:[#allocation2 + $0x530] sm:$0xff]
    %v317 = vld [vmem:[#allocation2 + $0x538] sm:$0xff]
    %v318 = vld [vmem:[#allocation2 + $0x540] sm:$0xff]
    %v319 = vld [vmem:[#allocation2 + $0x548] sm:$0xff]
    %v320 = vld [vmem:[#allocation2 + $0x550] sm:$0xff]
    %v321 = vld [vmem:[#allocation2 + $0x558] sm:$0xff]
    %v322 = vld [vmem:[#allocation2 + $0x560] sm:$0xff]
    %v323 = vld [vmem:[#allocation2 + $0x568] sm:$0xff]
    %v324 = vld [vmem:[#allocation2 + $0x570] sm:$0xff]
    %v325 = vld [vmem:[#allocation2 + $0x578] sm:$0xff]
    %v326 = vld [vmem:[#allocation2 + $0x580] sm:$0xff]
    %v327 = vld [vmem:[#allocation2 + $0x588] sm:$0xff]
    %v328 = vld [vmem:[#allocation2 + $0x590] sm:$0xff]
    %v329 = vld [vmem:[#allocation2 + $0x598] sm:$0xff]
    %v330 = vld [vmem:[#allocation2 + $0x5a0] sm:$0xff]
    %v331 = vld [vmem:[#allocation2 + $0x5a8] sm:$0xff]
    %v332 = vld [vmem:[#allocation2 + $0x5b0] sm:$0xff]
    %v333 = vld [vmem:[#allocation2 + $0x5b8] sm:$0xff]
    %v334 = vld [vmem:[#allocation2 + $0x5c0] sm:$0xff]
    %v335 = vld [vmem:[#allocation2 + $0x5c8] sm:$0xff]
    %v336 = vld [vmem:[#allocation2 + $0x5d0] sm:$0xff]
    %v337 = vld [vmem:[#allocation2 + $0x5d8] sm:$0xff]
    %v338 = vld [vmem:[#allocation2 + $0x5e0] sm:$0xff]
    %v339 = vld [vmem:[#allocation2 + $0x5e8] sm:$0xff]
    %v340 = vld [vmem:[#allocation2 + $0x5f0] sm:$0xff]
    %v341 = vld [vmem:[#allocation2 + $0x5f8] sm:$0xff]
    %v342 = vld [vmem:[#allocation2 + $0x600] sm:$0xff]
    %v343 = vld [vmem:[#allocation2 + $0x608] sm:$0xff]
    %v344 = vld [vmem:[#allocation2 + $0x610] sm:$0xff]
    %v345 = vld [vmem:[#allocation2 + $0x618] sm:$0xff]
    %v346 = vld [vmem:[#allocation2 + $0x620] sm:$0xff]
    %v347 = vld [vmem:[#allocation2 + $0x628] sm:$0xff]
    %v348 = vld [vmem:[#allocation2 + $0x630] sm:$0xff]
    %v349 = vld [vmem:[#allocation2 + $0x638] sm:$0xff]
    %v350 = vld [vmem:[#allocation2 + $0x640] sm:$0xff]
    %v351 = vld [vmem:[#allocation2 + $0x648] sm:$0xff]
    %v352 = vld [vmem:[#allocation2 + $0x650] sm:$0xff]
    %v353 = vld [vmem:[#allocation2 + $0x658] sm:$0xff]
    %v354 = vld [vmem:[#allocation2 + $0x660] sm:$0xff]
    %v355 = vld [vmem:[#allocation2 + $0x668] sm:$0xff]
    %v356 = vld [vmem:[#allocation2 + $0x670] sm:$0xff]
    %v357 = vld [vmem:[#allocation2 + $0x678] sm:$0xff]
    %v358 = vld [vmem:[#allocation2 + $0x680] sm:$0xff]
    %v359 = vld [vmem:[#allocation2 + $0x688] sm:$0xff]
    %v360 = vld [vmem:[#allocation2 + $0x690] sm:$0xff]
    %v361 = vld [vmem:[#allocation2 + $0x698] sm:$0xff]
    %v362 = vld [vmem:[#allocation2 + $0x6a0] sm:$0xff]
    %v363 = vld [vmem:[#allocation2 + $0x6a8] sm:$0xff]
    %v364 = vld [vmem:[#allocation2 + $0x6b0] sm:$0xff]
    %v365 = vld [vmem:[#allocation2 + $0x6b8] sm:$0xff]
    %v366 = vld [vmem:[#allocation2 + $0x6c0] sm:$0xff]
    %v367 = vld [vmem:[#allocation2 + $0x6c8] sm:$0xff]
    %v368 = vld [vmem:[#allocation2 + $0x6d0] sm:$0xff]
    %v369 = vld [vmem:[#allocation2 + $0x6d8] sm:$0xff]
    %v370 = vld [vmem:[#allocation2 + $0x6e0] sm:$0xff]
    %v371 = vld [vmem:[#allocation2 + $0x6e8] sm:$0xff]
    %v372 = vld [vmem:[#allocation2 + $0x6f0] sm:$0xff]
    %v373 = vld [vmem:[#allocation2 + $0x6f8] sm:$0xff]
    %v374 = vld [vmem:[#allocation2 + $0x700] sm:$0xff]
    %v375 = vld [vmem:[#allocation2 + $0x708] sm:$0xff]
    %v376 = vld [vmem:[#allocation2 + $0x710] sm:$0xff]
    %v377 = vld [vmem:[#allocation2 + $0x718] sm:$0xff]
    %v378 = vld [vmem:[#allocation2 + $0x720] sm:$0xff]
    %v379 = vld [vmem:[#allocation2 + $0x728] sm:$0xff]
    %v380 = vld [vmem:[#allocation2 + $0x730] sm:$0xff]
    %v381 = vld [vmem:[#allocation2 + $0x738] sm:$0xff]
    %v382 = vld [vmem:[#allocation2 + $0x740] sm:$0xff]
    %v383 = vld [vmem:[#allocation2 + $0x748] sm:$0xff]
    %v384 = vld [vmem:[#allocation2 + $0x750] sm:$0xff]
    %v385 = vld [vmem:[#allocation2 + $0x758] sm:$0xff]
    %v386 = vld [vmem:[#allocation2 + $0x760] sm:$0xff]
    %v387 = vld [vmem:[#allocation2 + $0x768] sm:$0xff]
    %v388 = vld [vmem:[#allocation2 + $0x770] sm:$0xff]
    %v389 = vld [vmem:[#allocation2 + $0x778] sm:$0xff]
    %v390 = vld [vmem:[#allocation2 + $0x780] sm:$0xff]
    %v391 = vld [vmem:[#allocation2 + $0x788] sm:$0xff]
    %v392 = vld [vmem:[#allocation2 + $0x790] sm:$0xff]
    %v393 = vld [vmem:[#allocation2 + $0x798] sm:$0xff]
    %v394 = vld [vmem:[#allocation2 + $0x7a0] sm:$0xff]
    %v395 = vld [vmem:[#allocation2 + $0x7a8] sm:$0xff]
    %v396 = vld [vmem:[#allocation2 + $0x7b0] sm:$0xff]
    %v397 = vld [vmem:[#allocation2 + $0x7b8] sm:$0xff]
    %v398 = vld [vmem:[#allocation2 + $0x7c0] sm:$0xff]
    %v399 = vld [vmem:[#allocation2 + $0x7c8] sm:$0xff]
    %v400 = vld [vmem:[#allocation2 + $0x7d0] sm:$0xff]
    %v401 = vld [vmem:[#allocation2 + $0x7d8] sm:$0xff]
    %v402 = vld [vmem:[#allocation2 + $0x7e0] sm:$0xff]
    %v403 = vld [vmem:[#allocation2 + $0x7e8] sm:$0xff]
    %v404 = vld [vmem:[#allocation2 + $0x7f0] sm:$0xff]
    %v405 = vld [vmem:[#allocation2 + $0x7f8] sm:$0xff]
    %v406 = vld [vmem:[#allocation2 + $0x800] sm:$0xff]
    %v407 = vld [vmem:[#allocation2 + $0x808] sm:$0xff]
    %v408 = vld [vmem:[#allocation2 + $0x810] sm:$0xff]
    %v409 = vld [vmem:[#allocation2 + $0x818] sm:$0xff]
    %v410 = vld [vmem:[#allocation2 + $0x820] sm:$0xff]
    %v411 = vld [vmem:[#allocation2 + $0x828] sm:$0xff]
    %v412 = vld [vmem:[#allocation2 + $0x830] sm:$0xff]
    %v413 = vld [vmem:[#allocation2 + $0x838] sm:$0xff]
    %v414 = vld [vmem:[#allocation2 + $0x840] sm:$0xff]
    %v415 = vld [vmem:[#allocation2 + $0x848] sm:$0xff]
    %v416 = vld [vmem:[#allocation2 + $0x850] sm:$0xff]
    %v417 = vld [vmem:[#allocation2 + $0x858] sm:$0xff]
    %v418 = vld [vmem:[#allocation2 + $0x860] sm:$0xff]
    %v419 = vld [vmem:[#allocation2 + $0x868] sm:$0xff]
    %v420 = vld [vmem:[#allocation2 + $0x870] sm:$0xff]
    %v421 = vld [vmem:[#allocation2 + $0x878] sm:$0xff]
    %v422 = vld [vmem:[#allocation2 + $0x880] sm:$0xff]
    %v423 = vld [vmem:[#allocation2 + $0x888] sm:$0xff]
    %v424 = vld [vmem:[#allocation2 + $0x890] sm:$0xff]
    %v425 = vld [vmem:[#allocation2 + $0x898] sm:$0xff]
    %v426 = vld [vmem:[#allocation2 + $0x8a0] sm:$0xff]
    %v427 = vld [vmem:[#allocation2 + $0x8a8] sm:$0xff]
    %v428 = vld [vmem:[#allocation2 + $0x8b0] sm:$0xff]
    %v429 = vld [vmem:[#allocation2 + $0x8b8] sm:$0xff]
    %v430 = vld [vmem:[#allocation2 + $0x8c0] sm:$0xff]
    %v431 = vld [vmem:[#allocation2 + $0x8c8] sm:$0xff]
    %v432 = vld [vmem:[#allocation2 + $0x8d0] sm:$0xff]
    %v433 = vld [vmem:[#allocation2 + $0x8d8] sm:$0xff]
    %v434 = vld [vmem:[#allocation2 + $0x8e0] sm:$0xff]
    %v435 = vld [vmem:[#allocation2 + $0x8e8] sm:$0xff]
    %v436 = vld [vmem:[#allocation2 + $0x8f0] sm:$0xff]
    %v437 = vld [vmem:[#allocation2 + $0x8f8] sm:$0xff]
    %v438 = vld [vmem:[#allocation2 + $0x900] sm:$0xff]
    %v439 = vld [vmem:[#allocation2 + $0x908] sm:$0xff]
    %v440 = vld [vmem:[#allocation2 + $0x910] sm:$0xff]
    %v441 = vld [vmem:[#allocation2 + $0x918] sm:$0xff]
    %v442 = vld [vmem:[#allocation2 + $0x920] sm:$0xff]
    %v443 = vld [vmem:[#allocation2 + $0x928] sm:$0xff]
    %v444 = vld [vmem:[#allocation2 + $0x930] sm:$0xff]
    %v445 = vld [vmem:[#allocation2 + $0x938] sm:$0xff]
    %v446 = vld [vmem:[#allocation2 + $0x940] sm:$0xff]
    %v447 = vld [vmem:[#allocation2 + $0x948] sm:$0xff]
    %v448 = vld [vmem:[#allocation2 + $0x950] sm:$0xff]
    %v449 = vld [vmem:[#allocation2 + $0x958] sm:$0xff]
    %v450 = vld [vmem:[#allocation2 + $0x960] sm:$0xff]
    %v451 = vld [vmem:[#allocation2 + $0x968] sm:$0xff]
    %v452 = vld [vmem:[#allocation2 + $0x970] sm:$0xff]
    %v453 = vld [vmem:[#allocation2 + $0x978] sm:$0xff]
    %v454 = vld [vmem:[#allocation2 + $0x980] sm:$0xff]
    %v455 = vld [vmem:[#allocation2 + $0x988] sm:$0xff]
    %v456 = vld [vmem:[#allocation2 + $0x990] sm:$0xff]
    %v457 = vld [vmem:[#allocation2 + $0x998] sm:$0xff]
    %v458 = vld [vmem:[#allocation2 + $0x9a0] sm:$0xff]
    %v459 = vld [vmem:[#allocation2 + $0x9a8] sm:$0xff]
    %v460 = vld [vmem:[#allocation2 + $0x9b0] sm:$0xff]
    %v461 = vld [vmem:[#allocation2 + $0x9b8] sm:$0xff]
    %v462 = vld [vmem:[#allocation2 + $0x9c0] sm:$0xff]
    %v463 = vld [vmem:[#allocation2 + $0x9c8] sm:$0xff]
    %v464 = vld [vmem:[#allocation2 + $0x9d0] sm:$0xff]
    %v465 = vld [vmem:[#allocation2 + $0x9d8] sm:$0xff]
    %v466 = vld [vmem:[#allocation2 + $0x9e0] sm:$0xff]
    %v467 = vld [vmem:[#allocation2 + $0x9e8] sm:$0xff]
    %v468 = vld [vmem:[#allocation2 + $0x9f0] sm:$0xff]
    %v469 = vld [vmem:[#allocation2 + $0x9f8] sm:$0xff]
    %v470 = vld [vmem:[#allocation2 + $0xa00] sm:$0xff]
    %v471 = vld [vmem:[#allocation2 + $0xa08] sm:$0xff]
    %v472 = vld [vmem:[#allocation2 + $0xa10] sm:$0xff]
    %v473 = vld [vmem:[#allocation2 + $0xa18] sm:$0xff]
    %v474 = vld [vmem:[#allocation2 + $0xa20] sm:$0xff]
    %v475 = vld [vmem:[#allocation2 + $0xa28] sm:$0xff]
    %v476 = vld [vmem:[#allocation2 + $0xa30] sm:$0xff]
    %v477 = vld [vmem:[#allocation2 + $0xa38] sm:$0xff]
    %v478 = vld [vmem:[#allocation2 + $0xa40] sm:$0xff]
    %v479 = vld [vmem:[#allocation2 + $0xa48] sm:$0xff]
    %v480 = vld [vmem:[#allocation2 + $0xa50] sm:$0xff]
    %v481 = vld [vmem:[#allocation2 + $0xa58] sm:$0xff]
    %v482 = vld [vmem:[#allocation2 + $0xa60] sm:$0xff]
    %v483 = vld [vmem:[#allocation2 + $0xa68] sm:$0xff]
    %v484 = vld [vmem:[#allocation2 + $0xa70] sm:$0xff]
    %v485 = vld [vmem:[#allocation2 + $0xa78] sm:$0xff]
    %v486 = vld [vmem:[#allocation2 + $0xa80] sm:$0xff]
    %v487 = vld [vmem:[#allocation2 + $0xa88] sm:$0xff]
    %v488 = vld [vmem:[#allocation2 + $0xa90] sm:$0xff]
    %v489 = vld [vmem:[#allocation2 + $0xa98] sm:$0xff]
    %v490 = vld [vmem:[#allocation2 + $0xaa0] sm:$0xff]
    %v491 = vld [vmem:[#allocation2 + $0xaa8] sm:$0xff]
    %v492 = vld [vmem:[#allocation2 + $0xab0] sm:$0xff]
    %v493 = vld [vmem:[#allocation2 + $0xab8] sm:$0xff]
    %v494 = vld [vmem:[#allocation2 + $0xac0] sm:$0xff]
    %v495 = vld [vmem:[#allocation2 + $0xac8] sm:$0xff]
    %v496 = vld [vmem:[#allocation2 + $0xad0] sm:$0xff]
    %v497 = vld [vmem:[#allocation2 + $0xad8] sm:$0xff]
    %v498 = vld [vmem:[#allocation2 + $0xae0] sm:$0xff]
    %v499 = vld [vmem:[#allocation2 + $0xae8] sm:$0xff]
    %v500 = vld [vmem:[#allocation2 + $0xaf0] sm:$0xff]
    %v501 = vld [vmem:[#allocation2 + $0xaf8] sm:$0xff]
    %v502 = vld [vmem:[#allocation2 + $0xb00] sm:$0xff]
    %v503 = vld [vmem:[#allocation2 + $0xb08] sm:$0xff]
    %v504 = vld [vmem:[#allocation2 + $0xb10] sm:$0xff]
    %v505 = vld [vmem:[#allocation2 + $0xb18] sm:$0xff]
    %v506 = vld [vmem:[#allocation2 + $0xb20] sm:$0xff]
    %v507 = vld [vmem:[#allocation2 + $0xb28] sm:$0xff]
    %v508 = vld [vmem:[#allocation2 + $0xb30] sm:$0xff]
    %v509 = vld [vmem:[#allocation2 + $0xb38] sm:$0xff]
    %v510 = vld [vmem:[#allocation2 + $0xb40] sm:$0xff]
    %v511 = vld [vmem:[#allocation2 + $0xb48] sm:$0xff]
    %v512 = vld [vmem:[#allocation2 + $0xb50] sm:$0xff]
    %v513 = vld [vmem:[#allocation2 + $0xb58] sm:$0xff]
    %v514 = vld [vmem:[#allocation2 + $0xb60] sm:$0xff]
    %v515 = vld [vmem:[#allocation2 + $0xb68] sm:$0xff]
    %v516 = vld [vmem:[#allocation2 + $0xb70] sm:$0xff]
    %v517 = vld [vmem:[#allocation2 + $0xb78] sm:$0xff]
    %v518 = vld [vmem:[#allocation2 + $0xb80] sm:$0xff]
    %v519 = vld [vmem:[#allocation2 + $0xb88] sm:$0xff]
    %v520 = vld [vmem:[#allocation2 + $0xb90] sm:$0xff]
    %v521 = vld [vmem:[#allocation2 + $0xb98] sm:$0xff]
    %v522 = vld [vmem:[#allocation2 + $0xba0] sm:$0xff]
    %v523 = vld [vmem:[#allocation2 + $0xba8] sm:$0xff]
    %v524 = vld [vmem:[#allocation2 + $0xbb0] sm:$0xff]
    %v525 = vld [vmem:[#allocation2 + $0xbb8] sm:$0xff]
    %v526 = vld [vmem:[#allocation2 + $0xbc0] sm:$0xff]
    %v527 = vld [vmem:[#allocation2 + $0xbc8] sm:$0xff]
    %v528 = vld [vmem:[#allocation2 + $0xbd0] sm:$0xff]
    %v529 = vld [vmem:[#allocation2 + $0xbd8] sm:$0xff]
    %v530 = vld [vmem:[#allocation2 + $0xbe0] sm:$0xff]
    %v531 = vld [vmem:[#allocation2 + $0xbe8] sm:$0xff]
    %v532 = vld [vmem:[#allocation2 + $0xbf0] sm:$0xff]
    %v533 = vld [vmem:[#allocation2 + $0xbf8] sm:$0xff]
    %v534 = vld [vmem:[#allocation2 + $0xc00] sm:$0xff]
    %v535 = vld [vmem:[#allocation2 + $0xc08] sm:$0xff]
    %v536 = vld [vmem:[#allocation2 + $0xc10] sm:$0xff]
    %v537 = vld [vmem:[#allocation2 + $0xc18] sm:$0xff]
    %v538 = vld [vmem:[#allocation2 + $0xc20] sm:$0xff]
    %v539 = vld [vmem:[#allocation2 + $0xc28] sm:$0xff]
    %v540 = vld [vmem:[#allocation2 + $0xc30] sm:$0xff]
    %v541 = vld [vmem:[#allocation2 + $0xc38] sm:$0xff]
    %v542 = vld [vmem:[#allocation2 + $0xc40] sm:$0xff]
    %v543 = vld [vmem:[#allocation2 + $0xc48] sm:$0xff]
    %v544 = vld [vmem:[#allocation2 + $0xc50] sm:$0xff]
    %v545 = vld [vmem:[#allocation2 + $0xc58] sm:$0xff]
    %v546 = vld [vmem:[#allocation2 + $0xc60] sm:$0xff]
    %v547 = vld [vmem:[#allocation2 + $0xc68] sm:$0xff]
    %v548 = vld [vmem:[#allocation2 + $0xc70] sm:$0xff]
    %v549 = vld [vmem:[#allocation2 + $0xc78] sm:$0xff]
    %v550 = vld [vmem:[#allocation2 + $0xc80] sm:$0xff]
    %v551 = vld [vmem:[#allocation2 + $0xc88] sm:$0xff]
    %v552 = vld [vmem:[#allocation2 + $0xc90] sm:$0xff]
    %v553 = vld [vmem:[#allocation2 + $0xc98] sm:$0xff]
    %v554 = vld [vmem:[#allocation2 + $0xca0] sm:$0xff]
    %v555 = vld [vmem:[#allocation2 + $0xca8] sm:$0xff]
    %v556 = vld [vmem:[#allocation2 + $0xcb0] sm:$0xff]
    %v557 = vld [vmem:[#allocation2 + $0xcb8] sm:$0xff]
    %v558 = vld [vmem:[#allocation2 + $0xcc0] sm:$0xff]
    %v559 = vld [vmem:[#allocation2 + $0xcc8] sm:$0xff]
    %v560 = vld [vmem:[#allocation2 + $0xcd0] sm:$0xff]
    %v561 = vld [vmem:[#allocation2 + $0xcd8] sm:$0xff]
    %v562 = vld [vmem:[#allocation2 + $0xce0] sm:$0xff]
    %v563 = vld [vmem:[#allocation2 + $0xce8] sm:$0xff]
    %v564 = vld [vmem:[#allocation2 + $0xcf0] sm:$0xff]
    %v565 = vld [vmem:[#allocation2 + $0xcf8] sm:$0xff]
    %v566 = vld [vmem:[#allocation2 + $0xd00] sm:$0xff]
    %v567 = vld [vmem:[#allocation2 + $0xd08] sm:$0xff]
    %v568 = vld [vmem:[#allocation2 + $0xd10] sm:$0xff]
    %v569 = vld [vmem:[#allocation2 + $0xd18] sm:$0xff]
    %v570 = vld [vmem:[#allocation2 + $0xd20] sm:$0xff]
    %v571 = vld [vmem:[#allocation2 + $0xd28] sm:$0xff]
    %v572 = vld [vmem:[#allocation2 + $0xd30] sm:$0xff]
    %v573 = vld [vmem:[#allocation2 + $0xd38] sm:$0xff]
    %v574 = vld [vmem:[#allocation2 + $0xd40] sm:$0xff]
    %v575 = vld [vmem:[#allocation2 + $0xd48] sm:$0xff]
    %v576 = vld [vmem:[#allocation2 + $0xd50] sm:$0xff]
    %v577 = vld [vmem:[#allocation2 + $0xd58] sm:$0xff]
    %v578 = vld [vmem:[#allocation2 + $0xd60] sm:$0xff]
    %v579 = vld [vmem:[#allocation2 + $0xd68] sm:$0xff]
    %v580 = vld [vmem:[#allocation2 + $0xd70] sm:$0xff]
    %v581 = vld [vmem:[#allocation2 + $0xd78] sm:$0xff]
    %v582 = vld [vmem:[#allocation2 + $0xd80] sm:$0xff]
    %v583 = vld [vmem:[#allocation2 + $0xd88] sm:$0xff]
    %v584 = vld [vmem:[#allocation2 + $0xd90] sm:$0xff]
    %v585 = vld [vmem:[#allocation2 + $0xd98] sm:$0xff]
    %v586 = vld [vmem:[#allocation2 + $0xda0] sm:$0xff]
    %v587 = vld [vmem:[#allocation2 + $0xda8] sm:$0xff]
    %v588 = vld [vmem:[#allocation2 + $0xdb0] sm:$0xff]
    %v589 = vld [vmem:[#allocation2 + $0xdb8] sm:$0xff]
    %v590 = vld [vmem:[#allocation2 + $0xdc0] sm:$0xff]
    %v591 = vld [vmem:[#allocation2 + $0xdc8] sm:$0xff]
    %v592 = vld [vmem:[#allocation2 + $0xdd0] sm:$0xff]
    %v593 = vld [vmem:[#allocation2 + $0xdd8] sm:$0xff]
    %v594 = vld [vmem:[#allocation2 + $0xde0] sm:$0xff]
    %v595 = vld [vmem:[#allocation2 + $0xde8] sm:$0xff]
    %v596 = vld [vmem:[#allocation2 + $0xdf0] sm:$0xff]
    %v597 = vld [vmem:[#allocation2 + $0xdf8] sm:$0xff]
    %v598 = vld [vmem:[#allocation2 + $0xe00] sm:$0xff]
    %v599 = vld [vmem:[#allocation2 + $0xe08] sm:$0xff]
    %v600 = vld [vmem:[#allocation2 + $0xe10] sm:$0xff]
    %v601 = vld [vmem:[#allocation2 + $0xe18] sm:$0xff]
    %v602 = vld [vmem:[#allocation2 + $0xe20] sm:$0xff]
    %v603 = vld [vmem:[#allocation2 + $0xe28] sm:$0xff]
    %v604 = vld [vmem:[#allocation2 + $0xe30] sm:$0xff]
    %v605 = vld [vmem:[#allocation2 + $0xe38] sm:$0xff]
    %v606 = vld [vmem:[#allocation2 + $0xe40] sm:$0xff]
    %v607 = vld [vmem:[#allocation2 + $0xe48] sm:$0xff]
    %v608 = vld [vmem:[#allocation2 + $0xe50] sm:$0xff]
    %v609 = vld [vmem:[#allocation2 + $0xe58] sm:$0xff]
    %v610 = vld [vmem:[#allocation2 + $0xe60] sm:$0xff]
    %v611 = vld [vmem:[#allocation2 + $0xe68] sm:$0xff]
    %v612 = vld [vmem:[#allocation2 + $0xe70] sm:$0xff]
    %v613 = vld [vmem:[#allocation2 + $0xe78] sm:$0xff]
    %v614 = vld [vmem:[#allocation2 + $0xe80] sm:$0xff]
    %v615 = vld [vmem:[#allocation2 + $0xe88] sm:$0xff]
    %v616 = vld [vmem:[#allocation2 + $0xe90] sm:$0xff]
    %v617 = vld [vmem:[#allocation2 + $0xe98] sm:$0xff]
    %v618 = vld [vmem:[#allocation2 + $0xea0] sm:$0xff]
    %v619 = vld [vmem:[#allocation2 + $0xea8] sm:$0xff]
    %v620 = vld [vmem:[#allocation2 + $0xeb0] sm:$0xff]
    %v621 = vld [vmem:[#allocation2 + $0xeb8] sm:$0xff]
    %v622 = vld [vmem:[#allocation2 + $0xec0] sm:$0xff]
    %v623 = vld [vmem:[#allocation2 + $0xec8] sm:$0xff]
    %v624 = vld [vmem:[#allocation2 + $0xed0] sm:$0xff]
    %v625 = vld [vmem:[#allocation2 + $0xed8] sm:$0xff]
    %v626 = vld [vmem:[#allocation2 + $0xee0] sm:$0xff]
    %v627 = vld [vmem:[#allocation2 + $0xee8] sm:$0xff]
    %v628 = vld [vmem:[#allocation2 + $0xef0] sm:$0xff]
    %v629 = vld [vmem:[#allocation2 + $0xef8] sm:$0xff]
    %v630 = vld [vmem:[#allocation2 + $0xf00] sm:$0xff]
    %v631 = vld [vmem:[#allocation2 + $0xf08] sm:$0xff]
    %v632 = vld [vmem:[#allocation2 + $0xf10] sm:$0xff]
    %v633 = vld [vmem:[#allocation2 + $0xf18] sm:$0xff]
    %v634 = vld [vmem:[#allocation2 + $0xf20] sm:$0xff]
    %v635 = vld [vmem:[#allocation2 + $0xf28] sm:$0xff]
    %v636 = vld [vmem:[#allocation2 + $0xf30] sm:$0xff]
    %v637 = vld [vmem:[#allocation2 + $0xf38] sm:$0xff]
    %v638 = vld [vmem:[#allocation2 + $0xf40] sm:$0xff]
    %v639 = vld [vmem:[#allocation2 + $0xf48] sm:$0xff]
    %v640 = vld [vmem:[#allocation2 + $0xf50] sm:$0xff]
    %v641 = vld [vmem:[#allocation2 + $0xf58] sm:$0xff]
    %v642 = vld [vmem:[#allocation2 + $0xf60] sm:$0xff]
    %v643 = vld [vmem:[#allocation2 + $0xf68] sm:$0xff]
    %v644 = vld [vmem:[#allocation2 + $0xf70] sm:$0xff]
    %v645 = vld [vmem:[#allocation2 + $0xf78] sm:$0xff]
    %v646 = vld [vmem:[#allocation2 + $0xf80] sm:$0xff]
    %v647 = vld [vmem:[#allocation2 + $0xf88] sm:$0xff]
    %v648 = vld [vmem:[#allocation2 + $0xf90] sm:$0xff]
    %v649 = vld [vmem:[#allocation2 + $0xf98] sm:$0xff]
    %v650 = vld [vmem:[#allocation2 + $0xfa0] sm:$0xff]
    %v651 = vld [vmem:[#allocation2 + $0xfa8] sm:$0xff]
    %v652 = vld [vmem:[#allocation2 + $0xfb0] sm:$0xff]
    %v653 = vld [vmem:[#allocation2 + $0xfb8] sm:$0xff]
    %v654 = vld [vmem:[#allocation2 + $0xfc0] sm:$0xff]
    %v655 = vld [vmem:[#allocation2 + $0xfc8] sm:$0xff]
    %v656 = vld [vmem:[#allocation2 + $0xfd0] sm:$0xff]
    %v657 = vld [vmem:[#allocation2 + $0xfd8] sm:$0xff]
    %v658 = vld [vmem:[#allocation2 + $0xfe0] sm:$0xff]
    %v659 = vld [vmem:[#allocation2 + $0xfe8] sm:$0xff]
    %v660 = vld [vmem:[#allocation2 + $0xff0] sm:$0xff]
    %v661 = vld [vmem:[#allocation2 + $0xff8] sm:$0xff]
    %v662 = vld [vmem:[#allocation2 + $0x1000] sm:$0xff]
    %v663 = vld [vmem:[#allocation2 + $0x1008] sm:$0xff]
    %v664 = vld [vmem:[#allocation2 + $0x1010] sm:$0xff]
    %v665 = vld [vmem:[#allocation2 + $0x1018] sm:$0xff]
    %v666 = vld [vmem:[#allocation2 + $0x1020] sm:$0xff]
    %v667 = vld [vmem:[#allocation2 + $0x1028] sm:$0xff]
    %v668 = vld [vmem:[#allocation2 + $0x1030] sm:$0xff]
    %v669 = vld [vmem:[#allocation2 + $0x1038] sm:$0xff]
    %v670 = vld [vmem:[#allocation2 + $0x1040] sm:$0xff]
    %v671 = vld [vmem:[#allocation2 + $0x1048] sm:$0xff]
    %v672 = vld [vmem:[#allocation2 + $0x1050] sm:$0xff]
    %v673 = vld [vmem:[#allocation2 + $0x1058] sm:$0xff]
    %v674 = vld [vmem:[#allocation2 + $0x1060] sm:$0xff]
    %v675 = vld [vmem:[#allocation2 + $0x1068] sm:$0xff]
    %v676 = vld [vmem:[#allocation2 + $0x1070] sm:$0xff]
    %v677 = vld [vmem:[#allocation2 + $0x1078] sm:$0xff]
    %v678 = vld [vmem:[#allocation2 + $0x1080] sm:$0xff]
    %v679 = vld [vmem:[#allocation2 + $0x1088] sm:$0xff]
    %v680 = vld [vmem:[#allocation2 + $0x1090] sm:$0xff]
    %v681 = vld [vmem:[#allocation2 + $0x1098] sm:$0xff]
    %v682 = vld [vmem:[#allocation2 + $0x10a0] sm:$0xff]
    %v683 = vld [vmem:[#allocation2 + $0x10a8] sm:$0xff]
    %v684 = vld [vmem:[#allocation2 + $0x10b0] sm:$0xff]
    %v685 = vld [vmem:[#allocation2 + $0x10b8] sm:$0xff]
    %v686 = vld [vmem:[#allocation2 + $0x10c0] sm:$0xff]
    %v687 = vld [vmem:[#allocation2 + $0x10c8] sm:$0xff]
    %v688 = vld [vmem:[#allocation2 + $0x10d0] sm:$0xff]
    %v689 = vld [vmem:[#allocation2 + $0x10d8] sm:$0xff]
    %v690 = vld [vmem:[#allocation2 + $0x10e0] sm:$0xff]
    %v691 = vld [vmem:[#allocation2 + $0x10e8] sm:$0xff]
    %v692 = vld [vmem:[#allocation2 + $0x10f0] sm:$0xff]
    %v693 = vld [vmem:[#allocation2 + $0x10f8] sm:$0xff]
    %v694 = vld [vmem:[#allocation2 + $0x1100] sm:$0xff]
    %v695 = vld [vmem:[#allocation2 + $0x1108] sm:$0xff]
    %v696 = vld [vmem:[#allocation2 + $0x1110] sm:$0xff]
    %v697 = vld [vmem:[#allocation2 + $0x1118] sm:$0xff]
    %v698 = vld [vmem:[#allocation2 + $0x1120] sm:$0xff]
    %v699 = vld [vmem:[#allocation2 + $0x1128] sm:$0xff]
    %v700 = vld [vmem:[#allocation2 + $0x1130] sm:$0xff]
    %v701 = vld [vmem:[#allocation2 + $0x1138] sm:$0xff]
    %v702 = vld [vmem:[#allocation2 + $0x1140] sm:$0xff]
    %v703 = vld [vmem:[#allocation2 + $0x1148] sm:$0xff]
    %v704 = vld [vmem:[#allocation2 + $0x1150] sm:$0xff]
    %v705 = vld [vmem:[#allocation2 + $0x1158] sm:$0xff]
    %v706 = vld [vmem:[#allocation2 + $0x1160] sm:$0xff]
    %v707 = vld [vmem:[#allocation2 + $0x1168] sm:$0xff]
    %v708 = vld [vmem:[#allocation2 + $0x1170] sm:$0xff]
    %v709 = vld [vmem:[#allocation2 + $0x1178] sm:$0xff]
    %v710 = vld [vmem:[#allocation2 + $0x1180] sm:$0xff]
    %v711 = vld [vmem:[#allocation2 + $0x1188] sm:$0xff]
    %v712 = vld [vmem:[#allocation2 + $0x1190] sm:$0xff]
    %v713 = vld [vmem:[#allocation2 + $0x1198] sm:$0xff]
    %v714 = vld [vmem:[#allocation2 + $0x11a0] sm:$0xff]
    %v715 = vld [vmem:[#allocation2 + $0x11a8] sm:$0xff]
    %v716 = vld [vmem:[#allocation2 + $0x11b0] sm:$0xff]
    %v717 = vld [vmem:[#allocation2 + $0x11b8] sm:$0xff]
    %v718 = vld [vmem:[#allocation2 + $0x11c0] sm:$0xff]
    %v719 = vld [vmem:[#allocation2 + $0x11c8] sm:$0xff]
    %v720 = vld [vmem:[#allocation2 + $0x11d0] sm:$0xff]
    %v721 = vld [vmem:[#allocation2 + $0x11d8] sm:$0xff]
    %v722 = vld [vmem:[#allocation2 + $0x11e0] sm:$0xff]
    %v723 = vld [vmem:[#allocation2 + $0x11e8] sm:$0xff]
    %v724 = vld [vmem:[#allocation2 + $0x11f0] sm:$0xff]
    %v725 = vld [vmem:[#allocation2 + $0x11f8] sm:$0xff]
    %v726 = vld [vmem:[#allocation2 + $0x1200] sm:$0xff]
    %v727 = vld [vmem:[#allocation2 + $0x1208] sm:$0xff]
    %v728 = vld [vmem:[#allocation2 + $0x1210] sm:$0xff]
    %v729 = vld [vmem:[#allocation2 + $0x1218] sm:$0xff]
    %v730 = vld [vmem:[#allocation2 + $0x1220] sm:$0xff]
    %v731 = vld [vmem:[#allocation2 + $0x1228] sm:$0xff]
    %v732 = vld [vmem:[#allocation2 + $0x1230] sm:$0xff]
    %v733 = vld [vmem:[#allocation2 + $0x1238] sm:$0xff]
    %v734 = vld [vmem:[#allocation2 + $0x1240] sm:$0xff]
    %v735 = vld [vmem:[#allocation2 + $0x1248] sm:$0xff]
    %v736 = vld [vmem:[#allocation2 + $0x1250] sm:$0xff]
    %v737 = vld [vmem:[#allocation2 + $0x1258] sm:$0xff]
    %v738 = vld [vmem:[#allocation2 + $0x1260] sm:$0xff]
    %v739 = vld [vmem:[#allocation2 + $0x1268] sm:$0xff]
    %v740 = vld [vmem:[#allocation2 + $0x1270] sm:$0xff]
    %v741 = vld [vmem:[#allocation2 + $0x1278] sm:$0xff]
    %v742 = vld [vmem:[#allocation2 + $0x1280] sm:$0xff]
    %v743 = vld [vmem:[#allocation2 + $0x1288] sm:$0xff]
    %v744 = vld [vmem:[#allocation2 + $0x1290] sm:$0xff]
    %v745 = vld [vmem:[#allocation2 + $0x1298] sm:$0xff]
    %v746 = vld [vmem:[#allocation2 + $0x12a0] sm:$0xff]
    %v747 = vld [vmem:[#allocation2 + $0x12a8] sm:$0xff]
    %v748 = vld [vmem:[#allocation2 + $0x12b0] sm:$0xff]
    %v749 = vld [vmem:[#allocation2 + $0x12b8] sm:$0xff]
    %v750 = vld [vmem:[#allocation2 + $0x12c0] sm:$0xff]
    %v751 = vld [vmem:[#allocation2 + $0x12c8] sm:$0xff]
    %v752 = vld [vmem:[#allocation2 + $0x12d0] sm:$0xff]
    %v753 = vld [vmem:[#allocation2 + $0x12d8] sm:$0xff]
    %v754 = vld [vmem:[#allocation2 + $0x12e0] sm:$0xff]
    %v755 = vld [vmem:[#allocation2 + $0x12e8] sm:$0xff]
    %v756 = vld [vmem:[#allocation2 + $0x12f0] sm:$0xff]
    %v757 = vld [vmem:[#allocation2 + $0x12f8] sm:$0xff]
    %v758 = vld [vmem:[#allocation2 + $0x1300] sm:$0xff]
    %v759 = vld [vmem:[#allocation2 + $0x1308] sm:$0xff]
    %v760 = vld [vmem:[#allocation2 + $0x1310] sm:$0xff]
    %v761 = vld [vmem:[#allocation2 + $0x1318] sm:$0xff]
    %v762 = vld [vmem:[#allocation2 + $0x1320] sm:$0xff]
    %v763 = vld [vmem:[#allocation2 + $0x1328] sm:$0xff]
    %v764 = vld [vmem:[#allocation2 + $0x1330] sm:$0xff]
    %v765 = vld [vmem:[#allocation2 + $0x1338] sm:$0xff]
    %v766 = vld [vmem:[#allocation2 + $0x1340] sm:$0xff]
    %v767 = vld [vmem:[#allocation2 + $0x1348] sm:$0xff]
    %v768 = vld [vmem:[#allocation2 + $0x1350] sm:$0xff]
    %v769 = vld [vmem:[#allocation2 + $0x1358] sm:$0xff]
    %v770 = vld [vmem:[#allocation2 + $0x1360] sm:$0xff]
    %v771 = vld [vmem:[#allocation2 + $0x1368] sm:$0xff]
    %v772 = vld [vmem:[#allocation2 + $0x1370] sm:$0xff]
    %v773 = vld [vmem:[#allocation2 + $0x1378] sm:$0xff]
    %v774 = vld [vmem:[#allocation2 + $0x1380] sm:$0xff]
    %v775 = vld [vmem:[#allocation2 + $0x1388] sm:$0xff]
    %v776 = vld [vmem:[#allocation2 + $0x1390] sm:$0xff]
    %v777 = vld [vmem:[#allocation2 + $0x1398] sm:$0xff]
    %v778 = vld [vmem:[#allocation2 + $0x13a0] sm:$0xff]
    %v779 = vld [vmem:[#allocation2 + $0x13a8] sm:$0xff]
    %v780 = vld [vmem:[#allocation2 + $0x13b0] sm:$0xff]
    %v781 = vld [vmem:[#allocation2 + $0x13b8] sm:$0xff]
    %v782 = vld [vmem:[#allocation2 + $0x13c0] sm:$0xff]
    %v783 = vld [vmem:[#allocation2 + $0x13c8] sm:$0xff]
    %v784 = vld [vmem:[#allocation2 + $0x13d0] sm:$0xff]
    %v785 = vld [vmem:[#allocation2 + $0x13d8] sm:$0xff]
    %v786 = vld [vmem:[#allocation2 + $0x13e0] sm:$0xff]
    %v787 = vld [vmem:[#allocation2 + $0x13e8] sm:$0xff]
    %v788 = vld [vmem:[#allocation2 + $0x13f0] sm:$0xff]
    %v789 = vld [vmem:[#allocation2 + $0x13f8] sm:$0xff]
    %v790 = vld [vmem:[#allocation2 + $0x1400] sm:$0xff]
    %v791 = vld [vmem:[#allocation2 + $0x1408] sm:$0xff]
    %v792 = vld [vmem:[#allocation2 + $0x1410] sm:$0xff]
    %v793 = vld [vmem:[#allocation2 + $0x1418] sm:$0xff]
    %v794 = vld [vmem:[#allocation2 + $0x1420] sm:$0xff]
    %v795 = vld [vmem:[#allocation2 + $0x1428] sm:$0xff]
    %v796 = vld [vmem:[#allocation2 + $0x1430] sm:$0xff]
    %v797 = vld [vmem:[#allocation2 + $0x1438] sm:$0xff]
    %v798 = vld [vmem:[#allocation2 + $0x1440] sm:$0xff]
    %v799 = vld [vmem:[#allocation2 + $0x1448] sm:$0xff]
    %v800 = vld [vmem:[#allocation2 + $0x1450] sm:$0xff]
    %v801 = vld [vmem:[#allocation2 + $0x1458] sm:$0xff]
    %v802 = vld [vmem:[#allocation2 + $0x1460] sm:$0xff]
    %v803 = vld [vmem:[#allocation2 + $0x1468] sm:$0xff]
    %v804 = vld [vmem:[#allocation2 + $0x1470] sm:$0xff]
    %v805 = vld [vmem:[#allocation2 + $0x1478] sm:$0xff]
    %v806 = vld [vmem:[#allocation2 + $0x1480] sm:$0xff]
    %v807 = vld [vmem:[#allocation2 + $0x1488] sm:$0xff]
    %v808 = vld [vmem:[#allocation2 + $0x1490] sm:$0xff]
    %v809 = vld [vmem:[#allocation2 + $0x1498] sm:$0xff]
    %v810 = vld [vmem:[#allocation2 + $0x14a0] sm:$0xff]
    %v811 = vld [vmem:[#allocation2 + $0x14a8] sm:$0xff]
    %v812 = vld [vmem:[#allocation2 + $0x14b0] sm:$0xff]
    %v813 = vld [vmem:[#allocation2 + $0x14b8] sm:$0xff]
    %v814 = vld [vmem:[#allocation2 + $0x14c0] sm:$0xff]
    %v815 = vld [vmem:[#allocation2 + $0x14c8] sm:$0xff]
    %v816 = vld [vmem:[#allocation2 + $0x14d0] sm:$0xff]
    %v817 = vld [vmem:[#allocation2 + $0x14d8] sm:$0xff]
    %v818 = vld [vmem:[#allocation2 + $0x14e0] sm:$0xff]
    %v819 = vld [vmem:[#allocation2 + $0x14e8] sm:$0xff]
    %v820 = vld [vmem:[#allocation2 + $0x14f0] sm:$0xff]
    %v821 = vld [vmem:[#allocation2 + $0x14f8] sm:$0xff]
    %v822 = vld [vmem:[#allocation2 + $0x1500] sm:$0xff]
    %v823 = vld [vmem:[#allocation2 + $0x1508] sm:$0xff]
    %v824 = vld [vmem:[#allocation2 + $0x1510] sm:$0xff]
    %v825 = vld [vmem:[#allocation2 + $0x1518] sm:$0xff]
    %v826 = vld [vmem:[#allocation2 + $0x1520] sm:$0xff]
    %v827 = vld [vmem:[#allocation2 + $0x1528] sm:$0xff]
    %v828 = vld [vmem:[#allocation2 + $0x1530] sm:$0xff]
    %v829 = vld [vmem:[#allocation2 + $0x1538] sm:$0xff]
    %v830 = vld [vmem:[#allocation2 + $0x1540] sm:$0xff]
    %v831 = vld [vmem:[#allocation2 + $0x1548] sm:$0xff]
    %v832 = vld [vmem:[#allocation2 + $0x1550] sm:$0xff]
    %v833 = vld [vmem:[#allocation2 + $0x1558] sm:$0xff]
    %v834 = vld [vmem:[#allocation2 + $0x1560] sm:$0xff]
    %v835 = vld [vmem:[#allocation2 + $0x1568] sm:$0xff]
    %v836 = vld [vmem:[#allocation2 + $0x1570] sm:$0xff]
    %v837 = vld [vmem:[#allocation2 + $0x1578] sm:$0xff]
    %v838 = vld [vmem:[#allocation2 + $0x1580] sm:$0xff]
    %v839 = vld [vmem:[#allocation2 + $0x1588] sm:$0xff]
    %v840 = vld [vmem:[#allocation2 + $0x1590] sm:$0xff]
    %v841 = vld [vmem:[#allocation2 + $0x1598] sm:$0xff]
    %v842 = vld [vmem:[#allocation2 + $0x15a0] sm:$0xff]
    %v843 = vld [vmem:[#allocation2 + $0x15a8] sm:$0xff]
    %v844 = vld [vmem:[#allocation2 + $0x15b0] sm:$0xff]
    %v845 = vld [vmem:[#allocation2 + $0x15b8] sm:$0xff]
    %v846 = vld [vmem:[#allocation2 + $0x15c0] sm:$0xff]
    %v847 = vld [vmem:[#allocation2 + $0x15c8] sm:$0xff]
    %v848 = vld [vmem:[#allocation2 + $0x15d0] sm:$0xff]
    %v849 = vld [vmem:[#allocation2 + $0x15d8] sm:$0xff]
    %v850 = vld [vmem:[#allocation2 + $0x15e0] sm:$0xff]
    %v851 = vld [vmem:[#allocation2 + $0x15e8] sm:$0xff]
    %v852 = vld [vmem:[#allocation2 + $0x15f0] sm:$0xff]
    %v853 = vld [vmem:[#allocation2 + $0x15f8] sm:$0xff]
    %v854 = vld [vmem:[#allocation2 + $0x1600] sm:$0xff]
    %v855 = vld [vmem:[#allocation2 + $0x1608] sm:$0xff]
    %v856 = vld [vmem:[#allocation2 + $0x1610] sm:$0xff]
    %v857 = vld [vmem:[#allocation2 + $0x1618] sm:$0xff]
    %v858 = vld [vmem:[#allocation2 + $0x1620] sm:$0xff]
    %v859 = vld [vmem:[#allocation2 + $0x1628] sm:$0xff]
    %v860 = vld [vmem:[#allocation2 + $0x1630] sm:$0xff]
    %v861 = vld [vmem:[#allocation2 + $0x1638] sm:$0xff]
    %v862 = vld [vmem:[#allocation2 + $0x1640] sm:$0xff]
    %v863 = vld [vmem:[#allocation2 + $0x1648] sm:$0xff]
    %v864 = vld [vmem:[#allocation2 + $0x1650] sm:$0xff]
    %v865 = vld [vmem:[#allocation2 + $0x1658] sm:$0xff]
    %v866 = vld [vmem:[#allocation2 + $0x1660] sm:$0xff]
    %v867 = vld [vmem:[#allocation2 + $0x1668] sm:$0xff]
    %v868 = vld [vmem:[#allocation2 + $0x1670] sm:$0xff]
    %v869 = vld [vmem:[#allocation2 + $0x1678] sm:$0xff]
    %v870 = vld [vmem:[#allocation2 + $0x1680] sm:$0xff]
    %v871 = vld [vmem:[#allocation2 + $0x1688] sm:$0xff]
    %v872 = vld [vmem:[#allocation2 + $0x1690] sm:$0xff]
    %v873 = vld [vmem:[#allocation2 + $0x1698] sm:$0xff]
    %v874 = vld [vmem:[#allocation2 + $0x16a0] sm:$0xff]
    %v875 = vld [vmem:[#allocation2 + $0x16a8] sm:$0xff]
    %v876 = vld [vmem:[#allocation2 + $0x16b0] sm:$0xff]
    %v877 = vld [vmem:[#allocation2 + $0x16b8] sm:$0xff]
    %v878 = vld [vmem:[#allocation2 + $0x16c0] sm:$0xff]
    %v879 = vld [vmem:[#allocation2 + $0x16c8] sm:$0xff]
    %v880 = vld [vmem:[#allocation2 + $0x16d0] sm:$0xff]
    %v881 = vld [vmem:[#allocation2 + $0x16d8] sm:$0xff]
    %v882 = vld [vmem:[#allocation2 + $0x16e0] sm:$0xff]
    %v883 = vld [vmem:[#allocation2 + $0x16e8] sm:$0xff]
    %v884 = vld [vmem:[#allocation2 + $0x16f0] sm:$0xff]
    %v885 = vld [vmem:[#allocation2 + $0x16f8] sm:$0xff]
    %v886 = vld [vmem:[#allocation2 + $0x1700] sm:$0xff]
    %v887 = vld [vmem:[#allocation2 + $0x1708] sm:$0xff]
    %v888 = vld [vmem:[#allocation2 + $0x1710] sm:$0xff]
    %v889 = vld [vmem:[#allocation2 + $0x1718] sm:$0xff]
    %v890 = vld [vmem:[#allocation2 + $0x1720] sm:$0xff]
    %v891 = vld [vmem:[#allocation2 + $0x1728] sm:$0xff]
    %v892 = vld [vmem:[#allocation2 + $0x1730] sm:$0xff]
    %v893 = vld [vmem:[#allocation2 + $0x1738] sm:$0xff]
    %v894 = vld [vmem:[#allocation2 + $0x1740] sm:$0xff]
    %v895 = vld [vmem:[#allocation2 + $0x1748] sm:$0xff]
    %v896 = vld [vmem:[#allocation2 + $0x1750] sm:$0xff]
    %v897 = vld [vmem:[#allocation2 + $0x1758] sm:$0xff]
    %v898 = vld [vmem:[#allocation2 + $0x1760] sm:$0xff]
    %v899 = vld [vmem:[#allocation2 + $0x1768] sm:$0xff]
    %v900 = vld [vmem:[#allocation2 + $0x1770] sm:$0xff]
    %v901 = vld [vmem:[#allocation2 + $0x1778] sm:$0xff]
    %v902 = vld [vmem:[#allocation2 + $0x1780] sm:$0xff]
    %v903 = vld [vmem:[#allocation2 + $0x1788] sm:$0xff]
    %v904 = vld [vmem:[#allocation2 + $0x1790] sm:$0xff]
    %v905 = vld [vmem:[#allocation2 + $0x1798] sm:$0xff]
    %v906 = vld [vmem:[#allocation2 + $0x17a0] sm:$0xff]
    %v907 = vld [vmem:[#allocation2 + $0x17a8] sm:$0xff]
    %v908 = vld [vmem:[#allocation2 + $0x17b0] sm:$0xff]
    %v909 = vld [vmem:[#allocation2 + $0x17b8] sm:$0xff]
    %v910 = vld [vmem:[#allocation2 + $0x17c0] sm:$0xff]
    %v911 = vld [vmem:[#allocation2 + $0x17c8] sm:$0xff]
    %v912 = vld [vmem:[#allocation2 + $0x17d0] sm:$0xff]
    %v913 = vld [vmem:[#allocation2 + $0x17d8] sm:$0xff]
    %v914 = vld [vmem:[#allocation2 + $0x17e0] sm:$0xff]
    %v915 = vld [vmem:[#allocation2 + $0x17e8] sm:$0xff]
    %v916 = vld [vmem:[#allocation2 + $0x17f0] sm:$0xff]
    %v917 = vld [vmem:[#allocation2 + $0x17f8] sm:$0xff]
    %v918 = vld [vmem:[#allocation2 + $0x1800] sm:$0xff]
    %v919 = vld [vmem:[#allocation2 + $0x1808] sm:$0xff]
    %v920 = vld [vmem:[#allocation2 + $0x1810] sm:$0xff]
    %v921 = vld [vmem:[#allocation2 + $0x1818] sm:$0xff]
    %v922 = vld [vmem:[#allocation2 + $0x1820] sm:$0xff]
    %v923 = vld [vmem:[#allocation2 + $0x1828] sm:$0xff]
    %v924 = vld [vmem:[#allocation2 + $0x1830] sm:$0xff]
    %v925 = vld [vmem:[#allocation2 + $0x1838] sm:$0xff]
    %v926 = vld [vmem:[#allocation2 + $0x1840] sm:$0xff]
    %v927 = vld [vmem:[#allocation2 + $0x1848] sm:$0xff]
    %v928 = vld [vmem:[#allocation2 + $0x1850] sm:$0xff]
    %v929 = vld [vmem:[#allocation2 + $0x1858] sm:$0xff]
    %v930 = vld [vmem:[#allocation2 + $0x1860] sm:$0xff]
    %v931 = vld [vmem:[#allocation2 + $0x1868] sm:$0xff]
    %v932 = vld [vmem:[#allocation2 + $0x1870] sm:$0xff]
    %v933 = vld [vmem:[#allocation2 + $0x1878] sm:$0xff]
    %v934 = vld [vmem:[#allocation2 + $0x1880] sm:$0xff]
    %v935 = vld [vmem:[#allocation2 + $0x1888] sm:$0xff]
    %v936 = vld [vmem:[#allocation2 + $0x1890] sm:$0xff]
    %v937 = vld [vmem:[#allocation2 + $0x1898] sm:$0xff]
    %v938 = vld [vmem:[#allocation2 + $0x18a0] sm:$0xff]
    %v939 = vld [vmem:[#allocation2 + $0x18a8] sm:$0xff]
    %v940 = vld [vmem:[#allocation2 + $0x18b0] sm:$0xff]
    %v941 = vld [vmem:[#allocation2 + $0x18b8] sm:$0xff]
    %v942 = vld [vmem:[#allocation2 + $0x18c0] sm:$0xff]
    %v943 = vld [vmem:[#allocation2 + $0x18c8] sm:$0xff]
    %v944 = vld [vmem:[#allocation2 + $0x18d0] sm:$0xff]
    %v945 = vld [vmem:[#allocation2 + $0x18d8] sm:$0xff]
    %v946 = vld [vmem:[#allocation2 + $0x18e0] sm:$0xff]
    %v947 = vld [vmem:[#allocation2 + $0x18e8] sm:$0xff]
    %v948 = vld [vmem:[#allocation2 + $0x18f0] sm:$0xff]
    %v949 = vld [vmem:[#allocation2 + $0x18f8] sm:$0xff]
    %v950 = vld [vmem:[#allocation2 + $0x1900] sm:$0xff]
    %v951 = vld [vmem:[#allocation2 + $0x1908] sm:$0xff]
    %v952 = vld [vmem:[#allocation2 + $0x1910] sm:$0xff]
    %v953 = vld [vmem:[#allocation2 + $0x1918] sm:$0xff]
    %v954 = vld [vmem:[#allocation2 + $0x1920] sm:$0xff]
    %v955 = vld [vmem:[#allocation2 + $0x1928] sm:$0xff]
    %v956 = vld [vmem:[#allocation2 + $0x1930] sm:$0xff]
    %v957 = vld [vmem:[#allocation2 + $0x1938] sm:$0xff]
    %v958 = vld [vmem:[#allocation2 + $0x1940] sm:$0xff]
    %v959 = vld [vmem:[#allocation2 + $0x1948] sm:$0xff]
    %v960 = vld [vmem:[#allocation2 + $0x1950] sm:$0xff]
    %v961 = vld [vmem:[#allocation2 + $0x1958] sm:$0xff]
    %v962 = vld [vmem:[#allocation2 + $0x1960] sm:$0xff]
    %v963 = vld [vmem:[#allocation2 + $0x1968] sm:$0xff]
    %v964 = vld [vmem:[#allocation2 + $0x1970] sm:$0xff]
    %v965 = vld [vmem:[#allocation2 + $0x1978] sm:$0xff]
    %v966 = vld [vmem:[#allocation2 + $0x1980] sm:$0xff]
    %v967 = vld [vmem:[#allocation2 + $0x1988] sm:$0xff]
    %v968 = vld [vmem:[#allocation2 + $0x1990] sm:$0xff]
    %v969 = vld [vmem:[#allocation2 + $0x1998] sm:$0xff]
    %v970 = vld [vmem:[#allocation2 + $0x19a0] sm:$0xff]
    %v971 = vld [vmem:[#allocation2 + $0x19a8] sm:$0xff]
    %v972 = vld [vmem:[#allocation2 + $0x19b0] sm:$0xff]
    %v973 = vld [vmem:[#allocation2 + $0x19b8] sm:$0xff]
    %v974 = vld [vmem:[#allocation2 + $0x19c0] sm:$0xff]
    %v975 = vld [vmem:[#allocation2 + $0x19c8] sm:$0xff]
    %v976 = vld [vmem:[#allocation2 + $0x19d0] sm:$0xff]
    %v977 = vld [vmem:[#allocation2 + $0x19d8] sm:$0xff]
    %v978 = vld [vmem:[#allocation2 + $0x19e0] sm:$0xff]
    %v979 = vld [vmem:[#allocation2 + $0x19e8] sm:$0xff]
    %v980 = vld [vmem:[#allocation2 + $0x19f0] sm:$0xff]
    %v981 = vld [vmem:[#allocation2 + $0x19f8] sm:$0xff]
    %v982 = vld [vmem:[#allocation2 + $0x1a00] sm:$0xff]
    %v983 = vld [vmem:[#allocation2 + $0x1a08] sm:$0xff]
    %v984 = vld [vmem:[#allocation2 + $0x1a10] sm:$0xff]
    %v985 = vld [vmem:[#allocation2 + $0x1a18] sm:$0xff]
    %v986 = vld [vmem:[#allocation2 + $0x1a20] sm:$0xff]
    %v987 = vld [vmem:[#allocation2 + $0x1a28] sm:$0xff]
    %v988 = vld [vmem:[#allocation2 + $0x1a30] sm:$0xff]
    %v989 = vld [vmem:[#allocation2 + $0x1a38] sm:$0xff]
    %v990 = vld [vmem:[#allocation2 + $0x1a40] sm:$0xff]
    %v991 = vld [vmem:[#allocation2 + $0x1a48] sm:$0xff]
    %v992 = vld [vmem:[#allocation2 + $0x1a50] sm:$0xff]
    %v993 = vld [vmem:[#allocation2 + $0x1a58] sm:$0xff]
    %v994 = vld [vmem:[#allocation2 + $0x1a60] sm:$0xff]
    %v995 = vld [vmem:[#allocation2 + $0x1a68] sm:$0xff]
    %v996 = vld [vmem:[#allocation2 + $0x1a70] sm:$0xff]
    %v997 = vld [vmem:[#allocation2 + $0x1a78] sm:$0xff]
    %v998 = vld [vmem:[#allocation2 + $0x1a80] sm:$0xff]
    %v999 = vld [vmem:[#allocation2 + $0x1a88] sm:$0xff]
    %v1000 = vld [vmem:[#allocation2 + $0x1a90] sm:$0xff]
    %v1001 = vld [vmem:[#allocation2 + $0x1a98] sm:$0xff]
    %v1002 = vld [vmem:[#allocation2 + $0x1aa0] sm:$0xff]
    %v1003 = vld [vmem:[#allocation2 + $0x1aa8] sm:$0xff]
    %v1004 = vld [vmem:[#allocation2 + $0x1ab0] sm:$0xff]
    %v1005 = vld [vmem:[#allocation2 + $0x1ab8] sm:$0xff]
    %v1006 = vld [vmem:[#allocation2 + $0x1ac0] sm:$0xff]
    %v1007 = vld [vmem:[#allocation2 + $0x1ac8] sm:$0xff]
    %v1008 = vld [vmem:[#allocation2 + $0x1ad0] sm:$0xff]
    %v1009 = vld [vmem:[#allocation2 + $0x1ad8] sm:$0xff]
    %v1010 = vld [vmem:[#allocation2 + $0x1ae0] sm:$0xff]
    %v1011 = vld [vmem:[#allocation2 + $0x1ae8] sm:$0xff]
    %v1012 = vld [vmem:[#allocation2 + $0x1af0] sm:$0xff]
    %v1013 = vld [vmem:[#allocation2 + $0x1af8] sm:$0xff]
    %v1014 = vld [vmem:[#allocation2 + $0x1b00] sm:$0xff]
    %v1015 = vld [vmem:[#allocation2 + $0x1b08] sm:$0xff]
    %v1016 = vld [vmem:[#allocation2 + $0x1b10] sm:$0xff]
    %v1017 = vld [vmem:[#allocation2 + $0x1b18] sm:$0xff]
    %v1018 = vld [vmem:[#allocation2 + $0x1b20] sm:$0xff]
    %v1019 = vld [vmem:[#allocation2 + $0x1b28] sm:$0xff]
    %v1020 = vld [vmem:[#allocation2 + $0x1b30] sm:$0xff]
    %v1021 = vld [vmem:[#allocation2 + $0x1b38] sm:$0xff]
    %v1022 = vld [vmem:[#allocation2 + $0x1b40] sm:$0xff]
    %v1023 = vld [vmem:[#allocation2 + $0x1b48] sm:$0xff]
    %v1024 = vld [vmem:[#allocation2 + $0x1b50] sm:$0xff]
    %v1025 = vld [vmem:[#allocation2 + $0x1b58] sm:$0xff]
    %v1026 = vld [vmem:[#allocation2 + $0x1b60] sm:$0xff]
    %v1027 = vld [vmem:[#allocation2 + $0x1b68] sm:$0xff]
    %v1028 = vld [vmem:[#allocation2 + $0x1b70] sm:$0xff]
    %v1029 = vld [vmem:[#allocation2 + $0x1b78] sm:$0xff]
    %v1030 = vld [vmem:[#allocation2 + $0x1b80] sm:$0xff]
    %v1031 = vld [vmem:[#allocation2 + $0x1b88] sm:$0xff]
    %v1032 = vld [vmem:[#allocation2 + $0x1b90] sm:$0xff]
    %v1033 = vld [vmem:[#allocation2 + $0x1b98] sm:$0xff]
    %v1034 = vld [vmem:[#allocation2 + $0x1ba0] sm:$0xff]
    %v1035 = vld [vmem:[#allocation2 + $0x1ba8] sm:$0xff]
    %v1036 = vld [vmem:[#allocation2 + $0x1bb0] sm:$0xff]
    %v1037 = vld [vmem:[#allocation2 + $0x1bb8] sm:$0xff]
    %v1038 = vld [vmem:[#allocation2 + $0x1bc0] sm:$0xff]
    %v1039 = vld [vmem:[#allocation2 + $0x1bc8] sm:$0xff]
    %v1040 = vld [vmem:[#allocation2 + $0x1bd0] sm:$0xff]
    %v1041 = vld [vmem:[#allocation2 + $0x1bd8] sm:$0xff]
    %v1042 = vld [vmem:[#allocation2 + $0x1be0] sm:$0xff]
    %v1043 = vld [vmem:[#allocation2 + $0x1be8] sm:$0xff]
    %v1044 = vld [vmem:[#allocation2 + $0x1bf0] sm:$0xff]
    %v1045 = vld [vmem:[#allocation2 + $0x1bf8] sm:$0xff]
    %v1046 = vld [vmem:[#allocation2 + $0x1c00] sm:$0xff]
    %v1047 = vld [vmem:[#allocation2 + $0x1c08] sm:$0xff]
    %v1048 = vld [vmem:[#allocation2 + $0x1c10] sm:$0xff]
    %v1049 = vld [vmem:[#allocation2 + $0x1c18] sm:$0xff]
    %v1050 = vld [vmem:[#allocation2 + $0x1c20] sm:$0xff]
    %v1051 = vld [vmem:[#allocation2 + $0x1c28] sm:$0xff]
    %v1052 = vld [vmem:[#allocation2 + $0x1c30] sm:$0xff]
    %v1053 = vld [vmem:[#allocation2 + $0x1c38] sm:$0xff]
    %v1054 = vld [vmem:[#allocation2 + $0x1c40] sm:$0xff]
    %v1055 = vld [vmem:[#allocation2 + $0x1c48] sm:$0xff]
    %v1056 = vld [vmem:[#allocation2 + $0x1c50] sm:$0xff]
    %v1057 = vld [vmem:[#allocation2 + $0x1c58] sm:$0xff]
    %v1058 = vld [vmem:[#allocation2 + $0x1c60] sm:$0xff]
    %v1059 = vld [vmem:[#allocation2 + $0x1c68] sm:$0xff]
    %v1060 = vld [vmem:[#allocation2 + $0x1c70] sm:$0xff]
    %v1061 = vld [vmem:[#allocation2 + $0x1c78] sm:$0xff]
    %v1062 = vld [vmem:[#allocation2 + $0x1c80] sm:$0xff]
    %v1063 = vld [vmem:[#allocation2 + $0x1c88] sm:$0xff]
    %v1064 = vld [vmem:[#allocation2 + $0x1c90] sm:$0xff]
    %v1065 = vld [vmem:[#allocation2 + $0x1c98] sm:$0xff]
    %v1066 = vld [vmem:[#allocation2 + $0x1ca0] sm:$0xff]
    %v1067 = vld [vmem:[#allocation2 + $0x1ca8] sm:$0xff]
    %v1068 = vld [vmem:[#allocation2 + $0x1cb0] sm:$0xff]
    %v1069 = vld [vmem:[#allocation2 + $0x1cb8] sm:$0xff]
    %v1070 = vld [vmem:[#allocation2 + $0x1cc0] sm:$0xff]
    %v1071 = vld [vmem:[#allocation2 + $0x1cc8] sm:$0xff]
    %v1072 = vld [vmem:[#allocation2 + $0x1cd0] sm:$0xff]
    %v1073 = vld [vmem:[#allocation2 + $0x1cd8] sm:$0xff]
    %v1074 = vld [vmem:[#allocation2 + $0x1ce0] sm:$0xff]
    %v1075 = vld [vmem:[#allocation2 + $0x1ce8] sm:$0xff]
    %v1076 = vld [vmem:[#allocation2 + $0x1cf0] sm:$0xff]
    %v1077 = vld [vmem:[#allocation2 + $0x1cf8] sm:$0xff]
    %v1078 = vld [vmem:[#allocation2 + $0x1d00] sm:$0xff]
    %v1079 = vld [vmem:[#allocation2 + $0x1d08] sm:$0xff]
    %v1080 = vld [vmem:[#allocation2 + $0x1d10] sm:$0xff]
    %v1081 = vld [vmem:[#allocation2 + $0x1d18] sm:$0xff]
    %v1082 = vld [vmem:[#allocation2 + $0x1d20] sm:$0xff]
    %v1083 = vld [vmem:[#allocation2 + $0x1d28] sm:$0xff]
    %v1084 = vld [vmem:[#allocation2 + $0x1d30] sm:$0xff]
    %v1085 = vld [vmem:[#allocation2 + $0x1d38] sm:$0xff]
    %v1086 = vld [vmem:[#allocation2 + $0x1d40] sm:$0xff]
    %v1087 = vld [vmem:[#allocation2 + $0x1d48] sm:$0xff]
    %v1088 = vld [vmem:[#allocation2 + $0x1d50] sm:$0xff]
    %v1089 = vld [vmem:[#allocation2 + $0x1d58] sm:$0xff]
    %v1090 = vld [vmem:[#allocation2 + $0x1d60] sm:$0xff]
    %v1091 = vld [vmem:[#allocation2 + $0x1d68] sm:$0xff]
    %v1092 = vld [vmem:[#allocation2 + $0x1d70] sm:$0xff]
    %v1093 = vld [vmem:[#allocation2 + $0x1d78] sm:$0xff]
    %v1094 = vld [vmem:[#allocation2 + $0x1d80] sm:$0xff]
    %v1095 = vld [vmem:[#allocation2 + $0x1d88] sm:$0xff]
    %v1096 = vld [vmem:[#allocation2 + $0x1d90] sm:$0xff]
    %v1097 = vld [vmem:[#allocation2 + $0x1d98] sm:$0xff]
    %v1098 = vld [vmem:[#allocation2 + $0x1da0] sm:$0xff]
    %v1099 = vld [vmem:[#allocation2 + $0x1da8] sm:$0xff]
    %v1100 = vld [vmem:[#allocation2 + $0x1db0] sm:$0xff]
    %v1101 = vld [vmem:[#allocation2 + $0x1db8] sm:$0xff]
    %v1102 = vld [vmem:[#allocation2 + $0x1dc0] sm:$0xff]
    %v1103 = vld [vmem:[#allocation2 + $0x1dc8] sm:$0xff]
    %v1104 = vld [vmem:[#allocation2 + $0x1dd0] sm:$0xff]
    %v1105 = vld [vmem:[#allocation2 + $0x1dd8] sm:$0xff]
    %v1106 = vld [vmem:[#allocation2 + $0x1de0] sm:$0xff]
    %v1107 = vld [vmem:[#allocation2 + $0x1de8] sm:$0xff]
    %v1108 = vld [vmem:[#allocation2 + $0x1df0] sm:$0xff]
    %v1109 = vld [vmem:[#allocation2 + $0x1df8] sm:$0xff]
    %v1110 = vld [vmem:[#allocation2 + $0x1e00] sm:$0xff]
    %v1111 = vld [vmem:[#allocation2 + $0x1e08] sm:$0xff]
    %v1112 = vld [vmem:[#allocation2 + $0x1e10] sm:$0xff]
    %v1113 = vld [vmem:[#allocation2 + $0x1e18] sm:$0xff]
    %v1114 = vld [vmem:[#allocation2 + $0x1e20] sm:$0xff]
    %v1115 = vld [vmem:[#allocation2 + $0x1e28] sm:$0xff]
    %v1116 = vld [vmem:[#allocation2 + $0x1e30] sm:$0xff]
    %v1117 = vld [vmem:[#allocation2 + $0x1e38] sm:$0xff]
    %v1118 = vld [vmem:[#allocation2 + $0x1e40] sm:$0xff]
    %v1119 = vld [vmem:[#allocation2 + $0x1e48] sm:$0xff]
    %v1120 = vld [vmem:[#allocation2 + $0x1e50] sm:$0xff]
    %v1121 = vld [vmem:[#allocation2 + $0x1e58] sm:$0xff]
    %v1122 = vld [vmem:[#allocation2 + $0x1e60] sm:$0xff]
    %v1123 = vld [vmem:[#allocation2 + $0x1e68] sm:$0xff]
    %v1124 = vld [vmem:[#allocation2 + $0x1e70] sm:$0xff]
    %v1125 = vld [vmem:[#allocation2 + $0x1e78] sm:$0xff]
    %v1126 = vld [vmem:[#allocation2 + $0x1e80] sm:$0xff]
    %v1127 = vld [vmem:[#allocation2 + $0x1e88] sm:$0xff]
    %v1128 = vld [vmem:[#allocation2 + $0x1e90] sm:$0xff]
    %v1129 = vld [vmem:[#allocation2 + $0x1e98] sm:$0xff]
    %v1130 = vld [vmem:[#allocation2 + $0x1ea0] sm:$0xff]
    %v1131 = vld [vmem:[#allocation2 + $0x1ea8] sm:$0xff]
    %v1132 = vld [vmem:[#allocation2 + $0x1eb0] sm:$0xff]
    %v1133 = vld [vmem:[#allocation2 + $0x1eb8] sm:$0xff]
    %v1134 = vld [vmem:[#allocation2 + $0x1ec0] sm:$0xff]
    %v1135 = vld [vmem:[#allocation2 + $0x1ec8] sm:$0xff]
    %v1136 = vld [vmem:[#allocation2 + $0x1ed0] sm:$0xff]
    %v1137 = vld [vmem:[#allocation2 + $0x1ed8] sm:$0xff]
    %v1138 = vld [vmem:[#allocation2 + $0x1ee0] sm:$0xff]
    %v1139 = vld [vmem:[#allocation2 + $0x1ee8] sm:$0xff]
    %v1140 = vld [vmem:[#allocation2 + $0x1ef0] sm:$0xff]
    %v1141 = vld [vmem:[#allocation2 + $0x1ef8] sm:$0xff]
    %v1142 = vld [vmem:[#allocation2 + $0x1f00] sm:$0xff]
    %v1143 = vld [vmem:[#allocation2 + $0x1f08] sm:$0xff]
    %v1144 = vld [vmem:[#allocation2 + $0x1f10] sm:$0xff]
    %v1145 = vld [vmem:[#allocation2 + $0x1f18] sm:$0xff]
    %v1146 = vld [vmem:[#allocation2 + $0x1f20] sm:$0xff]
    %v1147 = vld [vmem:[#allocation2 + $0x1f28] sm:$0xff]
    %v1148 = vld [vmem:[#allocation2 + $0x1f30] sm:$0xff]
    %v1149 = vld [vmem:[#allocation2 + $0x1f38] sm:$0xff]
    %v1150 = vld [vmem:[#allocation2 + $0x1f40] sm:$0xff]
    %v1151 = vld [vmem:[#allocation2 + $0x1f48] sm:$0xff]
    %v1152 = vld [vmem:[#allocation2 + $0x1f50] sm:$0xff]
    %v1153 = vld [vmem:[#allocation2 + $0x1f58] sm:$0xff]
    %v1154 = vld [vmem:[#allocation2 + $0x1f60] sm:$0xff]
    %v1155 = vld [vmem:[#allocation2 + $0x1f68] sm:$0xff]
    %v1156 = vld [vmem:[#allocation2 + $0x1f70] sm:$0xff]
    %v1157 = vld [vmem:[#allocation2 + $0x1f78] sm:$0xff]
    %v1158 = vld [vmem:[#allocation2 + $0x1f80] sm:$0xff]
    %v1159 = vld [vmem:[#allocation2 + $0x1f88] sm:$0xff]
    %v1160 = vld [vmem:[#allocation2 + $0x1f90] sm:$0xff]
    %v1161 = vld [vmem:[#allocation2 + $0x1f98] sm:$0xff]
    %v1162 = vld [vmem:[#allocation2 + $0x1fa0] sm:$0xff]
    %v1163 = vld [vmem:[#allocation2 + $0x1fa8] sm:$0xff]
    %v1164 = vld [vmem:[#allocation2 + $0x1fb0] sm:$0xff]
    %v1165 = vld [vmem:[#allocation2 + $0x1fb8] sm:$0xff]
    %v1166 = vld [vmem:[#allocation2 + $0x1fc0] sm:$0xff]
    %v1167 = vld [vmem:[#allocation2 + $0x1fc8] sm:$0xff]
    %v1168 = vld [vmem:[#allocation2 + $0x1fd0] sm:$0xff]
    %v1169 = vld [vmem:[#allocation2 + $0x1fd8] sm:$0xff]
    %v1170 = vld [vmem:[#allocation2 + $0x1fe0] sm:$0xff]
    %v1171 = vld [vmem:[#allocation2 + $0x1fe8] sm:$0xff]
    %v1172 = vld [vmem:[#allocation2 + $0x1ff0] sm:$0xff]
    %v1173 = vld [vmem:[#allocation2 + $0x1ff8] sm:$0xff]
    %1174 = vmatprep.subr.mxu0 %v181
    %1175 = vmatpush1.msra.mxu0 %v180
    %1176 = vmatprep.subr.mxu0 %v179
    %1177 = vmatpush1.msra.mxu0 %v178
    %1178 = vmatprep.subr.mxu0 %v177
    %1179 = vmatpush1.msra.mxu0 %v176
    %1180 = vmatprep.subr.mxu0 %v175
    %1181 = vmatpush1.msra.mxu0 %v174
    %1182 = vmatprep.subr.mxu0 %v173
    %1183 = vmatpush1.msra.mxu0 %v172
    %1184 = vmatprep.subr.mxu0 %v171
    %1185 = vmatpush1.msra.mxu0 %v170
    %1186 = vmatprep.subr.mxu0 %v169
    %1187 = vmatpush1.msra.mxu0 %v168
    %1188 = vmatprep.subr.mxu0 %v167
    %1189 = vmatpush1.msra.mxu0 %v166
    %1190 = vmatprep.subr.mxu0 %v165
    %1191 = vmatpush1.msra.mxu0 %v164
    %1192 = vmatprep.subr.mxu0 %v163
    %1193 = vmatpush1.msra.mxu0 %v162
    %1194 = vmatprep.subr.mxu0 %v161
    %1195 = vmatpush1.msra.mxu0 %v160
    %1196 = vmatprep.subr.mxu0 %v159
    %1197 = vmatpush1.msra.mxu0 %v158
    %1198 = vmatprep.subr.mxu0 %v157
    %1199 = vmatpush1.msra.mxu0 %v156
    %1200 = vmatprep.subr.mxu0 %v155
    %1201 = vmatpush1.msra.mxu0 %v154
    %1202 = vmatprep.subr.mxu0 %v153
    %1203 = vmatpush1.msra.mxu0 %v152
    %1204 = vmatprep.subr.mxu0 %v151
    %1205 = vmatpush1.msra.mxu0 %v150
    %1206 = vmatprep.subr.mxu0 %v213
    %1207 = vmatpush2.msra.mxu0 %v212
    %1208 = vmatprep.subr.mxu0 %v211
    %1209 = vmatpush2.msra.mxu0 %v210
    %1210 = vmatprep.subr.mxu0 %v209
    %1211 = vmatpush2.msra.mxu0 %v208
    %1212 = vmatprep.subr.mxu0 %v207
    %1213 = vmatpush2.msra.mxu0 %v206
    %1214 = vmatprep.subr.mxu0 %v205
    %1215 = vmatpush2.msra.mxu0 %v204
    %1216 = vmatprep.subr.mxu0 %v203
    %1217 = vmatpush2.msra.mxu0 %v202
    %1218 = vmatprep.subr.mxu0 %v201
    %1219 = vmatpush2.msra.mxu0 %v200
    %1220 = vmatprep.subr.mxu0 %v199
    %1221 = vmatpush2.msra.mxu0 %v198
    %1222 = vmatprep.subr.mxu0 %v197
    %1223 = vmatpush2.msra.mxu0 %v196
    %1224 = vmatprep.subr.mxu0 %v195
    %1225 = vmatpush2.msra.mxu0 %v194
    %1226 = vmatprep.subr.mxu0 %v193
    %1227 = vmatpush2.msra.mxu0 %v192
    %1228 = vmatprep.subr.mxu0 %v191
    %1229 = vmatpush2.msra.mxu0 %v190
    %1230 = vmatprep.subr.mxu0 %v189
    %1231 = vmatpush2.msra.mxu0 %v188
    %1232 = vmatprep.subr.mxu0 %v187
    %1233 = vmatpush2.msra.mxu0 %v186
    %1234 = vmatprep.subr.mxu0 %v185
    %1235 = vmatpush2.msra.mxu0 %v184
    %1236 = vmatprep.subr.mxu0 %v183
    %1237 = vmatpush2.msra.mxu0 %v182
    %1238 = vmatprep.mubr.f32.mxu0 %v119
    %1239 = vmatmul.mubr.f32.gmra.mxu0 %v118
    %v1240 = vpop.f32.mrf.mxu0
    %v1241 = vadd.f32 0.0, %v1240
    %v1242 = vpop.f32.mrf.mxu0
    %v1243 = vadd.f32 0.0, %v1242
    %1244 = vdwg.mxu0
    %1245 = vmatprep.subr.mxu0 %v245
    %1246 = vmatpush1.msra.mxu0 %v244
    %1247 = vmatprep.subr.mxu0 %v243
    %1248 = vmatpush1.msra.mxu0 %v242
    %1249 = vmatprep.subr.mxu0 %v241
    %1250 = vmatpush1.msra.mxu0 %v240
    %1251 = vmatprep.subr.mxu0 %v239
    %1252 = vmatpush1.msra.mxu0 %v238
    %1253 = vmatprep.subr.mxu0 %v237
    %1254 = vmatpush1.msra.mxu0 %v236
    %1255 = vmatprep.subr.mxu0 %v235
    %1256 = vmatpush1.msra.mxu0 %v234
    %1257 = vmatprep.subr.mxu0 %v233
    %1258 = vmatpush1.msra.mxu0 %v232
    %1259 = vmatprep.subr.mxu0 %v231
    %1260 = vmatpush1.msra.mxu0 %v230
    %1261 = vmatprep.subr.mxu0 %v229
    %1262 = vmatpush1.msra.mxu0 %v228
    %1263 = vmatprep.subr.mxu0 %v227
    %1264 = vmatpush1.msra.mxu0 %v226
    %1265 = vmatprep.subr.mxu0 %v225
    %1266 = vmatpush1.msra.mxu0 %v224
    %1267 = vmatprep.subr.mxu0 %v223
    %1268 = vmatpush1.msra.mxu0 %v222
    %1269 = vmatprep.subr.mxu0 %v221
    %1270 = vmatpush1.msra.mxu0 %v220
    %1271 = vmatprep.subr.mxu0 %v219
    %1272 = vmatpush1.msra.mxu0 %v218
    %1273 = vmatprep.subr.mxu0 %v217
    %1274 = vmatpush1.msra.mxu0 %v216
    %1275 = vmatprep.subr.mxu0 %v215
    %1276 = vmatpush1.msra.mxu0 %v214
    %1277 = vmatprep.subr.mxu0 %v277
    %1278 = vmatpush2.msra.mxu0 %v276
    %1279 = vmatprep.subr.mxu0 %v275
    %1280 = vmatpush2.msra.mxu0 %v274
    %1281 = vmatprep.subr.mxu0 %v273
    %1282 = vmatpush2.msra.mxu0 %v272
    %1283 = vmatprep.subr.mxu0 %v271
    %1284 = vmatpush2.msra.mxu0 %v270
    %1285 = vmatprep.subr.mxu0 %v269
    %1286 = vmatpush2.msra.mxu0 %v268
    %1287 = vmatprep.subr.mxu0 %v267
    %1288 = vmatpush2.msra.mxu0 %v266
    %1289 = vmatprep.subr.mxu0 %v265
    %1290 = vmatpush2.msra.mxu0 %v264
    %1291 = vmatprep.subr.mxu0 %v263
    %1292 = vmatpush2.msra.mxu0 %v262
    %1293 = vmatprep.subr.mxu0 %v261
    %1294 = vmatpush2.msra.mxu0 %v260
    %1295 = vmatprep.subr.mxu0 %v259
    %1296 = vmatpush2.msra.mxu0 %v258
    %1297 = vmatprep.subr.mxu0 %v257
    %1298 = vmatpush2.msra.mxu0 %v256
    %1299 = vmatprep.subr.mxu0 %v255
    %1300 = vmatpush2.msra.mxu0 %v254
    %1301 = vmatprep.subr.mxu0 %v253
    %1302 = vmatpush2.msra.mxu0 %v252
    %1303 = vmatprep.subr.mxu0 %v251
    %1304 = vmatpush2.msra.mxu0 %v250
    %1305 = vmatprep.subr.mxu0 %v249
    %1306 = vmatpush2.msra.mxu0 %v248
    %1307 = vmatprep.subr.mxu0 %v247
    %1308 = vmatpush2.msra.mxu0 %v246
    %1309 = vmatprep.mubr.f32.mxu0 %v121
    %1310 = vmatmul.mubr.f32.gmra.mxu0 %v120
    %v1311 = vpop.f32.mrf.mxu0
    %v1312 = vadd.f32 %v1241, %v1311
    %v1313 = vpop.f32.mrf.mxu0
    %v1314 = vadd.f32 %v1243, %v1313
    %1315 = vdwg.mxu0
    %1316 = vmatprep.subr.mxu0 %v309
    %1317 = vmatpush1.msra.mxu0 %v308
    %1318 = vmatprep.subr.mxu0 %v307
    %1319 = vmatpush1.msra.mxu0 %v306
    %1320 = vmatprep.subr.mxu0 %v305
    %1321 = vmatpush1.msra.mxu0 %v304
    %1322 = vmatprep.subr.mxu0 %v303
    %1323 = vmatpush1.msra.mxu0 %v302
    %1324 = vmatprep.subr.mxu0 %v301
    %1325 = vmatpush1.msra.mxu0 %v300
    %1326 = vmatprep.subr.mxu0 %v299
    %1327 = vmatpush1.msra.mxu0 %v298
    %1328 = vmatprep.subr.mxu0 %v297
    %1329 = vmatpush1.msra.mxu0 %v296
    %1330 = vmatprep.subr.mxu0 %v295
    %1331 = vmatpush1.msra.mxu0 %v294
    %1332 = vmatprep.subr.mxu0 %v293
    %1333 = vmatpush1.msra.mxu0 %v292
    %1334 = vmatprep.subr.mxu0 %v291
    %1335 = vmatpush1.msra.mxu0 %v290
    %1336 = vmatprep.subr.mxu0 %v289
    %1337 = vmatpush1.msra.mxu0 %v288
    %1338 = vmatprep.subr.mxu0 %v287
    %1339 = vmatpush1.msra.mxu0 %v286
    %1340 = vmatprep.subr.mxu0 %v285
    %1341 = vmatpush1.msra.mxu0 %v284
    %1342 = vmatprep.subr.mxu0 %v283
    %1343 = vmatpush1.msra.mxu0 %v282
    %1344 = vmatprep.subr.mxu0 %v281
    %1345 = vmatpush1.msra.mxu0 %v280
    %1346 = vmatprep.subr.mxu0 %v279
    %1347 = vmatpush1.msra.mxu0 %v278
    %1348 = vmatprep.subr.mxu0 %v341
    %1349 = vmatpush2.msra.mxu0 %v340
    %1350 = vmatprep.subr.mxu0 %v339
    %1351 = vmatpush2.msra.mxu0 %v338
    %1352 = vmatprep.subr.mxu0 %v337
    %1353 = vmatpush2.msra.mxu0 %v336
    %1354 = vmatprep.subr.mxu0 %v335
    %1355 = vmatpush2.msra.mxu0 %v334
    %1356 = vmatprep.subr.mxu0 %v333
    %1357 = vmatpush2.msra.mxu0 %v332
    %1358 = vmatprep.subr.mxu0 %v331
    %1359 = vmatpush2.msra.mxu0 %v330
    %1360 = vmatprep.subr.mxu0 %v329
    %1361 = vmatpush2.msra.mxu0 %v328
    %1362 = vmatprep.subr.mxu0 %v327
    %1363 = vmatpush2.msra.mxu0 %v326
    %1364 = vmatprep.subr.mxu0 %v325
    %1365 = vmatpush2.msra.mxu0 %v324
    %1366 = vmatprep.subr.mxu0 %v323
    %1367 = vmatpush2.msra.mxu0 %v322
    %1368 = vmatprep.subr.mxu0 %v321
    %1369 = vmatpush2.msra.mxu0 %v320
    %1370 = vmatprep.subr.mxu0 %v319
    %1371 = vmatpush2.msra.mxu0 %v318
    %1372 = vmatprep.subr.mxu0 %v317
    %1373 = vmatpush2.msra.mxu0 %v316
    %1374 = vmatprep.subr.mxu0 %v315
    %1375 = vmatpush2.msra.mxu0 %v314
    %1376 = vmatprep.subr.mxu0 %v313
    %1377 = vmatpush2.msra.mxu0 %v312
    %1378 = vmatprep.subr.mxu0 %v311
    %1379 = vmatpush2.msra.mxu0 %v310
    %1380 = vmatprep.mubr.f32.mxu0 %v123
    %1381 = vmatmul.mubr.f32.gmra.mxu0 %v122
    %v1382 = vpop.f32.mrf.mxu0
    %v1383 = vadd.f32 %v1312, %v1382
    %v1384 = vpop.f32.mrf.mxu0
    %v1385 = vadd.f32 %v1314, %v1384
    %1386 = vdwg.mxu0
    %1387 = vmatprep.subr.mxu0 %v373
    %1388 = vmatpush1.msra.mxu0 %v372
    %1389 = vmatprep.subr.mxu0 %v371
    %1390 = vmatpush1.msra.mxu0 %v370
    %1391 = vmatprep.subr.mxu0 %v369
    %1392 = vmatpush1.msra.mxu0 %v368
    %1393 = vmatprep.subr.mxu0 %v367
    %1394 = vmatpush1.msra.mxu0 %v366
    %1395 = vmatprep.subr.mxu0 %v365
    %1396 = vmatpush1.msra.mxu0 %v364
    %1397 = vmatprep.subr.mxu0 %v363
    %1398 = vmatpush1.msra.mxu0 %v362
    %1399 = vmatprep.subr.mxu0 %v361
    %1400 = vmatpush1.msra.mxu0 %v360
    %1401 = vmatprep.subr.mxu0 %v359
    %1402 = vmatpush1.msra.mxu0 %v358
    %1403 = vmatprep.subr.mxu0 %v357
    %1404 = vmatpush1.msra.mxu0 %v356
    %1405 = vmatprep.subr.mxu0 %v355
    %1406 = vmatpush1.msra.mxu0 %v354
    %1407 = vmatprep.subr.mxu0 %v353
    %1408 = vmatpush1.msra.mxu0 %v352
    %1409 = vmatprep.subr.mxu0 %v351
    %1410 = vmatpush1.msra.mxu0 %v350
    %1411 = vmatprep.subr.mxu0 %v349
    %1412 = vmatpush1.msra.mxu0 %v348
    %1413 = vmatprep.subr.mxu0 %v347
    %1414 = vmatpush1.msra.mxu0 %v346
    %1415 = vmatprep.subr.mxu0 %v345
    %1416 = vmatpush1.msra.mxu0 %v344
    %1417 = vmatprep.subr.mxu0 %v343
    %1418 = vmatpush1.msra.mxu0 %v342
    %1419 = vmatprep.subr.mxu0 %v405
    %1420 = vmatpush2.msra.mxu0 %v404
    %1421 = vmatprep.subr.mxu0 %v403
    %1422 = vmatpush2.msra.mxu0 %v402
    %1423 = vmatprep.subr.mxu0 %v401
    %1424 = vmatpush2.msra.mxu0 %v400
    %1425 = vmatprep.subr.mxu0 %v399
    %1426 = vmatpush2.msra.mxu0 %v398
    %1427 = vmatprep.subr.mxu0 %v397
    %1428 = vmatpush2.msra.mxu0 %v396
    %1429 = vmatprep.subr.mxu0 %v395
    %1430 = vmatpush2.msra.mxu0 %v394
    %1431 = vmatprep.subr.mxu0 %v393
    %1432 = vmatpush2.msra.mxu0 %v392
    %1433 = vmatprep.subr.mxu0 %v391
    %1434 = vmatpush2.msra.mxu0 %v390
    %1435 = vmatprep.subr.mxu0 %v389
    %1436 = vmatpush2.msra.mxu0 %v388
    %1437 = vmatprep.subr.mxu0 %v387
    %1438 = vmatpush2.msra.mxu0 %v386
    %1439 = vmatprep.subr.mxu0 %v385
    %1440 = vmatpush2.msra.mxu0 %v384
    %1441 = vmatprep.subr.mxu0 %v383
    %1442 = vmatpush2.msra.mxu0 %v382
    %1443 = vmatprep.subr.mxu0 %v381
    %1444 = vmatpush2.msra.mxu0 %v380
    %1445 = vmatprep.subr.mxu0 %v379
    %1446 = vmatpush2.msra.mxu0 %v378
    %1447 = vmatprep.subr.mxu0 %v377
    %1448 = vmatpush2.msra.mxu0 %v376
    %1449 = vmatprep.subr.mxu0 %v375
    %1450 = vmatpush2.msra.mxu0 %v374
    %1451 = vmatprep.mubr.f32.mxu0 %v125
    %1452 = vmatmul.mubr.f32.gmra.mxu0 %v124
    %v1453 = vpop.f32.mrf.mxu0
    %v1454 = vadd.f32 %v1383, %v1453
    %v1455 = vpop.f32.mrf.mxu0
    %v1456 = vadd.f32 %v1385, %v1455
    %1457 = vdwg.mxu0
    %1458 = vmatprep.subr.mxu0 %v437
    %1459 = vmatpush1.msra.mxu0 %v436
    %1460 = vmatprep.subr.mxu0 %v435
    %1461 = vmatpush1.msra.mxu0 %v434
    %1462 = vmatprep.subr.mxu0 %v433
    %1463 = vmatpush1.msra.mxu0 %v432
    %1464 = vmatprep.subr.mxu0 %v431
    %1465 = vmatpush1.msra.mxu0 %v430
    %1466 = vmatprep.subr.mxu0 %v429
    %1467 = vmatpush1.msra.mxu0 %v428
    %1468 = vmatprep.subr.mxu0 %v427
    %1469 = vmatpush1.msra.mxu0 %v426
    %1470 = vmatprep.subr.mxu0 %v425
    %1471 = vmatpush1.msra.mxu0 %v424
    %1472 = vmatprep.subr.mxu0 %v423
    %1473 = vmatpush1.msra.mxu0 %v422
    %1474 = vmatprep.subr.mxu0 %v421
    %1475 = vmatpush1.msra.mxu0 %v420
    %1476 = vmatprep.subr.mxu0 %v419
    %1477 = vmatpush1.msra.mxu0 %v418
    %1478 = vmatprep.subr.mxu0 %v417
    %1479 = vmatpush1.msra.mxu0 %v416
    %1480 = vmatprep.subr.mxu0 %v415
    %1481 = vmatpush1.msra.mxu0 %v414
    %1482 = vmatprep.subr.mxu0 %v413
    %1483 = vmatpush1.msra.mxu0 %v412
    %1484 = vmatprep.subr.mxu0 %v411
    %1485 = vmatpush1.msra.mxu0 %v410
    %1486 = vmatprep.subr.mxu0 %v409
    %1487 = vmatpush1.msra.mxu0 %v408
    %1488 = vmatprep.subr.mxu0 %v407
    %1489 = vmatpush1.msra.mxu0 %v406
    %1490 = vmatprep.subr.mxu0 %v469
    %1491 = vmatpush2.msra.mxu0 %v468
    %1492 = vmatprep.subr.mxu0 %v467
    %1493 = vmatpush2.msra.mxu0 %v466
    %1494 = vmatprep.subr.mxu0 %v465
    %1495 = vmatpush2.msra.mxu0 %v464
    %1496 = vmatprep.subr.mxu0 %v463
    %1497 = vmatpush2.msra.mxu0 %v462
    %1498 = vmatprep.subr.mxu0 %v461
    %1499 = vmatpush2.msra.mxu0 %v460
    %1500 = vmatprep.subr.mxu0 %v459
    %1501 = vmatpush2.msra.mxu0 %v458
    %1502 = vmatprep.subr.mxu0 %v457
    %1503 = vmatpush2.msra.mxu0 %v456
    %1504 = vmatprep.subr.mxu0 %v455
    %1505 = vmatpush2.msra.mxu0 %v454
    %1506 = vmatprep.subr.mxu0 %v453
    %1507 = vmatpush2.msra.mxu0 %v452
    %1508 = vmatprep.subr.mxu0 %v451
    %1509 = vmatpush2.msra.mxu0 %v450
    %1510 = vmatprep.subr.mxu0 %v449
    %1511 = vmatpush2.msra.mxu0 %v448
    %1512 = vmatprep.subr.mxu0 %v447
    %1513 = vmatpush2.msra.mxu0 %v446
    %1514 = vmatprep.subr.mxu0 %v445
    %1515 = vmatpush2.msra.mxu0 %v444
    %1516 = vmatprep.subr.mxu0 %v443
    %1517 = vmatpush2.msra.mxu0 %v442
    %1518 = vmatprep.subr.mxu0 %v441
    %1519 = vmatpush2.msra.mxu0 %v440
    %1520 = vmatprep.subr.mxu0 %v439
    %1521 = vmatpush2.msra.mxu0 %v438
    %1522 = vmatprep.mubr.f32.mxu0 %v127
    %1523 = vmatmul.mubr.f32.gmra.mxu0 %v126
    %v1524 = vpop.f32.mrf.mxu0
    %v1525 = vadd.f32 %v1454, %v1524
    %v1526 = vpop.f32.mrf.mxu0
    %v1527 = vadd.f32 %v1456, %v1526
    %1528 = vdwg.mxu0
    %1529 = vmatprep.subr.mxu0 %v501
    %1530 = vmatpush1.msra.mxu0 %v500
    %1531 = vmatprep.subr.mxu0 %v499
    %1532 = vmatpush1.msra.mxu0 %v498
    %1533 = vmatprep.subr.mxu0 %v497
    %1534 = vmatpush1.msra.mxu0 %v496
    %1535 = vmatprep.subr.mxu0 %v495
    %1536 = vmatpush1.msra.mxu0 %v494
    %1537 = vmatprep.subr.mxu0 %v493
    %1538 = vmatpush1.msra.mxu0 %v492
    %1539 = vmatprep.subr.mxu0 %v491
    %1540 = vmatpush1.msra.mxu0 %v490
    %1541 = vmatprep.subr.mxu0 %v489
    %1542 = vmatpush1.msra.mxu0 %v488
    %1543 = vmatprep.subr.mxu0 %v487
    %1544 = vmatpush1.msra.mxu0 %v486
    %1545 = vmatprep.subr.mxu0 %v485
    %1546 = vmatpush1.msra.mxu0 %v484
    %1547 = vmatprep.subr.mxu0 %v483
    %1548 = vmatpush1.msra.mxu0 %v482
    %1549 = vmatprep.subr.mxu0 %v481
    %1550 = vmatpush1.msra.mxu0 %v480
    %1551 = vmatprep.subr.mxu0 %v479
    %1552 = vmatpush1.msra.mxu0 %v478
    %1553 = vmatprep.subr.mxu0 %v477
    %1554 = vmatpush1.msra.mxu0 %v476
    %1555 = vmatprep.subr.mxu0 %v475
    %1556 = vmatpush1.msra.mxu0 %v474
    %1557 = vmatprep.subr.mxu0 %v473
    %1558 = vmatpush1.msra.mxu0 %v472
    %1559 = vmatprep.subr.mxu0 %v471
    %1560 = vmatpush1.msra.mxu0 %v470
    %1561 = vmatprep.subr.mxu0 %v533
    %1562 = vmatpush2.msra.mxu0 %v532
    %1563 = vmatprep.subr.mxu0 %v531
    %1564 = vmatpush2.msra.mxu0 %v530
    %1565 = vmatprep.subr.mxu0 %v529
    %1566 = vmatpush2.msra.mxu0 %v528
    %1567 = vmatprep.subr.mxu0 %v527
    %1568 = vmatpush2.msra.mxu0 %v526
    %1569 = vmatprep.subr.mxu0 %v525
    %1570 = vmatpush2.msra.mxu0 %v524
    %1571 = vmatprep.subr.mxu0 %v523
    %1572 = vmatpush2.msra.mxu0 %v522
    %1573 = vmatprep.subr.mxu0 %v521
    %1574 = vmatpush2.msra.mxu0 %v520
    %1575 = vmatprep.subr.mxu0 %v519
    %1576 = vmatpush2.msra.mxu0 %v518
    %1577 = vmatprep.subr.mxu0 %v517
    %1578 = vmatpush2.msra.mxu0 %v516
    %1579 = vmatprep.subr.mxu0 %v515
    %1580 = vmatpush2.msra.mxu0 %v514
    %1581 = vmatprep.subr.mxu0 %v513
    %1582 = vmatpush2.msra.mxu0 %v512
    %1583 = vmatprep.subr.mxu0 %v511
    %1584 = vmatpush2.msra.mxu0 %v510
    %1585 = vmatprep.subr.mxu0 %v509
    %1586 = vmatpush2.msra.mxu0 %v508
    %1587 = vmatprep.subr.mxu0 %v507
    %1588 = vmatpush2.msra.mxu0 %v506
    %1589 = vmatprep.subr.mxu0 %v505
    %1590 = vmatpush2.msra.mxu0 %v504
    %1591 = vmatprep.subr.mxu0 %v503
    %1592 = vmatpush2.msra.mxu0 %v502
    %1593 = vmatprep.mubr.f32.mxu0 %v129
    %1594 = vmatmul.mubr.f32.gmra.mxu0 %v128
    %v1595 = vpop.f32.mrf.mxu0
    %v1596 = vadd.f32 %v1525, %v1595
    %v1597 = vpop.f32.mrf.mxu0
    %v1598 = vadd.f32 %v1527, %v1597
    %1599 = vdwg.mxu0
    %1600 = vmatprep.subr.mxu0 %v565
    %1601 = vmatpush1.msra.mxu0 %v564
    %1602 = vmatprep.subr.mxu0 %v563
    %1603 = vmatpush1.msra.mxu0 %v562
    %1604 = vmatprep.subr.mxu0 %v561
    %1605 = vmatpush1.msra.mxu0 %v560
    %1606 = vmatprep.subr.mxu0 %v559
    %1607 = vmatpush1.msra.mxu0 %v558
    %1608 = vmatprep.subr.mxu0 %v557
    %1609 = vmatpush1.msra.mxu0 %v556
    %1610 = vmatprep.subr.mxu0 %v555
    %1611 = vmatpush1.msra.mxu0 %v554
    %1612 = vmatprep.subr.mxu0 %v553
    %1613 = vmatpush1.msra.mxu0 %v552
    %1614 = vmatprep.subr.mxu0 %v551
    %1615 = vmatpush1.msra.mxu0 %v550
    %1616 = vmatprep.subr.mxu0 %v549
    %1617 = vmatpush1.msra.mxu0 %v548
    %1618 = vmatprep.subr.mxu0 %v547
    %1619 = vmatpush1.msra.mxu0 %v546
    %1620 = vmatprep.subr.mxu0 %v545
    %1621 = vmatpush1.msra.mxu0 %v544
    %1622 = vmatprep.subr.mxu0 %v543
    %1623 = vmatpush1.msra.mxu0 %v542
    %1624 = vmatprep.subr.mxu0 %v541
    %1625 = vmatpush1.msra.mxu0 %v540
    %1626 = vmatprep.subr.mxu0 %v539
    %1627 = vmatpush1.msra.mxu0 %v538
    %1628 = vmatprep.subr.mxu0 %v537
    %1629 = vmatpush1.msra.mxu0 %v536
    %1630 = vmatprep.subr.mxu0 %v535
    %1631 = vmatpush1.msra.mxu0 %v534
    %1632 = vmatprep.subr.mxu0 %v597
    %1633 = vmatpush2.msra.mxu0 %v596
    %1634 = vmatprep.subr.mxu0 %v595
    %1635 = vmatpush2.msra.mxu0 %v594
    %1636 = vmatprep.subr.mxu0 %v593
    %1637 = vmatpush2.msra.mxu0 %v592
    %1638 = vmatprep.subr.mxu0 %v591
    %1639 = vmatpush2.msra.mxu0 %v590
    %1640 = vmatprep.subr.mxu0 %v589
    %1641 = vmatpush2.msra.mxu0 %v588
    %1642 = vmatprep.subr.mxu0 %v587
    %1643 = vmatpush2.msra.mxu0 %v586
    %1644 = vmatprep.subr.mxu0 %v585
    %1645 = vmatpush2.msra.mxu0 %v584
    %1646 = vmatprep.subr.mxu0 %v583
    %1647 = vmatpush2.msra.mxu0 %v582
    %1648 = vmatprep.subr.mxu0 %v581
    %1649 = vmatpush2.msra.mxu0 %v580
    %1650 = vmatprep.subr.mxu0 %v579
    %1651 = vmatpush2.msra.mxu0 %v578
    %1652 = vmatprep.subr.mxu0 %v577
    %1653 = vmatpush2.msra.mxu0 %v576
    %1654 = vmatprep.subr.mxu0 %v575
    %1655 = vmatpush2.msra.mxu0 %v574
    %1656 = vmatprep.subr.mxu0 %v573
    %1657 = vmatpush2.msra.mxu0 %v572
    %1658 = vmatprep.subr.mxu0 %v571
    %1659 = vmatpush2.msra.mxu0 %v570
    %1660 = vmatprep.subr.mxu0 %v569
    %1661 = vmatpush2.msra.mxu0 %v568
    %1662 = vmatprep.subr.mxu0 %v567
    %1663 = vmatpush2.msra.mxu0 %v566
    %1664 = vmatprep.mubr.f32.mxu0 %v131
    %1665 = vmatmul.mubr.f32.gmra.mxu0 %v130
    %v1666 = vpop.f32.mrf.mxu0
    %v1667 = vadd.f32 %v1596, %v1666
    %v1668 = vpop.f32.mrf.mxu0
    %v1669 = vadd.f32 %v1598, %v1668
    %1670 = vdwg.mxu0
    %1671 = vmatprep.subr.mxu0 %v629
    %1672 = vmatpush1.msra.mxu0 %v628
    %1673 = vmatprep.subr.mxu0 %v627
    %1674 = vmatpush1.msra.mxu0 %v626
    %1675 = vmatprep.subr.mxu0 %v625
    %1676 = vmatpush1.msra.mxu0 %v624
    %1677 = vmatprep.subr.mxu0 %v623
    %1678 = vmatpush1.msra.mxu0 %v622
    %1679 = vmatprep.subr.mxu0 %v621
    %1680 = vmatpush1.msra.mxu0 %v620
    %1681 = vmatprep.subr.mxu0 %v619
    %1682 = vmatpush1.msra.mxu0 %v618
    %1683 = vmatprep.subr.mxu0 %v617
    %1684 = vmatpush1.msra.mxu0 %v616
    %1685 = vmatprep.subr.mxu0 %v615
    %1686 = vmatpush1.msra.mxu0 %v614
    %1687 = vmatprep.subr.mxu0 %v613
    %1688 = vmatpush1.msra.mxu0 %v612
    %1689 = vmatprep.subr.mxu0 %v611
    %1690 = vmatpush1.msra.mxu0 %v610
    %1691 = vmatprep.subr.mxu0 %v609
    %1692 = vmatpush1.msra.mxu0 %v608
    %1693 = vmatprep.subr.mxu0 %v607
    %1694 = vmatpush1.msra.mxu0 %v606
    %1695 = vmatprep.subr.mxu0 %v605
    %1696 = vmatpush1.msra.mxu0 %v604
    %1697 = vmatprep.subr.mxu0 %v603
    %1698 = vmatpush1.msra.mxu0 %v602
    %1699 = vmatprep.subr.mxu0 %v601
    %1700 = vmatpush1.msra.mxu0 %v600
    %1701 = vmatprep.subr.mxu0 %v599
    %1702 = vmatpush1.msra.mxu0 %v598
    %1703 = vmatprep.subr.mxu0 %v661
    %1704 = vmatpush2.msra.mxu0 %v660
    %1705 = vmatprep.subr.mxu0 %v659
    %1706 = vmatpush2.msra.mxu0 %v658
    %1707 = vmatprep.subr.mxu0 %v657
    %1708 = vmatpush2.msra.mxu0 %v656
    %1709 = vmatprep.subr.mxu0 %v655
    %1710 = vmatpush2.msra.mxu0 %v654
    %1711 = vmatprep.subr.mxu0 %v653
    %1712 = vmatpush2.msra.mxu0 %v652
    %1713 = vmatprep.subr.mxu0 %v651
    %1714 = vmatpush2.msra.mxu0 %v650
    %1715 = vmatprep.subr.mxu0 %v649
    %1716 = vmatpush2.msra.mxu0 %v648
    %1717 = vmatprep.subr.mxu0 %v647
    %1718 = vmatpush2.msra.mxu0 %v646
    %1719 = vmatprep.subr.mxu0 %v645
    %1720 = vmatpush2.msra.mxu0 %v644
    %1721 = vmatprep.subr.mxu0 %v643
    %1722 = vmatpush2.msra.mxu0 %v642
    %1723 = vmatprep.subr.mxu0 %v641
    %1724 = vmatpush2.msra.mxu0 %v640
    %1725 = vmatprep.subr.mxu0 %v639
    %1726 = vmatpush2.msra.mxu0 %v638
    %1727 = vmatprep.subr.mxu0 %v637
    %1728 = vmatpush2.msra.mxu0 %v636
    %1729 = vmatprep.subr.mxu0 %v635
    %1730 = vmatpush2.msra.mxu0 %v634
    %1731 = vmatprep.subr.mxu0 %v633
    %1732 = vmatpush2.msra.mxu0 %v632
    %1733 = vmatprep.subr.mxu0 %v631
    %1734 = vmatpush2.msra.mxu0 %v630
    %1735 = vmatprep.mubr.f32.mxu0 %v133
    %1736 = vmatmul.mubr.f32.gmra.mxu0 %v132
    %v1737 = vpop.f32.mrf.mxu0
    %v1738 = vadd.f32 %v1667, %v1737
    %v1739 = vpop.f32.mrf.mxu0
    %v1740 = vadd.f32 %v1669, %v1739
    %1741 = vdwg.mxu0
    %1742 = vmatprep.subr.mxu0 %v693
    %1743 = vmatpush1.msra.mxu0 %v692
    %1744 = vmatprep.subr.mxu0 %v691
    %1745 = vmatpush1.msra.mxu0 %v690
    %1746 = vmatprep.subr.mxu0 %v689
    %1747 = vmatpush1.msra.mxu0 %v688
    %1748 = vmatprep.subr.mxu0 %v687
    %1749 = vmatpush1.msra.mxu0 %v686
    %1750 = vmatprep.subr.mxu0 %v685
    %1751 = vmatpush1.msra.mxu0 %v684
    %1752 = vmatprep.subr.mxu0 %v683
    %1753 = vmatpush1.msra.mxu0 %v682
    %1754 = vmatprep.subr.mxu0 %v681
    %1755 = vmatpush1.msra.mxu0 %v680
    %1756 = vmatprep.subr.mxu0 %v679
    %1757 = vmatpush1.msra.mxu0 %v678
    %1758 = vmatprep.subr.mxu0 %v677
    %1759 = vmatpush1.msra.mxu0 %v676
    %1760 = vmatprep.subr.mxu0 %v675
    %1761 = vmatpush1.msra.mxu0 %v674
    %1762 = vmatprep.subr.mxu0 %v673
    %1763 = vmatpush1.msra.mxu0 %v672
    %1764 = vmatprep.subr.mxu0 %v671
    %1765 = vmatpush1.msra.mxu0 %v670
    %1766 = vmatprep.subr.mxu0 %v669
    %1767 = vmatpush1.msra.mxu0 %v668
    %1768 = vmatprep.subr.mxu0 %v667
    %1769 = vmatpush1.msra.mxu0 %v666
    %1770 = vmatprep.subr.mxu0 %v665
    %1771 = vmatpush1.msra.mxu0 %v664
    %1772 = vmatprep.subr.mxu0 %v663
    %1773 = vmatpush1.msra.mxu0 %v662
    %1774 = vmatprep.subr.mxu0 %v725
    %1775 = vmatpush2.msra.mxu0 %v724
    %1776 = vmatprep.subr.mxu0 %v723
    %1777 = vmatpush2.msra.mxu0 %v722
    %1778 = vmatprep.subr.mxu0 %v721
    %1779 = vmatpush2.msra.mxu0 %v720
    %1780 = vmatprep.subr.mxu0 %v719
    %1781 = vmatpush2.msra.mxu0 %v718
    %1782 = vmatprep.subr.mxu0 %v717
    %1783 = vmatpush2.msra.mxu0 %v716
    %1784 = vmatprep.subr.mxu0 %v715
    %1785 = vmatpush2.msra.mxu0 %v714
    %1786 = vmatprep.subr.mxu0 %v713
    %1787 = vmatpush2.msra.mxu0 %v712
    %1788 = vmatprep.subr.mxu0 %v711
    %1789 = vmatpush2.msra.mxu0 %v710
    %1790 = vmatprep.subr.mxu0 %v709
    %1791 = vmatpush2.msra.mxu0 %v708
    %1792 = vmatprep.subr.mxu0 %v707
    %1793 = vmatpush2.msra.mxu0 %v706
    %1794 = vmatprep.subr.mxu0 %v705
    %1795 = vmatpush2.msra.mxu0 %v704
    %1796 = vmatprep.subr.mxu0 %v703
    %1797 = vmatpush2.msra.mxu0 %v702
    %1798 = vmatprep.subr.mxu0 %v701
    %1799 = vmatpush2.msra.mxu0 %v700
    %1800 = vmatprep.subr.mxu0 %v699
    %1801 = vmatpush2.msra.mxu0 %v698
    %1802 = vmatprep.subr.mxu0 %v697
    %1803 = vmatpush2.msra.mxu0 %v696
    %1804 = vmatprep.subr.mxu0 %v695
    %1805 = vmatpush2.msra.mxu0 %v694
    %1806 = vmatprep.mubr.f32.mxu0 %v135
    %1807 = vmatmul.mubr.f32.gmra.mxu0 %v134
    %v1808 = vpop.f32.mrf.mxu0
    %v1809 = vadd.f32 %v1738, %v1808
    %v1810 = vpop.f32.mrf.mxu0
    %v1811 = vadd.f32 %v1740, %v1810
    %1812 = vdwg.mxu0
    %1813 = vmatprep.subr.mxu0 %v757
    %1814 = vmatpush1.msra.mxu0 %v756
    %1815 = vmatprep.subr.mxu0 %v755
    %1816 = vmatpush1.msra.mxu0 %v754
    %1817 = vmatprep.subr.mxu0 %v753
    %1818 = vmatpush1.msra.mxu0 %v752
    %1819 = vmatprep.subr.mxu0 %v751
    %1820 = vmatpush1.msra.mxu0 %v750
    %1821 = vmatprep.subr.mxu0 %v749
    %1822 = vmatpush1.msra.mxu0 %v748
    %1823 = vmatprep.subr.mxu0 %v747
    %1824 = vmatpush1.msra.mxu0 %v746
    %1825 = vmatprep.subr.mxu0 %v745
    %1826 = vmatpush1.msra.mxu0 %v744
    %1827 = vmatprep.subr.mxu0 %v743
    %1828 = vmatpush1.msra.mxu0 %v742
    %1829 = vmatprep.subr.mxu0 %v741
    %1830 = vmatpush1.msra.mxu0 %v740
    %1831 = vmatprep.subr.mxu0 %v739
    %1832 = vmatpush1.msra.mxu0 %v738
    %1833 = vmatprep.subr.mxu0 %v737
    %1834 = vmatpush1.msra.mxu0 %v736
    %1835 = vmatprep.subr.mxu0 %v735
    %1836 = vmatpush1.msra.mxu0 %v734
    %1837 = vmatprep.subr.mxu0 %v733
    %1838 = vmatpush1.msra.mxu0 %v732
    %1839 = vmatprep.subr.mxu0 %v731
    %1840 = vmatpush1.msra.mxu0 %v730
    %1841 = vmatprep.subr.mxu0 %v729
    %1842 = vmatpush1.msra.mxu0 %v728
    %1843 = vmatprep.subr.mxu0 %v727
    %1844 = vmatpush1.msra.mxu0 %v726
    %1845 = vmatprep.subr.mxu0 %v789
    %1846 = vmatpush2.msra.mxu0 %v788
    %1847 = vmatprep.subr.mxu0 %v787
    %1848 = vmatpush2.msra.mxu0 %v786
    %1849 = vmatprep.subr.mxu0 %v785
    %1850 = vmatpush2.msra.mxu0 %v784
    %1851 = vmatprep.subr.mxu0 %v783
    %1852 = vmatpush2.msra.mxu0 %v782
    %1853 = vmatprep.subr.mxu0 %v781
    %1854 = vmatpush2.msra.mxu0 %v780
    %1855 = vmatprep.subr.mxu0 %v779
    %1856 = vmatpush2.msra.mxu0 %v778
    %1857 = vmatprep.subr.mxu0 %v777
    %1858 = vmatpush2.msra.mxu0 %v776
    %1859 = vmatprep.subr.mxu0 %v775
    %1860 = vmatpush2.msra.mxu0 %v774
    %1861 = vmatprep.subr.mxu0 %v773
    %1862 = vmatpush2.msra.mxu0 %v772
    %1863 = vmatprep.subr.mxu0 %v771
    %1864 = vmatpush2.msra.mxu0 %v770
    %1865 = vmatprep.subr.mxu0 %v769
    %1866 = vmatpush2.msra.mxu0 %v768
    %1867 = vmatprep.subr.mxu0 %v767
    %1868 = vmatpush2.msra.mxu0 %v766
    %1869 = vmatprep.subr.mxu0 %v765
    %1870 = vmatpush2.msra.mxu0 %v764
    %1871 = vmatprep.subr.mxu0 %v763
    %1872 = vmatpush2.msra.mxu0 %v762
    %1873 = vmatprep.subr.mxu0 %v761
    %1874 = vmatpush2.msra.mxu0 %v760
    %1875 = vmatprep.subr.mxu0 %v759
    %1876 = vmatpush2.msra.mxu0 %v758
    %1877 = vmatprep.mubr.f32.mxu0 %v137
    %1878 = vmatmul.mubr.f32.gmra.mxu0 %v136
    %v1879 = vpop.f32.mrf.mxu0
    %v1880 = vadd.f32 %v1809, %v1879
    %v1881 = vpop.f32.mrf.mxu0
    %v1882 = vadd.f32 %v1811, %v1881
    %1883 = vdwg.mxu0
    %1884 = vmatprep.subr.mxu0 %v821
    %1885 = vmatpush1.msra.mxu0 %v820
    %1886 = vmatprep.subr.mxu0 %v819
    %1887 = vmatpush1.msra.mxu0 %v818
    %1888 = vmatprep.subr.mxu0 %v817
    %1889 = vmatpush1.msra.mxu0 %v816
    %1890 = vmatprep.subr.mxu0 %v815
    %1891 = vmatpush1.msra.mxu0 %v814
    %1892 = vmatprep.subr.mxu0 %v813
    %1893 = vmatpush1.msra.mxu0 %v812
    %1894 = vmatprep.subr.mxu0 %v811
    %1895 = vmatpush1.msra.mxu0 %v810
    %1896 = vmatprep.subr.mxu0 %v809
    %1897 = vmatpush1.msra.mxu0 %v808
    %1898 = vmatprep.subr.mxu0 %v807
    %1899 = vmatpush1.msra.mxu0 %v806
    %1900 = vmatprep.subr.mxu0 %v805
    %1901 = vmatpush1.msra.mxu0 %v804
    %1902 = vmatprep.subr.mxu0 %v803
    %1903 = vmatpush1.msra.mxu0 %v802
    %1904 = vmatprep.subr.mxu0 %v801
    %1905 = vmatpush1.msra.mxu0 %v800
    %1906 = vmatprep.subr.mxu0 %v799
    %1907 = vmatpush1.msra.mxu0 %v798
    %1908 = vmatprep.subr.mxu0 %v797
    %1909 = vmatpush1.msra.mxu0 %v796
    %1910 = vmatprep.subr.mxu0 %v795
    %1911 = vmatpush1.msra.mxu0 %v794
    %1912 = vmatprep.subr.mxu0 %v793
    %1913 = vmatpush1.msra.mxu0 %v792
    %1914 = vmatprep.subr.mxu0 %v791
    %1915 = vmatpush1.msra.mxu0 %v790
    %1916 = vmatprep.subr.mxu0 %v853
    %1917 = vmatpush2.msra.mxu0 %v852
    %1918 = vmatprep.subr.mxu0 %v851
    %1919 = vmatpush2.msra.mxu0 %v850
    %1920 = vmatprep.subr.mxu0 %v849
    %1921 = vmatpush2.msra.mxu0 %v848
    %1922 = vmatprep.subr.mxu0 %v847
    %1923 = vmatpush2.msra.mxu0 %v846
    %1924 = vmatprep.subr.mxu0 %v845
    %1925 = vmatpush2.msra.mxu0 %v844
    %1926 = vmatprep.subr.mxu0 %v843
    %1927 = vmatpush2.msra.mxu0 %v842
    %1928 = vmatprep.subr.mxu0 %v841
    %1929 = vmatpush2.msra.mxu0 %v840
    %1930 = vmatprep.subr.mxu0 %v839
    %1931 = vmatpush2.msra.mxu0 %v838
    %1932 = vmatprep.subr.mxu0 %v837
    %1933 = vmatpush2.msra.mxu0 %v836
    %1934 = vmatprep.subr.mxu0 %v835
    %1935 = vmatpush2.msra.mxu0 %v834
    %1936 = vmatprep.subr.mxu0 %v833
    %1937 = vmatpush2.msra.mxu0 %v832
    %1938 = vmatprep.subr.mxu0 %v831
    %1939 = vmatpush2.msra.mxu0 %v830
    %1940 = vmatprep.subr.mxu0 %v829
    %1941 = vmatpush2.msra.mxu0 %v828
    %1942 = vmatprep.subr.mxu0 %v827
    %1943 = vmatpush2.msra.mxu0 %v826
    %1944 = vmatprep.subr.mxu0 %v825
    %1945 = vmatpush2.msra.mxu0 %v824
    %1946 = vmatprep.subr.mxu0 %v823
    %1947 = vmatpush2.msra.mxu0 %v822
    %1948 = vmatprep.mubr.f32.mxu0 %v139
    %1949 = vmatmul.mubr.f32.gmra.mxu0 %v138
    %v1950 = vpop.f32.mrf.mxu0
    %v1951 = vadd.f32 %v1880, %v1950
    %v1952 = vpop.f32.mrf.mxu0
    %v1953 = vadd.f32 %v1882, %v1952
    %1954 = vdwg.mxu0
    %1955 = vmatprep.subr.mxu0 %v885
    %1956 = vmatpush1.msra.mxu0 %v884
    %1957 = vmatprep.subr.mxu0 %v883
    %1958 = vmatpush1.msra.mxu0 %v882
    %1959 = vmatprep.subr.mxu0 %v881
    %1960 = vmatpush1.msra.mxu0 %v880
    %1961 = vmatprep.subr.mxu0 %v879
    %1962 = vmatpush1.msra.mxu0 %v878
    %1963 = vmatprep.subr.mxu0 %v877
    %1964 = vmatpush1.msra.mxu0 %v876
    %1965 = vmatprep.subr.mxu0 %v875
    %1966 = vmatpush1.msra.mxu0 %v874
    %1967 = vmatprep.subr.mxu0 %v873
    %1968 = vmatpush1.msra.mxu0 %v872
    %1969 = vmatprep.subr.mxu0 %v871
    %1970 = vmatpush1.msra.mxu0 %v870
    %1971 = vmatprep.subr.mxu0 %v869
    %1972 = vmatpush1.msra.mxu0 %v868
    %1973 = vmatprep.subr.mxu0 %v867
    %1974 = vmatpush1.msra.mxu0 %v866
    %1975 = vmatprep.subr.mxu0 %v865
    %1976 = vmatpush1.msra.mxu0 %v864
    %1977 = vmatprep.subr.mxu0 %v863
    %1978 = vmatpush1.msra.mxu0 %v862
    %1979 = vmatprep.subr.mxu0 %v861
    %1980 = vmatpush1.msra.mxu0 %v860
    %1981 = vmatprep.subr.mxu0 %v859
    %1982 = vmatpush1.msra.mxu0 %v858
    %1983 = vmatprep.subr.mxu0 %v857
    %1984 = vmatpush1.msra.mxu0 %v856
    %1985 = vmatprep.subr.mxu0 %v855
    %1986 = vmatpush1.msra.mxu0 %v854
    %1987 = vmatprep.subr.mxu0 %v917
    %1988 = vmatpush2.msra.mxu0 %v916
    %1989 = vmatprep.subr.mxu0 %v915
    %1990 = vmatpush2.msra.mxu0 %v914
    %1991 = vmatprep.subr.mxu0 %v913
    %1992 = vmatpush2.msra.mxu0 %v912
    %1993 = vmatprep.subr.mxu0 %v911
    %1994 = vmatpush2.msra.mxu0 %v910
    %1995 = vmatprep.subr.mxu0 %v909
    %1996 = vmatpush2.msra.mxu0 %v908
    %1997 = vmatprep.subr.mxu0 %v907
    %1998 = vmatpush2.msra.mxu0 %v906
    %1999 = vmatprep.subr.mxu0 %v905
    %2000 = vmatpush2.msra.mxu0 %v904
    %2001 = vmatprep.subr.mxu0 %v903
    %2002 = vmatpush2.msra.mxu0 %v902
    %2003 = vmatprep.subr.mxu0 %v901
    %2004 = vmatpush2.msra.mxu0 %v900
    %2005 = vmatprep.subr.mxu0 %v899
    %2006 = vmatpush2.msra.mxu0 %v898
    %2007 = vmatprep.subr.mxu0 %v897
    %2008 = vmatpush2.msra.mxu0 %v896
    %2009 = vmatprep.subr.mxu0 %v895
    %2010 = vmatpush2.msra.mxu0 %v894
    %2011 = vmatprep.subr.mxu0 %v893
    %2012 = vmatpush2.msra.mxu0 %v892
    %2013 = vmatprep.subr.mxu0 %v891
    %2014 = vmatpush2.msra.mxu0 %v890
    %2015 = vmatprep.subr.mxu0 %v889
    %2016 = vmatpush2.msra.mxu0 %v888
    %2017 = vmatprep.subr.mxu0 %v887
    %2018 = vmatpush2.msra.mxu0 %v886
    %2019 = vmatprep.mubr.f32.mxu0 %v141
    %2020 = vmatmul.mubr.f32.gmra.mxu0 %v140
    %v2021 = vpop.f32.mrf.mxu0
    %v2022 = vadd.f32 %v1951, %v2021
    %v2023 = vpop.f32.mrf.mxu0
    %v2024 = vadd.f32 %v1953, %v2023
    %2025 = vdwg.mxu0
    %2026 = vmatprep.subr.mxu0 %v949
    %2027 = vmatpush1.msra.mxu0 %v948
    %2028 = vmatprep.subr.mxu0 %v947
    %2029 = vmatpush1.msra.mxu0 %v946
    %2030 = vmatprep.subr.mxu0 %v945
    %2031 = vmatpush1.msra.mxu0 %v944
    %2032 = vmatprep.subr.mxu0 %v943
    %2033 = vmatpush1.msra.mxu0 %v942
    %2034 = vmatprep.subr.mxu0 %v941
    %2035 = vmatpush1.msra.mxu0 %v940
    %2036 = vmatprep.subr.mxu0 %v939
    %2037 = vmatpush1.msra.mxu0 %v938
    %2038 = vmatprep.subr.mxu0 %v937
    %2039 = vmatpush1.msra.mxu0 %v936
    %2040 = vmatprep.subr.mxu0 %v935
    %2041 = vmatpush1.msra.mxu0 %v934
    %2042 = vmatprep.subr.mxu0 %v933
    %2043 = vmatpush1.msra.mxu0 %v932
    %2044 = vmatprep.subr.mxu0 %v931
    %2045 = vmatpush1.msra.mxu0 %v930
    %2046 = vmatprep.subr.mxu0 %v929
    %2047 = vmatpush1.msra.mxu0 %v928
    %2048 = vmatprep.subr.mxu0 %v927
    %2049 = vmatpush1.msra.mxu0 %v926
    %2050 = vmatprep.subr.mxu0 %v925
    %2051 = vmatpush1.msra.mxu0 %v924
    %2052 = vmatprep.subr.mxu0 %v923
    %2053 = vmatpush1.msra.mxu0 %v922
    %2054 = vmatprep.subr.mxu0 %v921
    %2055 = vmatpush1.msra.mxu0 %v920
    %2056 = vmatprep.subr.mxu0 %v919
    %2057 = vmatpush1.msra.mxu0 %v918
    %2058 = vmatprep.subr.mxu0 %v981
    %2059 = vmatpush2.msra.mxu0 %v980
    %2060 = vmatprep.subr.mxu0 %v979
    %2061 = vmatpush2.msra.mxu0 %v978
    %2062 = vmatprep.subr.mxu0 %v977
    %2063 = vmatpush2.msra.mxu0 %v976
    %2064 = vmatprep.subr.mxu0 %v975
    %2065 = vmatpush2.msra.mxu0 %v974
    %2066 = vmatprep.subr.mxu0 %v973
    %2067 = vmatpush2.msra.mxu0 %v972
    %2068 = vmatprep.subr.mxu0 %v971
    %2069 = vmatpush2.msra.mxu0 %v970
    %2070 = vmatprep.subr.mxu0 %v969
    %2071 = vmatpush2.msra.mxu0 %v968
    %2072 = vmatprep.subr.mxu0 %v967
    %2073 = vmatpush2.msra.mxu0 %v966
    %2074 = vmatprep.subr.mxu0 %v965
    %2075 = vmatpush2.msra.mxu0 %v964
    %2076 = vmatprep.subr.mxu0 %v963
    %2077 = vmatpush2.msra.mxu0 %v962
    %2078 = vmatprep.subr.mxu0 %v961
    %2079 = vmatpush2.msra.mxu0 %v960
    %2080 = vmatprep.subr.mxu0 %v959
    %2081 = vmatpush2.msra.mxu0 %v958
    %2082 = vmatprep.subr.mxu0 %v957
    %2083 = vmatpush2.msra.mxu0 %v956
    %2084 = vmatprep.subr.mxu0 %v955
    %2085 = vmatpush2.msra.mxu0 %v954
    %2086 = vmatprep.subr.mxu0 %v953
    %2087 = vmatpush2.msra.mxu0 %v952
    %2088 = vmatprep.subr.mxu0 %v951
    %2089 = vmatpush2.msra.mxu0 %v950
    %2090 = vmatprep.mubr.f32.mxu0 %v143
    %2091 = vmatmul.mubr.f32.gmra.mxu0 %v142
    %v2092 = vpop.f32.mrf.mxu0
    %v2093 = vadd.f32 %v2022, %v2092
    %v2094 = vpop.f32.mrf.mxu0
    %v2095 = vadd.f32 %v2024, %v2094
    %2096 = vdwg.mxu0
    %2097 = vmatprep.subr.mxu0 %v1013
    %2098 = vmatpush1.msra.mxu0 %v1012
    %2099 = vmatprep.subr.mxu0 %v1011
    %2100 = vmatpush1.msra.mxu0 %v1010
    %2101 = vmatprep.subr.mxu0 %v1009
    %2102 = vmatpush1.msra.mxu0 %v1008
    %2103 = vmatprep.subr.mxu0 %v1007
    %2104 = vmatpush1.msra.mxu0 %v1006
    %2105 = vmatprep.subr.mxu0 %v1005
    %2106 = vmatpush1.msra.mxu0 %v1004
    %2107 = vmatprep.subr.mxu0 %v1003
    %2108 = vmatpush1.msra.mxu0 %v1002
    %2109 = vmatprep.subr.mxu0 %v1001
    %2110 = vmatpush1.msra.mxu0 %v1000
    %2111 = vmatprep.subr.mxu0 %v999
    %2112 = vmatpush1.msra.mxu0 %v998
    %2113 = vmatprep.subr.mxu0 %v997
    %2114 = vmatpush1.msra.mxu0 %v996
    %2115 = vmatprep.subr.mxu0 %v995
    %2116 = vmatpush1.msra.mxu0 %v994
    %2117 = vmatprep.subr.mxu0 %v993
    %2118 = vmatpush1.msra.mxu0 %v992
    %2119 = vmatprep.subr.mxu0 %v991
    %2120 = vmatpush1.msra.mxu0 %v990
    %2121 = vmatprep.subr.mxu0 %v989
    %2122 = vmatpush1.msra.mxu0 %v988
    %2123 = vmatprep.subr.mxu0 %v987
    %2124 = vmatpush1.msra.mxu0 %v986
    %2125 = vmatprep.subr.mxu0 %v985
    %2126 = vmatpush1.msra.mxu0 %v984
    %2127 = vmatprep.subr.mxu0 %v983
    %2128 = vmatpush1.msra.mxu0 %v982
    %2129 = vmatprep.subr.mxu0 %v1045
    %2130 = vmatpush2.msra.mxu0 %v1044
    %2131 = vmatprep.subr.mxu0 %v1043
    %2132 = vmatpush2.msra.mxu0 %v1042
    %2133 = vmatprep.subr.mxu0 %v1041
    %2134 = vmatpush2.msra.mxu0 %v1040
    %2135 = vmatprep.subr.mxu0 %v1039
    %2136 = vmatpush2.msra.mxu0 %v1038
    %2137 = vmatprep.subr.mxu0 %v1037
    %2138 = vmatpush2.msra.mxu0 %v1036
    %2139 = vmatprep.subr.mxu0 %v1035
    %2140 = vmatpush2.msra.mxu0 %v1034
    %2141 = vmatprep.subr.mxu0 %v1033
    %2142 = vmatpush2.msra.mxu0 %v1032
    %2143 = vmatprep.subr.mxu0 %v1031
    %2144 = vmatpush2.msra.mxu0 %v1030
    %2145 = vmatprep.subr.mxu0 %v1029
    %2146 = vmatpush2.msra.mxu0 %v1028
    %2147 = vmatprep.subr.mxu0 %v1027
    %2148 = vmatpush2.msra.mxu0 %v1026
    %2149 = vmatprep.subr.mxu0 %v1025
    %2150 = vmatpush2.msra.mxu0 %v1024
    %2151 = vmatprep.subr.mxu0 %v1023
    %2152 = vmatpush2.msra.mxu0 %v1022
    %2153 = vmatprep.subr.mxu0 %v1021
    %2154 = vmatpush2.msra.mxu0 %v1020
    %2155 = vmatprep.subr.mxu0 %v1019
    %2156 = vmatpush2.msra.mxu0 %v1018
    %2157 = vmatprep.subr.mxu0 %v1017
    %2158 = vmatpush2.msra.mxu0 %v1016
    %2159 = vmatprep.subr.mxu0 %v1015
    %2160 = vmatpush2.msra.mxu0 %v1014
    %2161 = vmatprep.mubr.f32.mxu0 %v145
    %2162 = vmatmul.mubr.f32.gmra.mxu0 %v144
    %v2163 = vpop.f32.mrf.mxu0
    %v2164 = vadd.f32 %v2093, %v2163
    %v2165 = vpop.f32.mrf.mxu0
    %v2166 = vadd.f32 %v2095, %v2165
    %2167 = vdwg.mxu0
    %2168 = vmatprep.subr.mxu0 %v1077
    %2169 = vmatpush1.msra.mxu0 %v1076
    %2170 = vmatprep.subr.mxu0 %v1075
    %2171 = vmatpush1.msra.mxu0 %v1074
    %2172 = vmatprep.subr.mxu0 %v1073
    %2173 = vmatpush1.msra.mxu0 %v1072
    %2174 = vmatprep.subr.mxu0 %v1071
    %2175 = vmatpush1.msra.mxu0 %v1070
    %2176 = vmatprep.subr.mxu0 %v1069
    %2177 = vmatpush1.msra.mxu0 %v1068
    %2178 = vmatprep.subr.mxu0 %v1067
    %2179 = vmatpush1.msra.mxu0 %v1066
    %2180 = vmatprep.subr.mxu0 %v1065
    %2181 = vmatpush1.msra.mxu0 %v1064
    %2182 = vmatprep.subr.mxu0 %v1063
    %2183 = vmatpush1.msra.mxu0 %v1062
    %2184 = vmatprep.subr.mxu0 %v1061
    %2185 = vmatpush1.msra.mxu0 %v1060
    %2186 = vmatprep.subr.mxu0 %v1059
    %2187 = vmatpush1.msra.mxu0 %v1058
    %2188 = vmatprep.subr.mxu0 %v1057
    %2189 = vmatpush1.msra.mxu0 %v1056
    %2190 = vmatprep.subr.mxu0 %v1055
    %2191 = vmatpush1.msra.mxu0 %v1054
    %2192 = vmatprep.subr.mxu0 %v1053
    %2193 = vmatpush1.msra.mxu0 %v1052
    %2194 = vmatprep.subr.mxu0 %v1051
    %2195 = vmatpush1.msra.mxu0 %v1050
    %2196 = vmatprep.subr.mxu0 %v1049
    %2197 = vmatpush1.msra.mxu0 %v1048
    %2198 = vmatprep.subr.mxu0 %v1047
    %2199 = vmatpush1.msra.mxu0 %v1046
    %2200 = vmatprep.subr.mxu0 %v1109
    %2201 = vmatpush2.msra.mxu0 %v1108
    %2202 = vmatprep.subr.mxu0 %v1107
    %2203 = vmatpush2.msra.mxu0 %v1106
    %2204 = vmatprep.subr.mxu0 %v1105
    %2205 = vmatpush2.msra.mxu0 %v1104
    %2206 = vmatprep.subr.mxu0 %v1103
    %2207 = vmatpush2.msra.mxu0 %v1102
    %2208 = vmatprep.subr.mxu0 %v1101
    %2209 = vmatpush2.msra.mxu0 %v1100
    %2210 = vmatprep.subr.mxu0 %v1099
    %2211 = vmatpush2.msra.mxu0 %v1098
    %2212 = vmatprep.subr.mxu0 %v1097
    %2213 = vmatpush2.msra.mxu0 %v1096
    %2214 = vmatprep.subr.mxu0 %v1095
    %2215 = vmatpush2.msra.mxu0 %v1094
    %2216 = vmatprep.subr.mxu0 %v1093
    %2217 = vmatpush2.msra.mxu0 %v1092
    %2218 = vmatprep.subr.mxu0 %v1091
    %2219 = vmatpush2.msra.mxu0 %v1090
    %2220 = vmatprep.subr.mxu0 %v1089
    %2221 = vmatpush2.msra.mxu0 %v1088
    %2222 = vmatprep.subr.mxu0 %v1087
    %2223 = vmatpush2.msra.mxu0 %v1086
    %2224 = vmatprep.subr.mxu0 %v1085
    %2225 = vmatpush2.msra.mxu0 %v1084
    %2226 = vmatprep.subr.mxu0 %v1083
    %2227 = vmatpush2.msra.mxu0 %v1082
    %2228 = vmatprep.subr.mxu0 %v1081
    %2229 = vmatpush2.msra.mxu0 %v1080
    %2230 = vmatprep.subr.mxu0 %v1079
    %2231 = vmatpush2.msra.mxu0 %v1078
    %2232 = vmatprep.mubr.f32.mxu0 %v147
    %2233 = vmatmul.mubr.f32.gmra.mxu0 %v146
    %v2234 = vpop.f32.mrf.mxu0
    %v2235 = vadd.f32 %v2164, %v2234
    %v2236 = vpop.f32.mrf.mxu0
    %v2237 = vadd.f32 %v2166, %v2236
    %2238 = vdwg.mxu0
    %2239 = vmatprep.subr.mxu0 %v1141
    %2240 = vmatpush1.msra.mxu0 %v1140
    %2241 = vmatprep.subr.mxu0 %v1139
    %2242 = vmatpush1.msra.mxu0 %v1138
    %2243 = vmatprep.subr.mxu0 %v1137
    %2244 = vmatpush1.msra.mxu0 %v1136
    %2245 = vmatprep.subr.mxu0 %v1135
    %2246 = vmatpush1.msra.mxu0 %v1134
    %2247 = vmatprep.subr.mxu0 %v1133
    %2248 = vmatpush1.msra.mxu0 %v1132
    %2249 = vmatprep.subr.mxu0 %v1131
    %2250 = vmatpush1.msra.mxu0 %v1130
    %2251 = vmatprep.subr.mxu0 %v1129
    %2252 = vmatpush1.msra.mxu0 %v1128
    %2253 = vmatprep.subr.mxu0 %v1127
    %2254 = vmatpush1.msra.mxu0 %v1126
    %2255 = vmatprep.subr.mxu0 %v1125
    %2256 = vmatpush1.msra.mxu0 %v1124
    %2257 = vmatprep.subr.mxu0 %v1123
    %2258 = vmatpush1.msra.mxu0 %v1122
    %2259 = vmatprep.subr.mxu0 %v1121
    %2260 = vmatpush1.msra.mxu0 %v1120
    %2261 = vmatprep.subr.mxu0 %v1119
    %2262 = vmatpush1.msra.mxu0 %v1118
    %2263 = vmatprep.subr.mxu0 %v1117
    %2264 = vmatpush1.msra.mxu0 %v1116
    %2265 = vmatprep.subr.mxu0 %v1115
    %2266 = vmatpush1.msra.mxu0 %v1114
    %2267 = vmatprep.subr.mxu0 %v1113
    %2268 = vmatpush1.msra.mxu0 %v1112
    %2269 = vmatprep.subr.mxu0 %v1111
    %2270 = vmatpush1.msra.mxu0 %v1110
    %2271 = vmatprep.subr.mxu0 %v1173
    %2272 = vmatpush2.msra.mxu0 %v1172
    %2273 = vmatprep.subr.mxu0 %v1171
    %2274 = vmatpush2.msra.mxu0 %v1170
    %2275 = vmatprep.subr.mxu0 %v1169
    %2276 = vmatpush2.msra.mxu0 %v1168
    %2277 = vmatprep.subr.mxu0 %v1167
    %2278 = vmatpush2.msra.mxu0 %v1166
    %2279 = vmatprep.subr.mxu0 %v1165
    %2280 = vmatpush2.msra.mxu0 %v1164
    %2281 = vmatprep.subr.mxu0 %v1163
    %2282 = vmatpush2.msra.mxu0 %v1162
    %2283 = vmatprep.subr.mxu0 %v1161
    %2284 = vmatpush2.msra.mxu0 %v1160
    %2285 = vmatprep.subr.mxu0 %v1159
    %2286 = vmatpush2.msra.mxu0 %v1158
    %2287 = vmatprep.subr.mxu0 %v1157
    %2288 = vmatpush2.msra.mxu0 %v1156
    %2289 = vmatprep.subr.mxu0 %v1155
    %2290 = vmatpush2.msra.mxu0 %v1154
    %2291 = vmatprep.subr.mxu0 %v1153
    %2292 = vmatpush2.msra.mxu0 %v1152
    %2293 = vmatprep.subr.mxu0 %v1151
    %2294 = vmatpush2.msra.mxu0 %v1150
    %2295 = vmatprep.subr.mxu0 %v1149
    %2296 = vmatpush2.msra.mxu0 %v1148
    %2297 = vmatprep.subr.mxu0 %v1147
    %2298 = vmatpush2.msra.mxu0 %v1146
    %2299 = vmatprep.subr.mxu0 %v1145
    %2300 = vmatpush2.msra.mxu0 %v1144
    %2301 = vmatprep.subr.mxu0 %v1143
    %2302 = vmatpush2.msra.mxu0 %v1142
    %2303 = vmatprep.mubr.f32.mxu0 %v149
    %2304 = vmatmul.mubr.f32.gmra.mxu0 %v148
    %v2305 = vpop.f32.mrf.mxu0
    %v2306 = vadd.f32 %v2235, %v2305
    %v2307 = vpop.f32.mrf.mxu0
    %v2308 = vadd.f32 %v2237, %v2307
    %2309 = vdwg.mxu0
    %v2310 = vld [vmem:[#allocation4] sm:$0xff]
    %v2311 = vld [vmem:[#allocation4 + $0x8] sm:$0xff]
    %v2312 = vld [vmem:[#allocation4 + $0x10] sm:$0xff]
    %v2313 = vld [vmem:[#allocation4 + $0x18] sm:$0xff]
    %v2314 = vld [vmem:[#allocation4 + $0x20] sm:$0xff]
    %v2315 = vld [vmem:[#allocation4 + $0x28] sm:$0xff]
    %v2316 = vld [vmem:[#allocation4 + $0x30] sm:$0xff]
    %v2317 = vld [vmem:[#allocation4 + $0x38] sm:$0xff]
    %v2318 = vld [vmem:[#allocation4 + $0x40] sm:$0xff]
    %v2319 = vld [vmem:[#allocation4 + $0x48] sm:$0xff]
    %v2320 = vld [vmem:[#allocation4 + $0x50] sm:$0xff]
    %v2321 = vld [vmem:[#allocation4 + $0x58] sm:$0xff]
    %v2322 = vld [vmem:[#allocation4 + $0x60] sm:$0xff]
    %v2323 = vld [vmem:[#allocation4 + $0x68] sm:$0xff]
    %v2324 = vld [vmem:[#allocation4 + $0x70] sm:$0xff]
    %v2325 = vld [vmem:[#allocation4 + $0x78] sm:$0xff]
    %v2326 = vld [vmem:[#allocation4 + $0x80] sm:$0xff]
    %v2327 = vld [vmem:[#allocation4 + $0x88] sm:$0xff]
    %v2328 = vld [vmem:[#allocation4 + $0x90] sm:$0xff]
    %v2329 = vld [vmem:[#allocation4 + $0x98] sm:$0xff]
    %v2330 = vld [vmem:[#allocation4 + $0xa0] sm:$0xff]
    %v2331 = vld [vmem:[#allocation4 + $0xa8] sm:$0xff]
    %v2332 = vld [vmem:[#allocation4 + $0xb0] sm:$0xff]
    %v2333 = vld [vmem:[#allocation4 + $0xb8] sm:$0xff]
    %v2334 = vld [vmem:[#allocation4 + $0xc0] sm:$0xff]
    %v2335 = vld [vmem:[#allocation4 + $0xc8] sm:$0xff]
    %v2336 = vld [vmem:[#allocation4 + $0xd0] sm:$0xff]
    %v2337 = vld [vmem:[#allocation4 + $0xd8] sm:$0xff]
    %v2338 = vld [vmem:[#allocation4 + $0xe0] sm:$0xff]
    %v2339 = vld [vmem:[#allocation4 + $0xe8] sm:$0xff]
    %v2340 = vld [vmem:[#allocation4 + $0xf0] sm:$0xff]
    %v2341 = vld [vmem:[#allocation4 + $0xf8] sm:$0xff]
    %v2342 = vld [vmem:[#allocation6] sm:$0x1]
    %v2344 = vlaneseq
    %v2345 = vshrl.u32 %v2344, 7
    %v2346 = vsub.s32 0, %v2345
    %v2347 = vrot.slane %v2342, %v2346
    %2349 = vmatprep.subr.mxu0 0.0
    %2350 = vmatpush1.msra.mxu0 %v2325
    %2351 = vmatprep.subr.mxu0 0.0
    %2352 = vmatpush1.msra.mxu0 %v2324
    %2353 = vmatprep.subr.mxu0 0.0
    %2354 = vmatpush1.msra.mxu0 %v2323
    %2355 = vmatprep.subr.mxu0 0.0
    %2356 = vmatpush1.msra.mxu0 %v2322
    %2357 = vmatprep.subr.mxu0 0.0
    %2358 = vmatpush1.msra.mxu0 %v2321
    %2359 = vmatprep.subr.mxu0 0.0
    %2360 = vmatpush1.msra.mxu0 %v2320
    %2361 = vmatprep.subr.mxu0 0.0
    %2362 = vmatpush1.msra.mxu0 %v2319
    %2363 = vmatprep.subr.mxu0 0.0
    %2364 = vmatpush1.msra.mxu0 %v2318
    %2365 = vmatprep.subr.mxu0 0.0
    %2366 = vmatpush1.msra.mxu0 %v2317
    %2367 = vmatprep.subr.mxu0 0.0
    %2368 = vmatpush1.msra.mxu0 %v2316
    %2369 = vmatprep.subr.mxu0 0.0
    %2370 = vmatpush1.msra.mxu0 %v2315
    %2371 = vmatprep.subr.mxu0 0.0
    %2372 = vmatpush1.msra.mxu0 %v2314
    %2373 = vmatprep.subr.mxu0 0.0
    %2374 = vmatpush1.msra.mxu0 %v2313
    %2375 = vmatprep.subr.mxu0 0.0
    %2376 = vmatpush1.msra.mxu0 %v2312
    %2377 = vmatprep.subr.mxu0 0.0
    %2378 = vmatpush1.msra.mxu0 %v2311
    %2379 = vmatprep.subr.mxu0 0.0
    %2380 = vmatpush1.msra.mxu0 %v2310
    %2381 = vmatprep.subr.mxu0 0.0
    %2382 = vmatpush2.msra.mxu0 %v2341
    %2383 = vmatprep.subr.mxu0 0.0
    %2384 = vmatpush2.msra.mxu0 %v2340
    %2385 = vmatprep.subr.mxu0 0.0
    %2386 = vmatpush2.msra.mxu0 %v2339
    %2387 = vmatprep.subr.mxu0 0.0
    %2388 = vmatpush2.msra.mxu0 %v2338
    %2389 = vmatprep.subr.mxu0 0.0
    %2390 = vmatpush2.msra.mxu0 %v2337
    %2391 = vmatprep.subr.mxu0 0.0
    %2392 = vmatpush2.msra.mxu0 %v2336
    %2393 = vmatprep.subr.mxu0 0.0
    %2394 = vmatpush2.msra.mxu0 %v2335
    %2395 = vmatprep.subr.mxu0 0.0
    %2396 = vmatpush2.msra.mxu0 %v2334
    %2397 = vmatprep.subr.mxu0 0.0
    %2398 = vmatpush2.msra.mxu0 %v2333
    %2399 = vmatprep.subr.mxu0 0.0
    %2400 = vmatpush2.msra.mxu0 %v2332
    %2401 = vmatprep.subr.mxu0 0.0
    %2402 = vmatpush2.msra.mxu0 %v2331
    %2403 = vmatprep.subr.mxu0 0.0
    %2404 = vmatpush2.msra.mxu0 %v2330
    %2405 = vmatprep.subr.mxu0 0.0
    %2406 = vmatpush2.msra.mxu0 %v2329
    %2407 = vmatprep.subr.mxu0 0.0
    %2408 = vmatpush2.msra.mxu0 %v2328
    %2409 = vmatprep.subr.mxu0 0.0
    %2410 = vmatpush2.msra.mxu0 %v2327
    %2411 = vmatprep.subr.mxu0 0.0
    %2412 = vmatpush2.msra.mxu0 %v2326
    %2413 = vmatprep.mubr.f32.mxu0 %v2308
    %2414 = vmatmul.mubr.f32.gmra.mxu0 %v2306
    %v2415 = vpop.f32.mrf.mxu0
    %v2416 = vadd.f32 %v2347, %v2415
    %v2417 = vpop.f32.mrf.mxu0
    %2418 = vdwg.mxu0
    %v2419 = vmax.f32 %v2416, 0.0
    %v2420 = vld [vmem:[#allocation7] sm:$0xff]
    %v2421 = vld [vmem:[#allocation7 + $0x8] sm:$0xff]
    %v2422 = vld [vmem:[#allocation7 + $0x10] sm:$0xff]
    %v2423 = vld [vmem:[#allocation7 + $0x18] sm:$0xff]
    %v2424 = vld [vmem:[#allocation7 + $0x20] sm:$0xff]
    %v2425 = vld [vmem:[#allocation7 + $0x28] sm:$0xff]
    %v2426 = vld [vmem:[#allocation7 + $0x30] sm:$0xff]
    %v2427 = vld [vmem:[#allocation7 + $0x38] sm:$0xff]
    %v2428 = vld [vmem:[#allocation7 + $0x40] sm:$0xff]
    %v2429 = vld [vmem:[#allocation7 + $0x48] sm:$0xff]
    %v2430 = vld [vmem:[#allocation7 + $0x50] sm:$0xff]
    %v2431 = vld [vmem:[#allocation7 + $0x58] sm:$0xff]
    %v2432 = vld [vmem:[#allocation7 + $0x60] sm:$0xff]
    %v2433 = vld [vmem:[#allocation7 + $0x68] sm:$0xff]
    %v2434 = vld [vmem:[#allocation7 + $0x70] sm:$0xff]
    %v2435 = vld [vmem:[#allocation7 + $0x78] sm:$0xff]
    %v2436 = vld [vmem:[#allocation9] sm:$0x1]
    %v2438 = vlaneseq
    %v2439 = vshrl.u32 %v2438, 7
    %v2440 = vsub.s32 0, %v2439
    %v2441 = vrot.slane %v2436, %v2440
    %2443 = vmatprep.subr.mxu0 0.0
    %2444 = vmatpush1.msra.mxu0 %v2435
    %2445 = vmatprep.subr.mxu0 0.0
    %2446 = vmatpush1.msra.mxu0 %v2434
    %2447 = vmatprep.subr.mxu0 0.0
    %2448 = vmatpush1.msra.mxu0 %v2433
    %2449 = vmatprep.subr.mxu0 0.0
    %2450 = vmatpush1.msra.mxu0 %v2432
    %2451 = vmatprep.subr.mxu0 0.0
    %2452 = vmatpush1.msra.mxu0 %v2431
    %2453 = vmatprep.subr.mxu0 0.0
    %2454 = vmatpush1.msra.mxu0 %v2430
    %2455 = vmatprep.subr.mxu0 0.0
    %2456 = vmatpush1.msra.mxu0 %v2429
    %2457 = vmatprep.subr.mxu0 0.0
    %2458 = vmatpush1.msra.mxu0 %v2428
    %2459 = vmatprep.subr.mxu0 0.0
    %2460 = vmatpush1.msra.mxu0 %v2427
    %2461 = vmatprep.subr.mxu0 0.0
    %2462 = vmatpush1.msra.mxu0 %v2426
    %2463 = vmatprep.subr.mxu0 0.0
    %2464 = vmatpush1.msra.mxu0 %v2425
    %2465 = vmatprep.subr.mxu0 0.0
    %2466 = vmatpush1.msra.mxu0 %v2424
    %2467 = vmatprep.subr.mxu0 0.0
    %2468 = vmatpush1.msra.mxu0 %v2423
    %2469 = vmatprep.subr.mxu0 0.0
    %2470 = vmatpush1.msra.mxu0 %v2422
    %2471 = vmatprep.subr.mxu0 0.0
    %2472 = vmatpush1.msra.mxu0 %v2421
    %2473 = vmatprep.subr.mxu0 0.0
    %2474 = vmatpush1.msra.mxu0 %v2420
    %2475 = vmatprep.subr.mxu0 0.0
    %2476 = vmatpush2.msra.mxu0 0.0
    %2477 = vmatprep.subr.mxu0 0.0
    %2478 = vmatpush2.msra.mxu0 0.0
    %2479 = vmatprep.subr.mxu0 0.0
    %2480 = vmatpush2.msra.mxu0 0.0
    %2481 = vmatprep.subr.mxu0 0.0
    %2482 = vmatpush2.msra.mxu0 0.0
    %2483 = vmatprep.subr.mxu0 0.0
    %2484 = vmatpush2.msra.mxu0 0.0
    %2485 = vmatprep.subr.mxu0 0.0
    %2486 = vmatpush2.msra.mxu0 0.0
    %2487 = vmatprep.subr.mxu0 0.0
    %2488 = vmatpush2.msra.mxu0 0.0
    %2489 = vmatprep.subr.mxu0 0.0
    %2490 = vmatpush2.msra.mxu0 0.0
    %2491 = vmatprep.subr.mxu0 0.0
    %2492 = vmatpush2.msra.mxu0 0.0
    %2493 = vmatprep.subr.mxu0 0.0
    %2494 = vmatpush2.msra.mxu0 0.0
    %2495 = vmatprep.subr.mxu0 0.0
    %2496 = vmatpush2.msra.mxu0 0.0
    %2497 = vmatprep.subr.mxu0 0.0
    %2498 = vmatpush2.msra.mxu0 0.0
    %2499 = vmatprep.subr.mxu0 0.0
    %2500 = vmatpush2.msra.mxu0 0.0
    %2501 = vmatprep.subr.mxu0 0.0
    %2502 = vmatpush2.msra.mxu0 0.0
    %2503 = vmatprep.subr.mxu0 0.0
    %2504 = vmatpush2.msra.mxu0 0.0
    %2505 = vmatprep.subr.mxu0 0.0
    %2506 = vmatpush2.msra.mxu0 0.0
    %2507 = vmatprep.mubr.f32.mxu0 0.0
    %2508 = vmatmul.mubr.f32.gmra.mxu0 %v2419
    %v2509 = vpop.f32.mrf.mxu0
    %v2510 = vadd.f32 %v2441, %v2509
    %v2511 = vpop.f32.mrf.mxu0
    %2512 = vdwg.mxu0
    %v2513 = vmax.f32 %v2510, 0.0
    %v2514 = vld [vmem:[#allocation10] sm:$0xff]
    %v2515 = vld [vmem:[#allocation10 + $0x8] sm:$0xff]
    %v2516 = vld [vmem:[#allocation10 + $0x10] sm:$0xff]
    %v2517 = vld [vmem:[#allocation10 + $0x18] sm:$0xff]
    %v2518 = vld [vmem:[#allocation10 + $0x20] sm:$0xff]
    %v2519 = vld [vmem:[#allocation10 + $0x28] sm:$0xff]
    %v2520 = vld [vmem:[#allocation10 + $0x30] sm:$0xff]
    %v2521 = vld [vmem:[#allocation10 + $0x38] sm:$0xff]
    %v2522 = vld [vmem:[#allocation10 + $0x40] sm:$0xff]
    %v2523 = vld [vmem:[#allocation10 + $0x48] sm:$0xff]
    %v2524 = vld [vmem:[#allocation10 + $0x50] sm:$0xff]
    %v2525 = vld [vmem:[#allocation10 + $0x58] sm:$0xff]
    %v2526 = vld [vmem:[#allocation10 + $0x60] sm:$0xff]
    %v2527 = vld [vmem:[#allocation10 + $0x68] sm:$0xff]
    %v2528 = vld [vmem:[#allocation10 + $0x70] sm:$0xff]
    %v2529 = vld [vmem:[#allocation10 + $0x78] sm:$0xff]
    %v2530 = vld [vmem:[#allocation12] sm:$0x1]
    %v2532 = vlaneseq
    %v2533 = vshrl.u32 %v2532, 7
    %v2534 = vsub.s32 0, %v2533
    %v2535 = vrot.slane %v2530, %v2534
    %2537 = vmatprep.subr.mxu0 0.0
    %2538 = vmatpush1.msra.mxu0 %v2529
    %2539 = vmatprep.subr.mxu0 0.0
    %2540 = vmatpush1.msra.mxu0 %v2528
    %2541 = vmatprep.subr.mxu0 0.0
    %2542 = vmatpush1.msra.mxu0 %v2527
    %2543 = vmatprep.subr.mxu0 0.0
    %2544 = vmatpush1.msra.mxu0 %v2526
    %2545 = vmatprep.subr.mxu0 0.0
    %2546 = vmatpush1.msra.mxu0 %v2525
    %2547 = vmatprep.subr.mxu0 0.0
    %2548 = vmatpush1.msra.mxu0 %v2524
    %2549 = vmatprep.subr.mxu0 0.0
    %2550 = vmatpush1.msra.mxu0 %v2523
    %2551 = vmatprep.subr.mxu0 0.0
    %2552 = vmatpush1.msra.mxu0 %v2522
    %2553 = vmatprep.subr.mxu0 0.0
    %2554 = vmatpush1.msra.mxu0 %v2521
    %2555 = vmatprep.subr.mxu0 0.0
    %2556 = vmatpush1.msra.mxu0 %v2520
    %2557 = vmatprep.subr.mxu0 0.0
    %2558 = vmatpush1.msra.mxu0 %v2519
    %2559 = vmatprep.subr.mxu0 0.0
    %2560 = vmatpush1.msra.mxu0 %v2518
    %2561 = vmatprep.subr.mxu0 0.0
    %2562 = vmatpush1.msra.mxu0 %v2517
    %2563 = vmatprep.subr.mxu0 0.0
    %2564 = vmatpush1.msra.mxu0 %v2516
    %2565 = vmatprep.subr.mxu0 0.0
    %2566 = vmatpush1.msra.mxu0 %v2515
    %2567 = vmatprep.subr.mxu0 0.0
    %2568 = vmatpush1.msra.mxu0 %v2514
    %2569 = vmatprep.subr.mxu0 0.0
    %2570 = vmatpush2.msra.mxu0 0.0
    %2571 = vmatprep.subr.mxu0 0.0
    %2572 = vmatpush2.msra.mxu0 0.0
    %2573 = vmatprep.subr.mxu0 0.0
    %2574 = vmatpush2.msra.mxu0 0.0
    %2575 = vmatprep.subr.mxu0 0.0
    %2576 = vmatpush2.msra.mxu0 0.0
    %2577 = vmatprep.subr.mxu0 0.0
    %2578 = vmatpush2.msra.mxu0 0.0
    %2579 = vmatprep.subr.mxu0 0.0
    %2580 = vmatpush2.msra.mxu0 0.0
    %2581 = vmatprep.subr.mxu0 0.0
    %2582 = vmatpush2.msra.mxu0 0.0
    %2583 = vmatprep.subr.mxu0 0.0
    %2584 = vmatpush2.msra.mxu0 0.0
    %2585 = vmatprep.subr.mxu0 0.0
    %2586 = vmatpush2.msra.mxu0 0.0
    %2587 = vmatprep.subr.mxu0 0.0
    %2588 = vmatpush2.msra.mxu0 0.0
    %2589 = vmatprep.subr.mxu0 0.0
    %2590 = vmatpush2.msra.mxu0 0.0
    %2591 = vmatprep.subr.mxu0 0.0
    %2592 = vmatpush2.msra.mxu0 0.0
    %2593 = vmatprep.subr.mxu0 0.0
    %2594 = vmatpush2.msra.mxu0 0.0
    %2595 = vmatprep.subr.mxu0 0.0
    %2596 = vmatpush2.msra.mxu0 0.0
    %2597 = vmatprep.subr.mxu0 0.0
    %2598 = vmatpush2.msra.mxu0 0.0
    %2599 = vmatprep.subr.mxu0 0.0
    %2600 = vmatpush2.msra.mxu0 0.0
    %2601 = vmatprep.mubr.f32.mxu0 0.0
    %2602 = vmatmul.mubr.f32.gmra.mxu0 %v2513
    %v2603 = vpop.f32.mrf.mxu0
    %v2604 = vadd.f32 %v2535, %v2603
    %v2605 = vpop.f32.mrf.mxu0
    %2606 = vdwg.mxu0
    %v2607 = vmax.f32 %v2604, 0.0
    %2608 = vst [vmem:[%s8] sm:$0xff] %v2607
    // Predicated region
    $region62: #{_lambda_.1} parent=1 // pred_check
      _
    $region63: #{_lambda_.1} parent=1 // pred_check_branch
      %2610 = sbr.rel (0) target = $region65
    $region64: #{_lambda_.1} parent=1 // pred_region
      _
    $region65: #{_lambda_.1} parent=1 // pred_fallthru
      _
    // Predicated region
    $region66: #{_lambda_.1} parent=1 // pred_check
      _
    $region67: #{_lambda_.1} parent=1 // pred_check_branch
      %2612 = sbr.rel (0) target = $region69
    $region68: #{_lambda_.1} parent=1 // pred_region
      _
    $region69: #{_lambda_.1} parent=1 // pred_fallthru
      _
    %2613 = vsyncpa [#allocation3], 1
    %2614 = vsyncpa [#allocation5], 1
    %2615 = vsyncpa [#allocation8], 1
    %2616 = vsyncpa [#allocation11], 1

</llo_original>
